<compile_context>
chip_gen: v6e
topology: v6e:2x2x1
jax: 0.10.0
libtpu: 0.0.40
codegen_flags: <defaults>
</compile_context>

<pallas_src>
import functools

import jax
import jax.numpy as jnp
from jax.experimental import pallas as pl
from jax.experimental.pallas import tpu as pltpu

NUM_CLASSES = 6   # './data/hy6' implies 6 classes (len(classes) is data-dependent)
SLOPE = 0.2
H_PAD = 128       # fc1 hidden width (100) zero-padded to a full lane width
C_PAD = 128       # fc2 output width (num_classes) zero-padded to a full lane width


# --------------------------------------------------------------------------
# Pallas kernels
# --------------------------------------------------------------------------
def _conv_pool_kernel(p_ref, w_ref, b_ref, o_ref, *, slope):
    """Fused conv (as 4 corner matmuls) + 2x2 max-pool + bias + LeakyReLU.

    p_ref: (4, K, tm) bf16 -- im2col patches, one slab per pool corner
    w_ref: (Cout, K)  bf16 -- conv weights, K ordered (kh, kw, cin)
    b_ref: (Cout, 1)  f32
    o_ref: (Cout, tm) bf16 -- pooled activations; columns ordered (n, h/2, w/2)
    """
    w = w_ref[...]
    acc = jnp.dot(w, p_ref[0], preferred_element_type=jnp.float32)
    for c in range(1, 4):
        acc = jnp.maximum(acc, jnp.dot(w, p_ref[c], preferred_element_type=jnp.float32))
    acc = acc + b_ref[...]
    acc = jnp.maximum(acc, slope * acc)          # LeakyReLU (valid for 0 < slope < 1)
    o_ref[...] = acc.astype(o_ref.dtype)


def _mlp_kernel(x_ref, w1_ref, b1_ref, w2_ref, b2_ref, o_ref, *, slope):
    """Fused classifier: LeakyReLU(x @ W1 + b1) @ W2 + b2 (f32 accumulation)."""
    h = jnp.dot(x_ref[...], w1_ref[...], preferred_element_type=jnp.float32)
    h = h + b1_ref[...]
    h = jnp.maximum(h, slope * h)
    out = jnp.dot(h.astype(w2_ref.dtype), w2_ref[...], preferred_element_type=jnp.float32)
    o_ref[...] = (out + b2_ref[...]).astype(o_ref.dtype)


# --------------------------------------------------------------------------
# XLA glue: im2col split by 2x2-pool corner (pure strided slicing)
# --------------------------------------------------------------------------
def _extract_corner_patches(x_cnhw, k, stride, pad):
    """Returns (patches, Hp, Wp); patches shape (4, K, N*Hp*Wp).

    K rows ordered (kh, kw, cin); columns ordered (n, hp, wp). Corner index
    c = 2*pi + pj selects conv-output positions (2*hp+pi, 2*wp+pj), i.e. the
    four members of each 2x2 max-pool window."""
    c, n, h, w = x_cnhw.shape
    xp = jnp.pad(x_cnhw, ((0, 0), (0, 0), (pad, pad), (pad, pad)))
    ho = (h + 2 * pad - k) // stride + 1
    wo = (w + 2 * pad - k) // stride + 1
    hp, wp = ho // 2, wo // 2
    s2 = 2 * stride
    corners = []
    for pi in range(2):
        for pj in range(2):
            taps = []
            for kh in range(k):
                for kw in range(k):
                    r0 = kh + stride * pi
                    c0 = kw + stride * pj
                    taps.append(xp[:, :, r0:r0 + s2 * hp:s2, c0:c0 + s2 * wp:s2])
            t = jnp.stack(taps, axis=0)                   # (k*k, C, N, Hp, Wp)
            corners.append(t.reshape(k * k * c, n * hp * wp))
    return jnp.stack(corners, axis=0), hp, wp


# --------------------------------------------------------------------------
# pallas_call wrappers
# --------------------------------------------------------------------------
def conv_leaky_pool(x_cnhw, w_mat, bias, *, k, stride, pad, slope):
    """One fused conv + LeakyReLU + 2x2 max-pool stage.

    x_cnhw: (Cin, N, H, W) bf16 -> returns (Cout, N, Hout/2, Wout/2) bf16."""
    _, n, _, _ = x_cnhw.shape
    cout, kdim = w_mat.shape
    patches, hp, wp = _extract_corner_patches(x_cnhw, k, stride, pad)
    mp = n * hp * wp
    # 2-way parallel grid when the split stays lane-aligned (keeps both v7x TCs
    # busy); otherwise a single full-extent block, which is always legal.
    g = 2 if mp % 256 == 0 else 1
    tm = mp // g
    kernel = functools.partial(_conv_pool_kernel, slope=slope)
    out = pl.pallas_call(
        kernel,
        out_shape=jax.ShapeDtypeStruct((cout, mp), jnp.bfloat16),
        grid=(g,),
        in_specs=[
            pl.BlockSpec((4, kdim, tm), lambda i: (0, 0, i)),
            pl.BlockSpec((cout, kdim), lambda i: (0, 0)),
            pl.BlockSpec((cout, 1), lambda i: (0, 0)),
        ],
        out_specs=pl.BlockSpec((cout, tm), lambda i: (0, i)),
        compiler_params=pltpu.CompilerParams(dimension_semantics=("parallel",)),
    )(patches, w_mat, bias)
    return out.reshape(cout, n, hp, wp)


def mlp_head(x, w1, b1, w2, b2, *, slope):
    """Fused Linear(2048,128pad) + LeakyReLU + Linear(128pad,128pad)."""
    n, kin = x.shape
    hpad = w1.shape[1]
    cpad = w2.shape[1]
    kernel = functools.partial(_mlp_kernel, slope=slope)
    return pl.pallas_call(
        kernel,
        out_shape=jax.ShapeDtypeStruct((n, cpad), jnp.float32),
        grid=(1,),
        in_specs=[
            pl.BlockSpec((n, kin), lambda i: (0, 0)),
            pl.BlockSpec((kin, hpad), lambda i: (0, 0)),
            pl.BlockSpec((1, hpad), lambda i: (0, 0)),
            pl.BlockSpec((hpad, cpad), lambda i: (0, 0)),
            pl.BlockSpec((1, cpad), lambda i: (0, 0)),
        ],
        out_specs=pl.BlockSpec((n, cpad), lambda i: (0, 0)),
    )(x.astype(jnp.bfloat16), w1, b1, w2, b2)


# --------------------------------------------------------------------------
# Parameters (PyTorch-shaped synthetic init + one-time kernel-friendly prep)
# --------------------------------------------------------------------------
def init_params(key):
    ks = jax.random.split(key, 8)

    def u(k, shape, fan_in):
        bound = 1.0 / jnp.sqrt(fan_in)
        return jax.random.uniform(k, shape, jnp.float32, -bound, bound)

    return {
        "conv1_w": u(ks[0], (16, 3, 4, 4), 3 * 4 * 4),
        "conv1_b": u(ks[1], (16,), 3 * 4 * 4),
        "conv2_w": u(ks[2], (32, 16, 4, 4), 16 * 4 * 4),
        "conv2_b": u(ks[3], (32,), 16 * 4 * 4),
        "fc1_w": u(ks[4], (100, 32 * 8 * 8), 32 * 8 * 8),   # PyTorch Linear: (out, in)
        "fc1_b": u(ks[5], (100,), 32 * 8 * 8),
        "fc2_w": u(ks[6], (NUM_CLASSES, 100), 100),
        "fc2_b": u(ks[7], (NUM_CLASSES,), 100),
    }


def prepare_params(p):
    """One-time transforms: conv OIHW -> (Cout, K=(kh,kw,cin)) bf16; fc weights
    transposed to (in, out), zero-padded to 128 lanes, bf16; biases f32."""
    def conv_w(w_oihw):
        cout = w_oihw.shape[0]
        return jnp.transpose(w_oihw, (0, 2, 3, 1)).reshape(cout, -1).astype(jnp.bfloat16)

    nc = p["fc2_w"].shape[0]
    nh = p["fc1_w"].shape[0]
    w1 = jnp.zeros((32 * 8 * 8, H_PAD), jnp.float32).at[:, :nh].set(p["fc1_w"].T)
    b1 = jnp.zeros((1, H_PAD), jnp.float32).at[0, :nh].set(p["fc1_b"])
    w2 = jnp.zeros((H_PAD, C_PAD), jnp.float32).at[:nh, :nc].set(p["fc2_w"].T)
    b2 = jnp.zeros((1, C_PAD), jnp.float32).at[0, :nc].set(p["fc2_b"])
    return {
        "c1w": conv_w(p["conv1_w"]),
        "c1b": p["conv1_b"].reshape(-1, 1).astype(jnp.float32),
        "c2w": conv_w(p["conv2_w"]),
        "c2b": p["conv2_b"].reshape(-1, 1).astype(jnp.float32),
        "w1": w1.astype(jnp.bfloat16), "b1": b1,
        "w2": w2.astype(jnp.bfloat16), "b2": b2,
    }


# --------------------------------------------------------------------------
# Forward pass
# --------------------------------------------------------------------------
@jax.jit
def net_forward(pp, x_nchw):
    n = x_nchw.shape[0]
    # NCHW -> CNHW once; bf16 MXU operands (accumulation stays f32 in-kernel).
    x = jnp.transpose(x_nchw, (1, 0, 2, 3)).astype(jnp.bfloat16)
    x = conv_leaky_pool(x, pp["c1w"], pp["c1b"], k=4, stride=2, pad=1, slope=SLOPE)  # (16,N,32,32)
    x = conv_leaky_pool(x, pp["c2w"], pp["c2b"], k=4, stride=2, pad=1, slope=SLOPE)  # (32,N,8,8)
    # flatten exactly like x.view(-1, 32*8*8) on NCHW: per-image order (c, h, w)
    x = jnp.transpose(x, (1, 0, 2, 3)).reshape(n, 32 * 8 * 8)
    logits = mlp_head(x, pp["w1"], pp["b1"], pp["w2"], pp["b2"], slope=SLOPE)        # (N, 128)
    return logits[:, :NUM_CLASSES]


if __name__ == "__main__":
    key = jax.random.PRNGKey(0)
    k_param, k_in = jax.random.split(key)
    params = init_params(k_param)
    prepped = prepare_params(params)
    # batch=2; 3x128x128 is what the 32*8*8 flatten implies
    x = jax.random.normal(k_in, (2, 3, 128, 128), dtype=jnp.float32)
    out = net_forward(prepped, x)
    out = jax.block_until_ready(out)
    assert out.shape == (2, NUM_CLASSES), out.shape
    assert bool(jnp.all(jnp.isfinite(out)))
    print("KERNEL_OK")
</pallas_src>

<mosaic_0001>
module attributes {stable_mosaic.version = 11 : i64} {
  func.func @_conv_pool_kernel(%arg0: i32, %arg1: memref<4x48x1024xbf16, #tpu.memory_space<vmem>>, %arg2: memref<16x48xbf16, #tpu.memory_space<vmem>>, %arg3: memref<16x1xf32, #tpu.memory_space<vmem>>, %arg4: memref<16x1024xbf16, #tpu.memory_space<vmem>>) attributes {dimension_semantics = [#tpu.dimension_semantics<parallel>], iteration_bounds = array<i64: 2>, scalar_prefetch = 0 : i64, scratch_operands = 0 : i64, tpu.core_type = #tpu.core_type<tc>, window_params = [{transform_indices = @transform_0, window_bounds = array<i64: 4, 48, 1024>}, {pipeline_mode = #tpu.pipeline_mode<synchronous>, transform_indices = @transform_1, window_bounds = array<i64: 16, 48>}, {pipeline_mode = #tpu.pipeline_mode<synchronous>, transform_indices = @transform_2, window_bounds = array<i64: 16, 1>}, {transform_indices = @transform_3, window_bounds = array<i64: 16, 1024>}]} {
    %c0 = arith.constant 0 : index
    %c0_0 = arith.constant 0 : index
    %0 = vector.load %arg2[%c0, %c0_0] : memref<16x48xbf16, #tpu.memory_space<vmem>>, vector<16x48xbf16>
    %c0_1 = arith.constant 0 : index
    %c0_2 = arith.constant 0 : index
    %c0_3 = arith.constant 0 : index
    %1 = vector.load %arg1[%c0_1, %c0_2, %c0_3] : memref<4x48x1024xbf16, #tpu.memory_space<vmem>>, vector<1x48x1024xbf16>
    %2 = vector.shape_cast %1 : vector<1x48x1024xbf16> to vector<48x1024xbf16>
    %cst = arith.constant dense<0.000000e+00> : vector<16x1024xf32>
    %3 = tpu.matmul %0, %2, %cst {dimension_numbers = #tpu.dot_dimension_numbers<[1], [0], [0], [1], [0, 0, 1, 1], [], []>} : vector<16x48xbf16>, vector<48x1024xbf16>, vector<16x1024xf32> -> vector<16x1024xf32>
    %c1 = arith.constant 1 : index
    %c0_4 = arith.constant 0 : index
    %c0_5 = arith.constant 0 : index
    %4 = vector.load %arg1[%c1, %c0_4, %c0_5] : memref<4x48x1024xbf16, #tpu.memory_space<vmem>>, vector<1x48x1024xbf16>
    %5 = vector.shape_cast %4 : vector<1x48x1024xbf16> to vector<48x1024xbf16>
    %cst_6 = arith.constant dense<0.000000e+00> : vector<16x1024xf32>
    %6 = tpu.matmul %0, %5, %cst_6 {dimension_numbers = #tpu.dot_dimension_numbers<[1], [0], [0], [1], [0, 0, 1, 1], [], []>} : vector<16x48xbf16>, vector<48x1024xbf16>, vector<16x1024xf32> -> vector<16x1024xf32>
    %7 = arith.maximumf %3, %6 : vector<16x1024xf32>
    %c2 = arith.constant 2 : index
    %c0_7 = arith.constant 0 : index
    %c0_8 = arith.constant 0 : index
    %8 = vector.load %arg1[%c2, %c0_7, %c0_8] : memref<4x48x1024xbf16, #tpu.memory_space<vmem>>, vector<1x48x1024xbf16>
    %9 = vector.shape_cast %8 : vector<1x48x1024xbf16> to vector<48x1024xbf16>
    %cst_9 = arith.constant dense<0.000000e+00> : vector<16x1024xf32>
    %10 = tpu.matmul %0, %9, %cst_9 {dimension_numbers = #tpu.dot_dimension_numbers<[1], [0], [0], [1], [0, 0, 1, 1], [], []>} : vector<16x48xbf16>, vector<48x1024xbf16>, vector<16x1024xf32> -> vector<16x1024xf32>
    %11 = arith.maximumf %7, %10 : vector<16x1024xf32>
    %c3 = arith.constant 3 : index
    %c0_10 = arith.constant 0 : index
    %c0_11 = arith.constant 0 : index
    %12 = vector.load %arg1[%c3, %c0_10, %c0_11] : memref<4x48x1024xbf16, #tpu.memory_space<vmem>>, vector<1x48x1024xbf16>
    %13 = vector.shape_cast %12 : vector<1x48x1024xbf16> to vector<48x1024xbf16>
    %cst_12 = arith.constant dense<0.000000e+00> : vector<16x1024xf32>
    %14 = tpu.matmul %0, %13, %cst_12 {dimension_numbers = #tpu.dot_dimension_numbers<[1], [0], [0], [1], [0, 0, 1, 1], [], []>} : vector<16x48xbf16>, vector<48x1024xbf16>, vector<16x1024xf32> -> vector<16x1024xf32>
    %15 = arith.maximumf %11, %14 : vector<16x1024xf32>
    %c0_13 = arith.constant 0 : index
    %c0_14 = arith.constant 0 : index
    %16 = vector.load %arg3[%c0_13, %c0_14] : memref<16x1xf32, #tpu.memory_space<vmem>>, vector<16x1xf32>
    %17 = vector.broadcast %16 : vector<16x1xf32> to vector<16x1024xf32>
    %18 = arith.addf %15, %17 : vector<16x1024xf32>
    %cst_15 = arith.constant 2.000000e-01 : f32
    %19 = vector.broadcast %cst_15 : f32 to vector<16x1024xf32>
    %20 = arith.mulf %19, %18 : vector<16x1024xf32>
    %21 = arith.maximumf %18, %20 : vector<16x1024xf32>
    %22 = arith.truncf %21 : vector<16x1024xf32> to vector<16x1024xbf16>
    %c0_16 = arith.constant 0 : index
    %c0_17 = arith.constant 0 : index
    %23 = vector.load %arg4[%c0_16, %c0_17] : memref<16x1024xbf16, #tpu.memory_space<vmem>>, vector<16x1024xbf16>
    tpu.vector_store %arg4[%c0_16, %c0_17], %22 {strides = array<i32>} : memref<16x1024xbf16, #tpu.memory_space<vmem>>, vector<16x1024xbf16>,
    return
  }
  func.func @transform_0(%arg0: i32) -> (i32, i32, i32) {
    %c0_i32 = arith.constant 0 : i32
    %c0_i32_0 = arith.constant 0 : i32
    %c0_i32_1 = arith.constant 0 : i32
    return %c0_i32, %c0_i32_0, %arg0 : i32, i32, i32
  }
  func.func @transform_1(%arg0: i32) -> (i32, i32) {
    %c0_i32 = arith.constant 0 : i32
    %c0_i32_0 = arith.constant 0 : i32
    %c0_i32_1 = arith.constant 0 : i32
    return %c0_i32, %c0_i32_0 : i32, i32
  }
  func.func @transform_2(%arg0: i32) -> (i32, i32) {
    %c0_i32 = arith.constant 0 : i32
    %c0_i32_0 = arith.constant 0 : i32
    %c0_i32_1 = arith.constant 0 : i32
    return %c0_i32, %c0_i32_0 : i32, i32
  }
  func.func @transform_3(%arg0: i32) -> (i32, i32) {
    %c0_i32 = arith.constant 0 : i32
    %c0_i32_0 = arith.constant 0 : i32
    return %c0_i32, %arg0 : i32, i32
  }
}

module attributes {stable_mosaic.version = 11 : i64} {
  func.func @_conv_pool_kernel(%arg0: i32, %arg1: memref<4x256x128xbf16, #tpu.memory_space<vmem>>, %arg2: memref<32x256xbf16, #tpu.memory_space<vmem>>, %arg3: memref<32x1xf32, #tpu.memory_space<vmem>>, %arg4: memref<32x128xbf16, #tpu.memory_space<vmem>>) attributes {dimension_semantics = [#tpu.dimension_semantics<parallel>], iteration_bounds = array<i64: 1>, scalar_prefetch = 0 : i64, scratch_operands = 0 : i64, tpu.core_type = #tpu.core_type<tc>, window_params = [{transform_indices = @transform_0, window_bounds = array<i64: 4, 256, 128>}, {pipeline_mode = #tpu.pipeline_mode<synchronous>, transform_indices = @transform_1, window_bounds = array<i64: 32, 256>}, {pipeline_mode = #tpu.pipeline_mode<synchronous>, transform_indices = @transform_2, window_bounds = array<i64: 32, 1>}, {transform_indices = @transform_3, window_bounds = array<i64: 32, 128>}]} {
    %c0 = arith.constant 0 : index
    %c0_0 = arith.constant 0 : index
    %0 = vector.load %arg2[%c0, %c0_0] : memref<32x256xbf16, #tpu.memory_space<vmem>>, vector<32x256xbf16>
    %c0_1 = arith.constant 0 : index
    %c0_2 = arith.constant 0 : index
    %c0_3 = arith.constant 0 : index
    %1 = vector.load %arg1[%c0_1, %c0_2, %c0_3] : memref<4x256x128xbf16, #tpu.memory_space<vmem>>, vector<1x256x128xbf16>
    %2 = vector.shape_cast %1 : vector<1x256x128xbf16> to vector<256x128xbf16>
    %cst = arith.constant dense<0.000000e+00> : vector<32x128xf32>
    %3 = tpu.matmul %0, %2, %cst {dimension_numbers = #tpu.dot_dimension_numbers<[1], [0], [0], [1], [0, 0, 1, 1], [], []>} : vector<32x256xbf16>, vector<256x128xbf16>, vector<32x128xf32> -> vector<32x128xf32>
    %c1 = arith.constant 1 : index
    %c0_4 = arith.constant 0 : index
    %c0_5 = arith.constant 0 : index
    %4 = vector.load %arg1[%c1, %c0_4, %c0_5] : memref<4x256x128xbf16, #tpu.memory_space<vmem>>, vector<1x256x128xbf16>
    %5 = vector.shape_cast %4 : vector<1x256x128xbf16> to vector<256x128xbf16>
    %cst_6 = arith.constant dense<0.000000e+00> : vector<32x128xf32>
    %6 = tpu.matmul %0, %5, %cst_6 {dimension_numbers = #tpu.dot_dimension_numbers<[1], [0], [0], [1], [0, 0, 1, 1], [], []>} : vector<32x256xbf16>, vector<256x128xbf16>, vector<32x128xf32> -> vector<32x128xf32>
    %7 = arith.maximumf %3, %6 : vector<32x128xf32>
    %c2 = arith.constant 2 : index
    %c0_7 = arith.constant 0 : index
    %c0_8 = arith.constant 0 : index
    %8 = vector.load %arg1[%c2, %c0_7, %c0_8] : memref<4x256x128xbf16, #tpu.memory_space<vmem>>, vector<1x256x128xbf16>
    %9 = vector.shape_cast %8 : vector<1x256x128xbf16> to vector<256x128xbf16>
    %cst_9 = arith.constant dense<0.000000e+00> : vector<32x128xf32>
    %10 = tpu.matmul %0, %9, %cst_9 {dimension_numbers = #tpu.dot_dimension_numbers<[1], [0], [0], [1], [0, 0, 1, 1], [], []>} : vector<32x256xbf16>, vector<256x128xbf16>, vector<32x128xf32> -> vector<32x128xf32>
    %11 = arith.maximumf %7, %10 : vector<32x128xf32>
    %c3 = arith.constant 3 : index
    %c0_10 = arith.constant 0 : index
    %c0_11 = arith.constant 0 : index
    %12 = vector.load %arg1[%c3, %c0_10, %c0_11] : memref<4x256x128xbf16, #tpu.memory_space<vmem>>, vector<1x256x128xbf16>
    %13 = vector.shape_cast %12 : vector<1x256x128xbf16> to vector<256x128xbf16>
    %cst_12 = arith.constant dense<0.000000e+00> : vector<32x128xf32>
    %14 = tpu.matmul %0, %13, %cst_12 {dimension_numbers = #tpu.dot_dimension_numbers<[1], [0], [0], [1], [0, 0, 1, 1], [], []>} : vector<32x256xbf16>, vector<256x128xbf16>, vector<32x128xf32> -> vector<32x128xf32>
    %15 = arith.maximumf %11, %14 : vector<32x128xf32>
    %c0_13 = arith.constant 0 : index
    %c0_14 = arith.constant 0 : index
    %16 = vector.load %arg3[%c0_13, %c0_14] : memref<32x1xf32, #tpu.memory_space<vmem>>, vector<32x1xf32>
    %17 = vector.broadcast %16 : vector<32x1xf32> to vector<32x128xf32>
    %18 = arith.addf %15, %17 : vector<32x128xf32>
    %cst_15 = arith.constant 2.000000e-01 : f32
    %19 = vector.broadcast %cst_15 : f32 to vector<32x128xf32>
    %20 = arith.mulf %19, %18 : vector<32x128xf32>
    %21 = arith.maximumf %18, %20 : vector<32x128xf32>
    %22 = arith.truncf %21 : vector<32x128xf32> to vector<32x128xbf16>
    %c0_16 = arith.constant 0 : index
    %c0_17 = arith.constant 0 : index
    %23 = vector.load %arg4[%c0_16, %c0_17] : memref<32x128xbf16, #tpu.memory_space<vmem>>, vector<32x128xbf16>
    tpu.vector_store %arg4[%c0_16, %c0_17], %22 {strides = array<i32>} : memref<32x128xbf16, #tpu.memory_space<vmem>>, vector<32x128xbf16>,
    return
  }
  func.func @transform_0(%arg0: i32) -> (i32, i32, i32) {
    %c0_i32 = arith.constant 0 : i32
    %c0_i32_0 = arith.constant 0 : i32
    %c0_i32_1 = arith.constant 0 : i32
    return %c0_i32, %c0_i32_0, %arg0 : i32, i32, i32
  }
  func.func @transform_1(%arg0: i32) -> (i32, i32) {
    %c0_i32 = arith.constant 0 : i32
    %c0_i32_0 = arith.constant 0 : i32
    %c0_i32_1 = arith.constant 0 : i32
    return %c0_i32, %c0_i32_0 : i32, i32
  }
  func.func @transform_2(%arg0: i32) -> (i32, i32) {
    %c0_i32 = arith.constant 0 : i32
    %c0_i32_0 = arith.constant 0 : i32
    %c0_i32_1 = arith.constant 0 : i32
    return %c0_i32, %c0_i32_0 : i32, i32
  }
  func.func @transform_3(%arg0: i32) -> (i32, i32) {
    %c0_i32 = arith.constant 0 : i32
    %c0_i32_0 = arith.constant 0 : i32
    return %c0_i32, %arg0 : i32, i32
  }
}

module attributes {stable_mosaic.version = 11 : i64} {
  func.func @_mlp_kernel(%arg0: i32, %arg1: memref<2x2048xbf16, #tpu.memory_space<vmem>>, %arg2: memref<2048x128xbf16, #tpu.memory_space<vmem>>, %arg3: memref<1x128xf32, #tpu.memory_space<vmem>>, %arg4: memref<128x128xbf16, #tpu.memory_space<vmem>>, %arg5: memref<1x128xf32, #tpu.memory_space<vmem>>, %arg6: memref<2x128xf32, #tpu.memory_space<vmem>>) attributes {dimension_semantics = [#tpu.dimension_semantics<arbitrary>], iteration_bounds = array<i64: 1>, scalar_prefetch = 0 : i64, scratch_operands = 0 : i64, tpu.core_type = #tpu.core_type<tc>, window_params = [{pipeline_mode = #tpu.pipeline_mode<synchronous>, transform_indices = @transform_0, window_bounds = array<i64: 2, 2048>}, {pipeline_mode = #tpu.pipeline_mode<synchronous>, transform_indices = @transform_1, window_bounds = array<i64: 2048, 128>}, {pipeline_mode = #tpu.pipeline_mode<synchronous>, transform_indices = @transform_2, window_bounds = array<i64: 1, 128>}, {pipeline_mode = #tpu.pipeline_mode<synchronous>, transform_indices = @transform_3, window_bounds = array<i64: 128, 128>}, {pipeline_mode = #tpu.pipeline_mode<synchronous>, transform_indices = @transform_4, window_bounds = array<i64: 1, 128>}, {pipeline_mode = #tpu.pipeline_mode<synchronous>, transform_indices = @transform_5, window_bounds = array<i64: 2, 128>}]} {
    %c0 = arith.constant 0 : index
    %c0_0 = arith.constant 0 : index
    %0 = vector.load %arg1[%c0, %c0_0] : memref<2x2048xbf16, #tpu.memory_space<vmem>>, vector<2x2048xbf16>
    %c0_1 = arith.constant 0 : index
    %c0_2 = arith.constant 0 : index
    %1 = vector.load %arg2[%c0_1, %c0_2] : memref<2048x128xbf16, #tpu.memory_space<vmem>>, vector<2048x128xbf16>
    %cst = arith.constant dense<0.000000e+00> : vector<2x128xf32>
    %2 = tpu.matmul %0, %1, %cst {dimension_numbers = #tpu.dot_dimension_numbers<[1], [0], [0], [1], [0, 0, 1, 1], [], []>} : vector<2x2048xbf16>, vector<2048x128xbf16>, vector<2x128xf32> -> vector<2x128xf32>
    %c0_3 = arith.constant 0 : index
    %c0_4 = arith.constant 0 : index
    %3 = vector.load %arg3[%c0_3, %c0_4] : memref<1x128xf32, #tpu.memory_space<vmem>>, vector<1x128xf32>
    %4 = vector.broadcast %3 : vector<1x128xf32> to vector<2x128xf32>
    %5 = arith.addf %2, %4 : vector<2x128xf32>
    %cst_5 = arith.constant 2.000000e-01 : f32
    %6 = vector.broadcast %cst_5 : f32 to vector<2x128xf32>
    %7 = arith.mulf %6, %5 : vector<2x128xf32>
    %8 = arith.maximumf %5, %7 : vector<2x128xf32>
    %9 = arith.truncf %8 : vector<2x128xf32> to vector<2x128xbf16>
    %c0_6 = arith.constant 0 : index
    %c0_7 = arith.constant 0 : index
    %10 = vector.load %arg4[%c0_6, %c0_7] : memref<128x128xbf16, #tpu.memory_space<vmem>>, vector<128x128xbf16>
    %cst_8 = arith.constant dense<0.000000e+00> : vector<2x128xf32>
    %11 = tpu.matmul %9, %10, %cst_8 {dimension_numbers = #tpu.dot_dimension_numbers<[1], [0], [0], [1], [0, 0, 1, 1], [], []>} : vector<2x128xbf16>, vector<128x128xbf16>, vector<2x128xf32> -> vector<2x128xf32>
    %c0_9 = arith.constant 0 : index
    %c0_10 = arith.constant 0 : index
    %12 = vector.load %arg5[%c0_9, %c0_10] : memref<1x128xf32, #tpu.memory_space<vmem>>, vector<1x128xf32>
    %13 = vector.broadcast %12 : vector<1x128xf32> to vector<2x128xf32>
    %14 = arith.addf %11, %13 : vector<2x128xf32>
    %c0_11 = arith.constant 0 : index
    %c0_12 = arith.constant 0 : index
    %15 = vector.load %arg6[%c0_11, %c0_12] : memref<2x128xf32, #tpu.memory_space<vmem>>, vector<2x128xf32>
    tpu.vector_store %arg6[%c0_11, %c0_12], %14 {strides = array<i32>} : memref<2x128xf32, #tpu.memory_space<vmem>>, vector<2x128xf32>,
    return
  }
  func.func @transform_0(%arg0: i32) -> (i32, i32) {
    %c0_i32 = arith.constant 0 : i32
    %c0_i32_0 = arith.constant 0 : i32
    %c0_i32_1 = arith.constant 0 : i32
    return %c0_i32, %c0_i32_0 : i32, i32
  }
  func.func @transform_1(%arg0: i32) -> (i32, i32) {
    %c0_i32 = arith.constant 0 : i32
    %c0_i32_0 = arith.constant 0 : i32
    %c0_i32_1 = arith.constant 0 : i32
    return %c0_i32, %c0_i32_0 : i32, i32
  }
  func.func @transform_2(%arg0: i32) -> (i32, i32) {
    %c0_i32 = arith.constant 0 : i32
    %c0_i32_0 = arith.constant 0 : i32
    %c0_i32_1 = arith.constant 0 : i32
    return %c0_i32, %c0_i32_0 : i32, i32
  }
  func.func @transform_3(%arg0: i32) -> (i32, i32) {
    %c0_i32 = arith.constant 0 : i32
    %c0_i32_0 = arith.constant 0 : i32
    %c0_i32_1 = arith.constant 0 : i32
    return %c0_i32, %c0_i32_0 : i32, i32
  }
  func.func @transform_4(%arg0: i32) -> (i32, i32) {
    %c0_i32 = arith.constant 0 : i32
    %c0_i32_0 = arith.constant 0 : i32
    %c0_i32_1 = arith.constant 0 : i32
    return %c0_i32, %c0_i32_0 : i32, i32
  }
  func.func @transform_5(%arg0: i32) -> (i32, i32) {
    %c0_i32 = arith.constant 0 : i32
    %c0_i32_0 = arith.constant 0 : i32
    %c0_i32_1 = arith.constant 0 : i32
    return %c0_i32, %c0_i32_0 : i32, i32
  }
}

</mosaic_0001>

<llo_original>
// kernel: net_forward.3
$region0: #{net_forward.3}
  #allocation0 [shape = 'u32[]', space=smem, size = 0x4, offset = 0x4, fixed_abs, tag = 'smem constant byte address 0x4 - core index']
  #allocation1 [shape = 'u32[144,128]{1,0:T(1,128)}', space=vmem, size = 0x12000, scoped, tag = 'internal scratch']
  %s0 = inlined_call_operand.vmem [shape: bf16[4,48,2048], index: 0, kind: input, shape index: {}]
  %s1 = inlined_call_operand.vmem [shape: bf16[16,48], index: 1, kind: input, shape index: {}]
  %s2 = inlined_call_operand.vmem [shape: f32[16,1], index: 2, kind: input, shape index: {}]
  %s3 = inlined_call_operand.vmem [shape: bf16[16,2048], index: 3, kind: output, shape index: {}]
  %s4 = sld [smem:[#allocation0]]
  $region87: #{net_forward.3} parent=0
    _
  %s6 = ssub.s32 1, %s4
  %s7 = scalar_select 0, %s6, %s4
  $region1: #{net_forward.3} parent=0
    #allocation2 [shape = 'u8[786432]{0}', space=vmem, size = 0xc0000, scoped, tag = 'input window, operand 0']
    #allocation3 [shape = 'u8[65536]{0}', space=vmem, size = 0x10000, scoped, tag = 'output window, operand 0']
    loop: start=0, step=1, limit=4
    $region2: #{net_forward.3} parent=1 // loop_pre_header
      _
    $region3: #{net_forward.3} parent=1 // loop_header
      %s9 = sphi 0, %s13
      %p10 = scmp.ge.s32.totalorder %s9, 4
      %s19 = sphi 0, %s21
      %s22 = sphi 0, %s19
      %s23 = sphi 0, %s22
      %s39 = sphi 0, %s23
      %s43 = sphi 0, %s43
      %s45 = sphi 0, %s43
      %s46 = sphi 0, %s45
      %s60 = sphi 0, %s46
      %s64 = sphi 0, %s64
      %s66 = sphi 0, %s64
      %s67 = sphi 0, %s66
      %s81 = sphi 0, %s67
      %s87 = sphi 0, %s89
      %s90 = sphi 0, %s87
      %s91 = sphi 0, %s90
      %s107 = sphi 0, %s91
    $region4: #{net_forward.3} parent=1 // loop_header_branch
      %12 = sbr.rel (%p10) target = $region8
    $region5: #{net_forward.3} parent=1 // loop_body
      %s14 = ssub.s32 %s9, 1
      %s15 = ssub.s32 %s9, 2
      %s16 = sadd.s32 %s9, 1
      %s17 = ssub.s32 %s9, %s16
      %p18 = scmp.eq.s32.totalorder %s17, 0
      %s20 = sadd.s32 %s19, 1
      %s21 = scalar_select %p18, %s19, %s20
      %p24 = pneg %p18
      %p25 = scmp.eq.s32.totalorder %s9, 1
      %p26 = por %p24, %p25
      %p27 = scmp.ne.s32.totalorder %s19, %s22
      %p28 = scmp.eq.s32.totalorder %s9, 0
      %p29 = por %p27, %p28
      %p30 = scmp.ne.s32.totalorder %s19, %s22
      %p31 = scmp.eq.s32.totalorder %s14, 1
      %p32 = por %p30, %p31
      %p33 = scmp.ne.s32.totalorder %s22, %s23
      %p34 = scmp.eq.s32.totalorder %s14, 0
      %p35 = por %p33, %p34
      %p36 = scmp.ne.s32.totalorder %s22, %s23
      %p37 = scmp.eq.s32.totalorder %s15, 1
      %p38 = por %p36, %p37
      %p40 = scmp.ne.s32.totalorder %s23, %s39
      %p41 = scmp.eq.s32.totalorder %s15, 0
      %p42 = por %p40, %p41
      %s44 = sadd.s32 %s43, 1
      %p47 = scmp.eq.s32.totalorder %s9, 1
      %p48 = scmp.ne.s32.totalorder %s43, %s45
      %p49 = scmp.eq.s32.totalorder %s9, 0
      %p50 = por %p48, %p49
      %p51 = scmp.ne.s32.totalorder %s43, %s45
      %p52 = scmp.eq.s32.totalorder %s14, 1
      %p53 = por %p51, %p52
      %p54 = scmp.ne.s32.totalorder %s45, %s46
      %p55 = scmp.eq.s32.totalorder %s14, 0
      %p56 = por %p54, %p55
      %p57 = scmp.ne.s32.totalorder %s45, %s46
      %p58 = scmp.eq.s32.totalorder %s15, 1
      %p59 = por %p57, %p58
      %p61 = scmp.ne.s32.totalorder %s46, %s60
      %p62 = scmp.eq.s32.totalorder %s15, 0
      %p63 = por %p61, %p62
      %s65 = sadd.s32 %s64, 1
      %p68 = scmp.eq.s32.totalorder %s9, 1
      %p69 = scmp.ne.s32.totalorder %s64, %s66
      %p70 = scmp.eq.s32.totalorder %s9, 0
      %p71 = por %p69, %p70
      %p72 = scmp.ne.s32.totalorder %s64, %s66
      %p73 = scmp.eq.s32.totalorder %s14, 1
      %p74 = por %p72, %p73
      %p75 = scmp.ne.s32.totalorder %s66, %s67
      %p76 = scmp.eq.s32.totalorder %s14, 0
      %p77 = por %p75, %p76
      %p78 = scmp.ne.s32.totalorder %s66, %s67
      %p79 = scmp.eq.s32.totalorder %s15, 1
      %p80 = por %p78, %p79
      %p82 = scmp.ne.s32.totalorder %s67, %s81
      %p83 = scmp.eq.s32.totalorder %s15, 0
      %p84 = por %p82, %p83
      %s85 = ssub.s32 %s9, %s16
      %p86 = scmp.eq.s32.totalorder %s85, 0
      %s88 = sadd.s32 %s87, 1
      %s89 = scalar_select %p86, %s87, %s88
      %p92 = pneg %p86
      %p93 = scmp.eq.s32.totalorder %s9, 1
      %p94 = por %p92, %p93
      %p95 = scmp.ne.s32.totalorder %s87, %s90
      %p96 = scmp.eq.s32.totalorder %s9, 0
      %p97 = por %p95, %p96
      %p98 = scmp.ne.s32.totalorder %s87, %s90
      %p99 = scmp.eq.s32.totalorder %s14, 1
      %p100 = por %p98, %p99
      %p101 = scmp.ne.s32.totalorder %s90, %s91
      %p102 = scmp.eq.s32.totalorder %s14, 0
      %p103 = por %p101, %p102
      %p104 = scmp.ne.s32.totalorder %s90, %s91
      %p105 = scmp.eq.s32.totalorder %s15, 1
      %p106 = por %p104, %p105
      %p108 = scmp.ne.s32.totalorder %s91, %s107
      %p109 = scmp.eq.s32.totalorder %s15, 0
      %p110 = por %p108, %p109
      %p111 = scmp.le.s32.totalorder 1, %s9
      %p112 = scmp.lt.s32.totalorder %s9, 3
      %p113 = pnand %p111, %p112
      %p114 = pneg %p113
      // Predicated region
      $region9: #{net_forward.3} parent=5 // pred_check
        _
      $region10: #{net_forward.3} parent=5 // pred_check_branch
        %116 = sbr.rel (%p113) target = $region12
      $region11: #{net_forward.3} parent=5 // pred_region
        %s117 = ssub.s32 %s9, 1
        // Predicated region
        $region13: #{net_forward.3} parent=11 // pred_check
          %p118 = pneg %p56
        $region14: #{net_forward.3} parent=11 // pred_check_branch
          %120 = sbr.rel (%p118) target = $region16
        $region15: #{net_forward.3} parent=11 // pred_region
          _
        $region16: #{net_forward.3} parent=11 // pred_fallthru
          _
        // Predicated region
        $region17: #{net_forward.3} parent=11 // pred_check
          %p121 = pneg %p77
        $region18: #{net_forward.3} parent=11 // pred_check_branch
          %123 = sbr.rel (%p121) target = $region20
        $region19: #{net_forward.3} parent=11 // pred_region
          _
        $region20: #{net_forward.3} parent=11 // pred_fallthru
          _
      $region12: #{net_forward.3} parent=5 // pred_fallthru
        _
      %p124 = scmp.lt.s32.totalorder %s9, 2
      // Predicated region
      $region21: #{net_forward.3} parent=5 // pred_check
        %p125 = pneg %p124
      $region22: #{net_forward.3} parent=5 // pred_check_branch
        %127 = sbr.rel (%p125) target = $region24
      $region23: #{net_forward.3} parent=5 // pred_region
        // Predicated region
        $region25: #{net_forward.3} parent=23 // pred_check
          %p128 = pneg %p29
        $region26: #{net_forward.3} parent=23 // pred_check_branch
          %130 = sbr.rel (%p128) target = $region28
        $region27: #{net_forward.3} parent=23 // pred_region
          %s131 = sand.u32 %s19, 1
          %s132 = sand.u32 %s19, 1
          %s133 = smul.addr %s132, 768
          %s134 = scalar_lea.vmem [#allocation2], %s133
          %s135 = smul.u32 8, %s9
          %s136 = smul.addr %s135, 4
          %s137 = scalar_lea.vmem %s0, %s136
          // Predicated region
          $region29: #{net_forward.3} parent=27 // pred_check
            _
          $region30: #{net_forward.3} parent=27 // pred_check_branch
            %139 = sbr.rel (0) target = $region32
          $region31: #{net_forward.3} parent=27 // pred_region
            // Predicated region
            $region33: #{net_forward.3} parent=31 // pred_check
              _
            $region34: #{net_forward.3} parent=31 // pred_check_branch
              %141 = sbr.rel (0) target = $region36
            $region35: #{net_forward.3} parent=31 // pred_region
              loop: start=0, step=1, limit=1
              $region37: #{net_forward.3} parent=35 // loop_pre_header
                _
              $region38: #{net_forward.3} parent=35 // loop_header
                %s143 = sphi 0, %s147
                %p144 = scmp.ge.s32.totalorder %s143, 1
                %s148 = sphi %s137, %s137
                %s149 = sphi %s134, %s134
              $region39: #{net_forward.3} parent=35 // loop_header_branch
                %146 = sbr.rel (%p144) target = $region43
              $region40: #{net_forward.3} parent=35 // loop_body
                %v150 = vld [vmem:[%s148] sm:$0xff]
                %151 = vst [vmem:[%s149] sm:$0xff] %v150
                %v152 = vld [vmem:[%s148 + $0x8] sm:$0xff]
                %153 = vst [vmem:[%s149 + $0x8] sm:$0xff] %v152
                %v154 = vld [vmem:[%s148 + $0x10] sm:$0xff]
                %155 = vst [vmem:[%s149 + $0x10] sm:$0xff] %v154
                %v156 = vld [vmem:[%s148 + $0x18] sm:$0xff]
                %157 = vst [vmem:[%s149 + $0x18] sm:$0xff] %v156
                %v158 = vld [vmem:[%s148 + $0x40] sm:$0xff]
                %159 = vst [vmem:[%s149 + $0x20] sm:$0xff] %v158
                %v160 = vld [vmem:[%s148 + $0x48] sm:$0xff]
                %161 = vst [vmem:[%s149 + $0x28] sm:$0xff] %v160
                %v162 = vld [vmem:[%s148 + $0x50] sm:$0xff]
                %163 = vst [vmem:[%s149 + $0x30] sm:$0xff] %v162
                %v164 = vld [vmem:[%s148 + $0x58] sm:$0xff]
                %165 = vst [vmem:[%s149 + $0x38] sm:$0xff] %v164
                %v166 = vld [vmem:[%s148 + $0x80] sm:$0xff]
                %167 = vst [vmem:[%s149 + $0x40] sm:$0xff] %v166
                %v168 = vld [vmem:[%s148 + $0x88] sm:$0xff]
                %169 = vst [vmem:[%s149 + $0x48] sm:$0xff] %v168
                %v170 = vld [vmem:[%s148 + $0x90] sm:$0xff]
                %171 = vst [vmem:[%s149 + $0x50] sm:$0xff] %v170
                %v172 = vld [vmem:[%s148 + $0x98] sm:$0xff]
                %173 = vst [vmem:[%s149 + $0x58] sm:$0xff] %v172
                %v174 = vld [vmem:[%s148 + $0xc0] sm:$0xff]
                %175 = vst [vmem:[%s149 + $0x60] sm:$0xff] %v174
                %v176 = vld [vmem:[%s148 + $0xc8] sm:$0xff]
                %177 = vst [vmem:[%s149 + $0x68] sm:$0xff] %v176
                %v178 = vld [vmem:[%s148 + $0xd0] sm:$0xff]
                %179 = vst [vmem:[%s149 + $0x70] sm:$0xff] %v178
                %v180 = vld [vmem:[%s148 + $0xd8] sm:$0xff]
                %181 = vst [vmem:[%s149 + $0x78] sm:$0xff] %v180
                %v182 = vld [vmem:[%s148 + $0x100] sm:$0xff]
                %183 = vst [vmem:[%s149 + $0x80] sm:$0xff] %v182
                %v184 = vld [vmem:[%s148 + $0x108] sm:$0xff]
                %185 = vst [vmem:[%s149 + $0x88] sm:$0xff] %v184
                %v186 = vld [vmem:[%s148 + $0x110] sm:$0xff]
                %187 = vst [vmem:[%s149 + $0x90] sm:$0xff] %v186
                %v188 = vld [vmem:[%s148 + $0x118] sm:$0xff]
                %189 = vst [vmem:[%s149 + $0x98] sm:$0xff] %v188
                %v190 = vld [vmem:[%s148 + $0x140] sm:$0xff]
                %191 = vst [vmem:[%s149 + $0xa0] sm:$0xff] %v190
                %v192 = vld [vmem:[%s148 + $0x148] sm:$0xff]
                %193 = vst [vmem:[%s149 + $0xa8] sm:$0xff] %v192
                %v194 = vld [vmem:[%s148 + $0x150] sm:$0xff]
                %195 = vst [vmem:[%s149 + $0xb0] sm:$0xff] %v194
                %v196 = vld [vmem:[%s148 + $0x158] sm:$0xff]
                %197 = vst [vmem:[%s149 + $0xb8] sm:$0xff] %v196
                %v198 = vld [vmem:[%s148 + $0x180] sm:$0xff]
                %199 = vst [vmem:[%s149 + $0xc0] sm:$0xff] %v198
                %v200 = vld [vmem:[%s148 + $0x188] sm:$0xff]
                %201 = vst [vmem:[%s149 + $0xc8] sm:$0xff] %v200
                %v202 = vld [vmem:[%s148 + $0x190] sm:$0xff]
                %203 = vst [vmem:[%s149 + $0xd0] sm:$0xff] %v202
                %v204 = vld [vmem:[%s148 + $0x198] sm:$0xff]
                %205 = vst [vmem:[%s149 + $0xd8] sm:$0xff] %v204
                %v206 = vld [vmem:[%s148 + $0x1c0] sm:$0xff]
                %207 = vst [vmem:[%s149 + $0xe0] sm:$0xff] %v206
                %v208 = vld [vmem:[%s148 + $0x1c8] sm:$0xff]
                %209 = vst [vmem:[%s149 + $0xe8] sm:$0xff] %v208
                %v210 = vld [vmem:[%s148 + $0x1d0] sm:$0xff]
                %211 = vst [vmem:[%s149 + $0xf0] sm:$0xff] %v210
                %v212 = vld [vmem:[%s148 + $0x1d8] sm:$0xff]
                %213 = vst [vmem:[%s149 + $0xf8] sm:$0xff] %v212
                %v214 = vld [vmem:[%s148 + $0x200] sm:$0xff]
                %215 = vst [vmem:[%s149 + $0x100] sm:$0xff] %v214
                %v216 = vld [vmem:[%s148 + $0x208] sm:$0xff]
                %217 = vst [vmem:[%s149 + $0x108] sm:$0xff] %v216
                %v218 = vld [vmem:[%s148 + $0x210] sm:$0xff]
                %219 = vst [vmem:[%s149 + $0x110] sm:$0xff] %v218
                %v220 = vld [vmem:[%s148 + $0x218] sm:$0xff]
                %221 = vst [vmem:[%s149 + $0x118] sm:$0xff] %v220
                %v222 = vld [vmem:[%s148 + $0x240] sm:$0xff]
                %223 = vst [vmem:[%s149 + $0x120] sm:$0xff] %v222
                %v224 = vld [vmem:[%s148 + $0x248] sm:$0xff]
                %225 = vst [vmem:[%s149 + $0x128] sm:$0xff] %v224
                %v226 = vld [vmem:[%s148 + $0x250] sm:$0xff]
                %227 = vst [vmem:[%s149 + $0x130] sm:$0xff] %v226
                %v228 = vld [vmem:[%s148 + $0x258] sm:$0xff]
                %229 = vst [vmem:[%s149 + $0x138] sm:$0xff] %v228
                %v230 = vld [vmem:[%s148 + $0x280] sm:$0xff]
                %231 = vst [vmem:[%s149 + $0x140] sm:$0xff] %v230
                %v232 = vld [vmem:[%s148 + $0x288] sm:$0xff]
                %233 = vst [vmem:[%s149 + $0x148] sm:$0xff] %v232
                %v234 = vld [vmem:[%s148 + $0x290] sm:$0xff]
                %235 = vst [vmem:[%s149 + $0x150] sm:$0xff] %v234
                %v236 = vld [vmem:[%s148 + $0x298] sm:$0xff]
                %237 = vst [vmem:[%s149 + $0x158] sm:$0xff] %v236
                %v238 = vld [vmem:[%s148 + $0x2c0] sm:$0xff]
                %239 = vst [vmem:[%s149 + $0x160] sm:$0xff] %v238
                %v240 = vld [vmem:[%s148 + $0x2c8] sm:$0xff]
                %241 = vst [vmem:[%s149 + $0x168] sm:$0xff] %v240
                %v242 = vld [vmem:[%s148 + $0x2d0] sm:$0xff]
                %243 = vst [vmem:[%s149 + $0x170] sm:$0xff] %v242
                %v244 = vld [vmem:[%s148 + $0x2d8] sm:$0xff]
                %245 = vst [vmem:[%s149 + $0x178] sm:$0xff] %v244
                %v246 = vld [vmem:[%s148 + $0x300] sm:$0xff]
                %247 = vst [vmem:[%s149 + $0x180] sm:$0xff] %v246
                %v248 = vld [vmem:[%s148 + $0x308] sm:$0xff]
                %249 = vst [vmem:[%s149 + $0x188] sm:$0xff] %v248
                %v250 = vld [vmem:[%s148 + $0x310] sm:$0xff]
                %251 = vst [vmem:[%s149 + $0x190] sm:$0xff] %v250
                %v252 = vld [vmem:[%s148 + $0x318] sm:$0xff]
                %253 = vst [vmem:[%s149 + $0x198] sm:$0xff] %v252
                %v254 = vld [vmem:[%s148 + $0x340] sm:$0xff]
                %255 = vst [vmem:[%s149 + $0x1a0] sm:$0xff] %v254
                %v256 = vld [vmem:[%s148 + $0x348] sm:$0xff]
                %257 = vst [vmem:[%s149 + $0x1a8] sm:$0xff] %v256
                %v258 = vld [vmem:[%s148 + $0x350] sm:$0xff]
                %259 = vst [vmem:[%s149 + $0x1b0] sm:$0xff] %v258
                %v260 = vld [vmem:[%s148 + $0x358] sm:$0xff]
                %261 = vst [vmem:[%s149 + $0x1b8] sm:$0xff] %v260
                %v262 = vld [vmem:[%s148 + $0x380] sm:$0xff]
                %263 = vst [vmem:[%s149 + $0x1c0] sm:$0xff] %v262
                %v264 = vld [vmem:[%s148 + $0x388] sm:$0xff]
                %265 = vst [vmem:[%s149 + $0x1c8] sm:$0xff] %v264
                %v266 = vld [vmem:[%s148 + $0x390] sm:$0xff]
                %267 = vst [vmem:[%s149 + $0x1d0] sm:$0xff] %v266
                %v268 = vld [vmem:[%s148 + $0x398] sm:$0xff]
                %269 = vst [vmem:[%s149 + $0x1d8] sm:$0xff] %v268
                %v270 = vld [vmem:[%s148 + $0x3c0] sm:$0xff]
                %271 = vst [vmem:[%s149 + $0x1e0] sm:$0xff] %v270
                %v272 = vld [vmem:[%s148 + $0x3c8] sm:$0xff]
                %273 = vst [vmem:[%s149 + $0x1e8] sm:$0xff] %v272
                %v274 = vld [vmem:[%s148 + $0x3d0] sm:$0xff]
                %275 = vst [vmem:[%s149 + $0x1f0] sm:$0xff] %v274
                %v276 = vld [vmem:[%s148 + $0x3d8] sm:$0xff]
                %277 = vst [vmem:[%s149 + $0x1f8] sm:$0xff] %v276
                %v278 = vld [vmem:[%s148 + $0x400] sm:$0xff]
                %279 = vst [vmem:[%s149 + $0x200] sm:$0xff] %v278
                %v280 = vld [vmem:[%s148 + $0x408] sm:$0xff]
                %281 = vst [vmem:[%s149 + $0x208] sm:$0xff] %v280
                %v282 = vld [vmem:[%s148 + $0x410] sm:$0xff]
                %283 = vst [vmem:[%s149 + $0x210] sm:$0xff] %v282
                %v284 = vld [vmem:[%s148 + $0x418] sm:$0xff]
                %285 = vst [vmem:[%s149 + $0x218] sm:$0xff] %v284
                %v286 = vld [vmem:[%s148 + $0x440] sm:$0xff]
                %287 = vst [vmem:[%s149 + $0x220] sm:$0xff] %v286
                %v288 = vld [vmem:[%s148 + $0x448] sm:$0xff]
                %289 = vst [vmem:[%s149 + $0x228] sm:$0xff] %v288
                %v290 = vld [vmem:[%s148 + $0x450] sm:$0xff]
                %291 = vst [vmem:[%s149 + $0x230] sm:$0xff] %v290
                %v292 = vld [vmem:[%s148 + $0x458] sm:$0xff]
                %293 = vst [vmem:[%s149 + $0x238] sm:$0xff] %v292
                %v294 = vld [vmem:[%s148 + $0x480] sm:$0xff]
                %295 = vst [vmem:[%s149 + $0x240] sm:$0xff] %v294
                %v296 = vld [vmem:[%s148 + $0x488] sm:$0xff]
                %297 = vst [vmem:[%s149 + $0x248] sm:$0xff] %v296
                %v298 = vld [vmem:[%s148 + $0x490] sm:$0xff]
                %299 = vst [vmem:[%s149 + $0x250] sm:$0xff] %v298
                %v300 = vld [vmem:[%s148 + $0x498] sm:$0xff]
                %301 = vst [vmem:[%s149 + $0x258] sm:$0xff] %v300
                %v302 = vld [vmem:[%s148 + $0x4c0] sm:$0xff]
                %303 = vst [vmem:[%s149 + $0x260] sm:$0xff] %v302
                %v304 = vld [vmem:[%s148 + $0x4c8] sm:$0xff]
                %305 = vst [vmem:[%s149 + $0x268] sm:$0xff] %v304
                %v306 = vld [vmem:[%s148 + $0x4d0] sm:$0xff]
                %307 = vst [vmem:[%s149 + $0x270] sm:$0xff] %v306
                %v308 = vld [vmem:[%s148 + $0x4d8] sm:$0xff]
                %309 = vst [vmem:[%s149 + $0x278] sm:$0xff] %v308
                %v310 = vld [vmem:[%s148 + $0x500] sm:$0xff]
                %311 = vst [vmem:[%s149 + $0x280] sm:$0xff] %v310
                %v312 = vld [vmem:[%s148 + $0x508] sm:$0xff]
                %313 = vst [vmem:[%s149 + $0x288] sm:$0xff] %v312
                %v314 = vld [vmem:[%s148 + $0x510] sm:$0xff]
                %315 = vst [vmem:[%s149 + $0x290] sm:$0xff] %v314
                %v316 = vld [vmem:[%s148 + $0x518] sm:$0xff]
                %317 = vst [vmem:[%s149 + $0x298] sm:$0xff] %v316
                %v318 = vld [vmem:[%s148 + $0x540] sm:$0xff]
                %319 = vst [vmem:[%s149 + $0x2a0] sm:$0xff] %v318
                %v320 = vld [vmem:[%s148 + $0x548] sm:$0xff]
                %321 = vst [vmem:[%s149 + $0x2a8] sm:$0xff] %v320
                %v322 = vld [vmem:[%s148 + $0x550] sm:$0xff]
                %323 = vst [vmem:[%s149 + $0x2b0] sm:$0xff] %v322
                %v324 = vld [vmem:[%s148 + $0x558] sm:$0xff]
                %325 = vst [vmem:[%s149 + $0x2b8] sm:$0xff] %v324
                %v326 = vld [vmem:[%s148 + $0x580] sm:$0xff]
                %327 = vst [vmem:[%s149 + $0x2c0] sm:$0xff] %v326
                %v328 = vld [vmem:[%s148 + $0x588] sm:$0xff]
                %329 = vst [vmem:[%s149 + $0x2c8] sm:$0xff] %v328
                %v330 = vld [vmem:[%s148 + $0x590] sm:$0xff]
                %331 = vst [vmem:[%s149 + $0x2d0] sm:$0xff] %v330
                %v332 = vld [vmem:[%s148 + $0x598] sm:$0xff]
                %333 = vst [vmem:[%s149 + $0x2d8] sm:$0xff] %v332
                %v334 = vld [vmem:[%s148 + $0x5c0] sm:$0xff]
                %335 = vst [vmem:[%s149 + $0x2e0] sm:$0xff] %v334
                %v336 = vld [vmem:[%s148 + $0x5c8] sm:$0xff]
                %337 = vst [vmem:[%s149 + $0x2e8] sm:$0xff] %v336
                %v338 = vld [vmem:[%s148 + $0x5d0] sm:$0xff]
                %339 = vst [vmem:[%s149 + $0x2f0] sm:$0xff] %v338
                %v340 = vld [vmem:[%s148 + $0x5d8] sm:$0xff]
                %341 = vst [vmem:[%s149 + $0x2f8] sm:$0xff] %v340
              $region41: #{net_forward.3} parent=35 // loop_footer
                %s147 = sadd.s32 1, %s143
              $region42: #{net_forward.3} parent=35 // loop_footer_branch
                %142 = sbr.rel target = $region38
              $region43: #{net_forward.3} parent=35 // loop_exit
                _
            $region36: #{net_forward.3} parent=31 // pred_fallthru
              _
            // Predicated region
            $region44: #{net_forward.3} parent=31 // pred_check
              _
            $region45: #{net_forward.3} parent=31 // pred_check_branch
              %343 = sbr.rel target = $region47
            $region46: #{net_forward.3} parent=31 // pred_region
              _
            $region47: #{net_forward.3} parent=31 // pred_fallthru
              _
          $region32: #{net_forward.3} parent=27 // pred_fallthru
            _
          %344 = vnop
        $region28: #{net_forward.3} parent=23 // pred_fallthru
          _
      $region24: #{net_forward.3} parent=5 // pred_fallthru
        _
      %p345 = scmp.le.s32.totalorder 1, %s9
      %p346 = scmp.lt.s32.totalorder %s9, 3
      %p347 = pnand %p345, %p346
      %p348 = pneg %p347
      // Predicated region
      $region48: #{net_forward.3} parent=5 // pred_check
        _
      $region49: #{net_forward.3} parent=5 // pred_check_branch
        %350 = sbr.rel (%p347) target = $region51
      $region50: #{net_forward.3} parent=5 // pred_region
        %s351 = ssub.s32 %s9, 1
        %s352 = sand.u32 %s22, 1
        %s353 = sand.u32 %s22, 1
        %s354 = smul.addr %s353, 768
        %s355 = scalar_lea.vmem [#allocation2], %s354
        // Predicated region
        $region52: #{net_forward.3} parent=50 // pred_check
          %p356 = pneg %p35
        $region53: #{net_forward.3} parent=50 // pred_check_branch
          %358 = sbr.rel (%p356) target = $region55
        $region54: #{net_forward.3} parent=50 // pred_region
          _
        $region55: #{net_forward.3} parent=50 // pred_fallthru
          _
        %s359 = sand.u32 %s22, 1
        %s360 = sand.u32 %s22, 1
        %s361 = smul.addr %s360, 768
        %s362 = scalar_lea.vmem [#allocation2], %s361
        %p363 = pneg %p35
        %p364 = pneg %p32
        %p365 = pneg %p56
        %p366 = pneg %p53
        %p367 = pneg %p77
        %p368 = pneg %p74
        %p369 = pneg %p103
        %p370 = pneg %p100
        %s371 = sand.u32 %s90, 1
        %s372 = sand.u32 %s90, 1
        %s373 = smul.addr %s372, 64
        %s374 = scalar_lea.vmem [#allocation3], %s373
        %s375 = smul.u32 8, %s14
        %s376 = smul.u32 8, %s14
        %v378 = vld [vmem:[%s1] sm:$0xf]
        %v379 = vld [vmem:[%s1 + $0x4] sm:$0xf]
        %v380 = vld [vmem:[%s355] sm:$0xff]
        %v381 = vld [vmem:[%s355 + $0x8] sm:$0xff]
        %v382 = vld [vmem:[%s355 + $0x10] sm:$0xff]
        %v383 = vld [vmem:[%s355 + $0x18] sm:$0xff]
        %v384 = vld [vmem:[%s355 + $0x20] sm:$0xff]
        %v385 = vld [vmem:[%s355 + $0x28] sm:$0xff]
        %v386 = vld [vmem:[%s355 + $0x30] sm:$0xff]
        %v387 = vld [vmem:[%s355 + $0x38] sm:$0xff]
        %v388 = vld [vmem:[%s355 + $0x40] sm:$0xff]
        %v389 = vld [vmem:[%s355 + $0x48] sm:$0xff]
        %v390 = vld [vmem:[%s355 + $0x50] sm:$0xff]
        %v391 = vld [vmem:[%s355 + $0x58] sm:$0xff]
        %v392 = vld [vmem:[%s355 + $0x60] sm:$0xff]
        %v393 = vld [vmem:[%s355 + $0x68] sm:$0xff]
        %v394 = vld [vmem:[%s355 + $0x70] sm:$0xff]
        %v395 = vld [vmem:[%s355 + $0x78] sm:$0xff]
        %v396 = vld [vmem:[%s355 + $0x80] sm:$0xff]
        %v397 = vld [vmem:[%s355 + $0x88] sm:$0xff]
        %v398 = vld [vmem:[%s355 + $0x90] sm:$0xff]
        %v399 = vld [vmem:[%s355 + $0x98] sm:$0xff]
        %v400 = vld [vmem:[%s355 + $0xa0] sm:$0xff]
        %v401 = vld [vmem:[%s355 + $0xa8] sm:$0xff]
        %v402 = vld [vmem:[%s355 + $0xb0] sm:$0xff]
        %v403 = vld [vmem:[%s355 + $0xb8] sm:$0xff]
        %v406 = vunpack.c.l.b16 %v378
        %v407 = vunpack.c.l.b16 %v379
        %v408 = vpack.c.b16 %v407, %v406
        %v433 = vunpack.c.l.b16 %v380
        %v434 = vunpack.c.h.b16 %v380
        %v435 = vunpack.c.l.b16 %v381
        %v436 = vunpack.c.h.b16 %v381
        %v437 = vunpack.c.l.b16 %v382
        %v438 = vunpack.c.h.b16 %v382
        %v439 = vunpack.c.l.b16 %v383
        %v440 = vunpack.c.h.b16 %v383
        %v441 = vunpack.c.l.b16 %v384
        %v442 = vunpack.c.h.b16 %v384
        %v443 = vunpack.c.l.b16 %v385
        %v444 = vunpack.c.h.b16 %v385
        %v445 = vunpack.c.l.b16 %v386
        %v446 = vunpack.c.h.b16 %v386
        %v447 = vunpack.c.l.b16 %v387
        %v448 = vunpack.c.h.b16 %v387
        %v449 = vunpack.c.l.b16 %v388
        %v450 = vunpack.c.h.b16 %v388
        %v451 = vunpack.c.l.b16 %v389
        %v452 = vunpack.c.h.b16 %v389
        %v453 = vunpack.c.l.b16 %v390
        %v454 = vunpack.c.h.b16 %v390
        %v455 = vunpack.c.l.b16 %v391
        %v456 = vunpack.c.h.b16 %v391
        %v457 = vunpack.c.l.b16 %v392
        %v458 = vunpack.c.h.b16 %v392
        %v459 = vunpack.c.l.b16 %v393
        %v460 = vunpack.c.h.b16 %v393
        %v461 = vunpack.c.l.b16 %v394
        %v462 = vunpack.c.h.b16 %v394
        %v463 = vunpack.c.l.b16 %v395
        %v464 = vunpack.c.h.b16 %v395
        %v465 = vunpack.c.l.b16 %v396
        %v466 = vunpack.c.h.b16 %v396
        %v467 = vunpack.c.l.b16 %v397
        %v468 = vunpack.c.h.b16 %v397
        %v469 = vunpack.c.l.b16 %v398
        %v470 = vunpack.c.h.b16 %v398
        %v471 = vunpack.c.l.b16 %v399
        %v472 = vunpack.c.h.b16 %v399
        %v473 = vunpack.c.l.b16 %v400
        %v474 = vunpack.c.h.b16 %v400
        %v475 = vunpack.c.l.b16 %v401
        %v476 = vunpack.c.h.b16 %v401
        %v477 = vunpack.c.l.b16 %v402
        %v478 = vunpack.c.h.b16 %v402
        %v479 = vunpack.c.l.b16 %v403
        %v480 = vunpack.c.h.b16 %v403
        %v481 = vpack.c.b16 %v441, %v433
        %v482 = vpack.c.b16 %v442, %v434
        %v483 = vpack.c.b16 %v443, %v435
        %v484 = vpack.c.b16 %v444, %v436
        %v485 = vpack.c.b16 %v445, %v437
        %v486 = vpack.c.b16 %v446, %v438
        %v487 = vpack.c.b16 %v447, %v439
        %v488 = vpack.c.b16 %v448, %v440
        %v489 = vpack.c.b16 %v457, %v449
        %v490 = vpack.c.b16 %v458, %v450
        %v491 = vpack.c.b16 %v459, %v451
        %v492 = vpack.c.b16 %v460, %v452
        %v493 = vpack.c.b16 %v461, %v453
        %v494 = vpack.c.b16 %v462, %v454
        %v495 = vpack.c.b16 %v463, %v455
        %v496 = vpack.c.b16 %v464, %v456
        %v497 = vpack.c.b16 %v473, %v465
        %v498 = vpack.c.b16 %v474, %v466
        %v499 = vpack.c.b16 %v475, %v467
        %v500 = vpack.c.b16 %v476, %v468
        %v501 = vpack.c.b16 %v477, %v469
        %v502 = vpack.c.b16 %v478, %v470
        %v503 = vpack.c.b16 %v479, %v471
        %v504 = vpack.c.b16 %v480, %v472
        %vm529 = vcmask 392192
        %v531 = vsel %vm529, %v408, 0
        %533 = vmatprep.subr.bf16.mxu0 0
        %534 = vmatpush1.bf16.msra.mxu0 0
        %535 = vmatprep.subr.bf16.mxu0 0
        %536 = vmatpush1.bf16.msra.mxu0 0
        %537 = vmatprep.subr.bf16.mxu0 0
        %538 = vmatpush1.bf16.msra.mxu0 0
        %539 = vmatprep.subr.bf16.mxu0 0
        %540 = vmatpush1.bf16.msra.mxu0 0
        %541 = vmatprep.subr.bf16.mxu0 0
        %542 = vmatpush1.bf16.msra.mxu0 0
        %543 = vmatprep.subr.bf16.mxu0 %v498
        %544 = vmatpush1.bf16.msra.mxu0 %v497
        %545 = vmatprep.subr.bf16.mxu0 %v490
        %546 = vmatpush1.bf16.msra.mxu0 %v489
        %547 = vmatprep.subr.bf16.mxu0 %v482
        %548 = vmatpush1.bf16.msra.mxu0 %v481
        %549 = vmatprep.subr.bf16.mxu0 0
        %550 = vmatpush2.bf16.msra.mxu0 0
        %551 = vmatprep.subr.bf16.mxu0 0
        %552 = vmatpush2.bf16.msra.mxu0 0
        %553 = vmatprep.subr.bf16.mxu0 0
        %554 = vmatpush2.bf16.msra.mxu0 0
        %555 = vmatprep.subr.bf16.mxu0 0
        %556 = vmatpush2.bf16.msra.mxu0 0
        %557 = vmatprep.subr.bf16.mxu0 0
        %558 = vmatpush2.bf16.msra.mxu0 0
        %559 = vmatprep.subr.bf16.mxu0 0
        %560 = vmatpush2.bf16.msra.mxu0 0
        %561 = vmatprep.subr.bf16.mxu0 0
        %562 = vmatpush2.bf16.msra.mxu0 0
        %563 = vmatprep.subr.bf16.mxu0 0
        %564 = vmatpush2.bf16.msra.mxu0 0
        %565 = vmatprep.mubr.bf16.mxu0 0
        %566 = vmatmul.mubr.bf16.gmra.mxu0 %v531
        %v567 = vpop.f32.mrf.mxu0
        %v568 = vadd.f32 0.0, %v567
        %v569 = vpop.f32.mrf.mxu0
        %v570 = vadd.f32 0.0, %v569
        %v571 = vpop.f32.mrf.mxu0
        %v572 = vadd.f32 0.0, %v571
        %v573 = vpop.f32.mrf.mxu0
        %v574 = vadd.f32 0.0, %v573
        %575 = vdwg.mxu0
        %576 = vmatprep.subr.bf16.mxu0 0
        %577 = vmatpush1.bf16.msra.mxu0 0
        %578 = vmatprep.subr.bf16.mxu0 0
        %579 = vmatpush1.bf16.msra.mxu0 0
        %580 = vmatprep.subr.bf16.mxu0 0
        %581 = vmatpush1.bf16.msra.mxu0 0
        %582 = vmatprep.subr.bf16.mxu0 0
        %583 = vmatpush1.bf16.msra.mxu0 0
        %584 = vmatprep.subr.bf16.mxu0 0
        %585 = vmatpush1.bf16.msra.mxu0 0
        %586 = vmatprep.subr.bf16.mxu0 %v500
        %587 = vmatpush1.bf16.msra.mxu0 %v499
        %588 = vmatprep.subr.bf16.mxu0 %v492
        %589 = vmatpush1.bf16.msra.mxu0 %v491
        %590 = vmatprep.subr.bf16.mxu0 %v484
        %591 = vmatpush1.bf16.msra.mxu0 %v483
        %592 = vmatprep.subr.bf16.mxu0 0
        %593 = vmatpush2.bf16.msra.mxu0 0
        %594 = vmatprep.subr.bf16.mxu0 0
        %595 = vmatpush2.bf16.msra.mxu0 0
        %596 = vmatprep.subr.bf16.mxu0 0
        %597 = vmatpush2.bf16.msra.mxu0 0
        %598 = vmatprep.subr.bf16.mxu0 0
        %599 = vmatpush2.bf16.msra.mxu0 0
        %600 = vmatprep.subr.bf16.mxu0 0
        %601 = vmatpush2.bf16.msra.mxu0 0
        %602 = vmatprep.subr.bf16.mxu0 0
        %603 = vmatpush2.bf16.msra.mxu0 0
        %604 = vmatprep.subr.bf16.mxu0 0
        %605 = vmatpush2.bf16.msra.mxu0 0
        %606 = vmatprep.subr.bf16.mxu0 0
        %607 = vmatpush2.bf16.msra.mxu0 0
        %608 = vmatprep.mubr.bf16.mxu0 0
        %609 = vmatmul.mubr.bf16.gmra.mxu0 %v531
        %v610 = vpop.f32.mrf.mxu0
        %v611 = vadd.f32 0.0, %v610
        %v612 = vpop.f32.mrf.mxu0
        %v613 = vadd.f32 0.0, %v612
        %v614 = vpop.f32.mrf.mxu0
        %v615 = vadd.f32 0.0, %v614
        %v616 = vpop.f32.mrf.mxu0
        %v617 = vadd.f32 0.0, %v616
        %618 = vdwg.mxu0
        %619 = vmatprep.subr.bf16.mxu0 0
        %620 = vmatpush1.bf16.msra.mxu0 0
        %621 = vmatprep.subr.bf16.mxu0 0
        %622 = vmatpush1.bf16.msra.mxu0 0
        %623 = vmatprep.subr.bf16.mxu0 0
        %624 = vmatpush1.bf16.msra.mxu0 0
        %625 = vmatprep.subr.bf16.mxu0 0
        %626 = vmatpush1.bf16.msra.mxu0 0
        %627 = vmatprep.subr.bf16.mxu0 0
        %628 = vmatpush1.bf16.msra.mxu0 0
        %629 = vmatprep.subr.bf16.mxu0 %v502
        %630 = vmatpush1.bf16.msra.mxu0 %v501
        %631 = vmatprep.subr.bf16.mxu0 %v494
        %632 = vmatpush1.bf16.msra.mxu0 %v493
        %633 = vmatprep.subr.bf16.mxu0 %v486
        %634 = vmatpush1.bf16.msra.mxu0 %v485
        %635 = vmatprep.subr.bf16.mxu0 0
        %636 = vmatpush2.bf16.msra.mxu0 0
        %637 = vmatprep.subr.bf16.mxu0 0
        %638 = vmatpush2.bf16.msra.mxu0 0
        %639 = vmatprep.subr.bf16.mxu0 0
        %640 = vmatpush2.bf16.msra.mxu0 0
        %641 = vmatprep.subr.bf16.mxu0 0
        %642 = vmatpush2.bf16.msra.mxu0 0
        %643 = vmatprep.subr.bf16.mxu0 0
        %644 = vmatpush2.bf16.msra.mxu0 0
        %645 = vmatprep.subr.bf16.mxu0 0
        %646 = vmatpush2.bf16.msra.mxu0 0
        %647 = vmatprep.subr.bf16.mxu0 0
        %648 = vmatpush2.bf16.msra.mxu0 0
        %649 = vmatprep.subr.bf16.mxu0 0
        %650 = vmatpush2.bf16.msra.mxu0 0
        %651 = vmatprep.mubr.bf16.mxu0 0
        %652 = vmatmul.mubr.bf16.gmra.mxu0 %v531
        %v653 = vpop.f32.mrf.mxu0
        %v654 = vadd.f32 0.0, %v653
        %v655 = vpop.f32.mrf.mxu0
        %v656 = vadd.f32 0.0, %v655
        %v657 = vpop.f32.mrf.mxu0
        %v658 = vadd.f32 0.0, %v657
        %v659 = vpop.f32.mrf.mxu0
        %v660 = vadd.f32 0.0, %v659
        %661 = vdwg.mxu0
        %662 = vmatprep.subr.bf16.mxu0 0
        %663 = vmatpush1.bf16.msra.mxu0 0
        %664 = vmatprep.subr.bf16.mxu0 0
        %665 = vmatpush1.bf16.msra.mxu0 0
        %666 = vmatprep.subr.bf16.mxu0 0
        %667 = vmatpush1.bf16.msra.mxu0 0
        %668 = vmatprep.subr.bf16.mxu0 0
        %669 = vmatpush1.bf16.msra.mxu0 0
        %670 = vmatprep.subr.bf16.mxu0 0
        %671 = vmatpush1.bf16.msra.mxu0 0
        %672 = vmatprep.subr.bf16.mxu0 %v504
        %673 = vmatpush1.bf16.msra.mxu0 %v503
        %674 = vmatprep.subr.bf16.mxu0 %v496
        %675 = vmatpush1.bf16.msra.mxu0 %v495
        %676 = vmatprep.subr.bf16.mxu0 %v488
        %677 = vmatpush1.bf16.msra.mxu0 %v487
        %678 = vmatprep.subr.bf16.mxu0 0
        %679 = vmatpush2.bf16.msra.mxu0 0
        %680 = vmatprep.subr.bf16.mxu0 0
        %681 = vmatpush2.bf16.msra.mxu0 0
        %682 = vmatprep.subr.bf16.mxu0 0
        %683 = vmatpush2.bf16.msra.mxu0 0
        %684 = vmatprep.subr.bf16.mxu0 0
        %685 = vmatpush2.bf16.msra.mxu0 0
        %686 = vmatprep.subr.bf16.mxu0 0
        %687 = vmatpush2.bf16.msra.mxu0 0
        %688 = vmatprep.subr.bf16.mxu0 0
        %689 = vmatpush2.bf16.msra.mxu0 0
        %690 = vmatprep.subr.bf16.mxu0 0
        %691 = vmatpush2.bf16.msra.mxu0 0
        %692 = vmatprep.subr.bf16.mxu0 0
        %693 = vmatpush2.bf16.msra.mxu0 0
        %694 = vmatprep.mubr.bf16.mxu0 0
        %695 = vmatmul.mubr.bf16.gmra.mxu0 %v531
        %v696 = vpop.f32.mrf.mxu0
        %v697 = vadd.f32 0.0, %v696
        %v698 = vpop.f32.mrf.mxu0
        %v699 = vadd.f32 0.0, %v698
        %v700 = vpop.f32.mrf.mxu0
        %v701 = vadd.f32 0.0, %v700
        %v702 = vpop.f32.mrf.mxu0
        %v703 = vadd.f32 0.0, %v702
        %704 = vdwg.mxu0
        %s705 = scalar_lea.vmem %s355, 192 [#allocation2]
        %v706 = vld [vmem:[%s705] sm:$0xff]
        %v707 = vld [vmem:[%s705 + $0x8] sm:$0xff]
        %v708 = vld [vmem:[%s705 + $0x10] sm:$0xff]
        %v709 = vld [vmem:[%s705 + $0x18] sm:$0xff]
        %v710 = vld [vmem:[%s705 + $0x20] sm:$0xff]
        %v711 = vld [vmem:[%s705 + $0x28] sm:$0xff]
        %v712 = vld [vmem:[%s705 + $0x30] sm:$0xff]
        %v713 = vld [vmem:[%s705 + $0x38] sm:$0xff]
        %v714 = vld [vmem:[%s705 + $0x40] sm:$0xff]
        %v715 = vld [vmem:[%s705 + $0x48] sm:$0xff]
        %v716 = vld [vmem:[%s705 + $0x50] sm:$0xff]
        %v717 = vld [vmem:[%s705 + $0x58] sm:$0xff]
        %v718 = vld [vmem:[%s705 + $0x60] sm:$0xff]
        %v719 = vld [vmem:[%s705 + $0x68] sm:$0xff]
        %v720 = vld [vmem:[%s705 + $0x70] sm:$0xff]
        %v721 = vld [vmem:[%s705 + $0x78] sm:$0xff]
        %v722 = vld [vmem:[%s705 + $0x80] sm:$0xff]
        %v723 = vld [vmem:[%s705 + $0x88] sm:$0xff]
        %v724 = vld [vmem:[%s705 + $0x90] sm:$0xff]
        %v725 = vld [vmem:[%s705 + $0x98] sm:$0xff]
        %v726 = vld [vmem:[%s705 + $0xa0] sm:$0xff]
        %v727 = vld [vmem:[%s705 + $0xa8] sm:$0xff]
        %v728 = vld [vmem:[%s705 + $0xb0] sm:$0xff]
        %v729 = vld [vmem:[%s705 + $0xb8] sm:$0xff]
        %v754 = vunpack.c.l.b16 %v706
        %v755 = vunpack.c.h.b16 %v706
        %v756 = vunpack.c.l.b16 %v707
        %v757 = vunpack.c.h.b16 %v707
        %v758 = vunpack.c.l.b16 %v708
        %v759 = vunpack.c.h.b16 %v708
        %v760 = vunpack.c.l.b16 %v709
        %v761 = vunpack.c.h.b16 %v709
        %v762 = vunpack.c.l.b16 %v710
        %v763 = vunpack.c.h.b16 %v710
        %v764 = vunpack.c.l.b16 %v711
        %v765 = vunpack.c.h.b16 %v711
        %v766 = vunpack.c.l.b16 %v712
        %v767 = vunpack.c.h.b16 %v712
        %v768 = vunpack.c.l.b16 %v713
        %v769 = vunpack.c.h.b16 %v713
        %v770 = vunpack.c.l.b16 %v714
        %v771 = vunpack.c.h.b16 %v714
        %v772 = vunpack.c.l.b16 %v715
        %v773 = vunpack.c.h.b16 %v715
        %v774 = vunpack.c.l.b16 %v716
        %v775 = vunpack.c.h.b16 %v716
        %v776 = vunpack.c.l.b16 %v717
        %v777 = vunpack.c.h.b16 %v717
        %v778 = vunpack.c.l.b16 %v718
        %v779 = vunpack.c.h.b16 %v718
        %v780 = vunpack.c.l.b16 %v719
        %v781 = vunpack.c.h.b16 %v719
        %v782 = vunpack.c.l.b16 %v720
        %v783 = vunpack.c.h.b16 %v720
        %v784 = vunpack.c.l.b16 %v721
        %v785 = vunpack.c.h.b16 %v721
        %v786 = vunpack.c.l.b16 %v722
        %v787 = vunpack.c.h.b16 %v722
        %v788 = vunpack.c.l.b16 %v723
        %v789 = vunpack.c.h.b16 %v723
        %v790 = vunpack.c.l.b16 %v724
        %v791 = vunpack.c.h.b16 %v724
        %v792 = vunpack.c.l.b16 %v725
        %v793 = vunpack.c.h.b16 %v725
        %v794 = vunpack.c.l.b16 %v726
        %v795 = vunpack.c.h.b16 %v726
        %v796 = vunpack.c.l.b16 %v727
        %v797 = vunpack.c.h.b16 %v727
        %v798 = vunpack.c.l.b16 %v728
        %v799 = vunpack.c.h.b16 %v728
        %v800 = vunpack.c.l.b16 %v729
        %v801 = vunpack.c.h.b16 %v729
        %v802 = vpack.c.b16 %v762, %v754
        %v803 = vpack.c.b16 %v763, %v755
        %v804 = vpack.c.b16 %v764, %v756
        %v805 = vpack.c.b16 %v765, %v757
        %v806 = vpack.c.b16 %v766, %v758
        %v807 = vpack.c.b16 %v767, %v759
        %v808 = vpack.c.b16 %v768, %v760
        %v809 = vpack.c.b16 %v769, %v761
        %v810 = vpack.c.b16 %v778, %v770
        %v811 = vpack.c.b16 %v779, %v771
        %v812 = vpack.c.b16 %v780, %v772
        %v813 = vpack.c.b16 %v781, %v773
        %v814 = vpack.c.b16 %v782, %v774
        %v815 = vpack.c.b16 %v783, %v775
        %v816 = vpack.c.b16 %v784, %v776
        %v817 = vpack.c.b16 %v785, %v777
        %v818 = vpack.c.b16 %v794, %v786
        %v819 = vpack.c.b16 %v795, %v787
        %v820 = vpack.c.b16 %v796, %v788
        %v821 = vpack.c.b16 %v797, %v789
        %v822 = vpack.c.b16 %v798, %v790
        %v823 = vpack.c.b16 %v799, %v791
        %v824 = vpack.c.b16 %v800, %v792
        %v825 = vpack.c.b16 %v801, %v793
        %850 = vmatprep.subr.bf16.mxu0 0
        %851 = vmatpush1.bf16.msra.mxu0 0
        %852 = vmatprep.subr.bf16.mxu0 0
        %853 = vmatpush1.bf16.msra.mxu0 0
        %854 = vmatprep.subr.bf16.mxu0 0
        %855 = vmatpush1.bf16.msra.mxu0 0
        %856 = vmatprep.subr.bf16.mxu0 0
        %857 = vmatpush1.bf16.msra.mxu0 0
        %858 = vmatprep.subr.bf16.mxu0 0
        %859 = vmatpush1.bf16.msra.mxu0 0
        %860 = vmatprep.subr.bf16.mxu0 %v819
        %861 = vmatpush1.bf16.msra.mxu0 %v818
        %862 = vmatprep.subr.bf16.mxu0 %v811
        %863 = vmatpush1.bf16.msra.mxu0 %v810
        %864 = vmatprep.subr.bf16.mxu0 %v803
        %865 = vmatpush1.bf16.msra.mxu0 %v802
        %866 = vmatprep.subr.bf16.mxu0 0
        %867 = vmatpush2.bf16.msra.mxu0 0
        %868 = vmatprep.subr.bf16.mxu0 0
        %869 = vmatpush2.bf16.msra.mxu0 0
        %870 = vmatprep.subr.bf16.mxu0 0
        %871 = vmatpush2.bf16.msra.mxu0 0
        %872 = vmatprep.subr.bf16.mxu0 0
        %873 = vmatpush2.bf16.msra.mxu0 0
        %874 = vmatprep.subr.bf16.mxu0 0
        %875 = vmatpush2.bf16.msra.mxu0 0
        %876 = vmatprep.subr.bf16.mxu0 0
        %877 = vmatpush2.bf16.msra.mxu0 0
        %878 = vmatprep.subr.bf16.mxu0 0
        %879 = vmatpush2.bf16.msra.mxu0 0
        %880 = vmatprep.subr.bf16.mxu0 0
        %881 = vmatpush2.bf16.msra.mxu0 0
        %882 = vmatprep.mubr.bf16.mxu0 0
        %883 = vmatmul.mubr.bf16.gmra.mxu0 %v531
        %v884 = vpop.f32.mrf.mxu0
        %v885 = vadd.f32 0.0, %v884
        %v886 = vpop.f32.mrf.mxu0
        %v887 = vadd.f32 0.0, %v886
        %v888 = vpop.f32.mrf.mxu0
        %v889 = vadd.f32 0.0, %v888
        %v890 = vpop.f32.mrf.mxu0
        %v891 = vadd.f32 0.0, %v890
        %892 = vdwg.mxu0
        %893 = vmatprep.subr.bf16.mxu0 0
        %894 = vmatpush1.bf16.msra.mxu0 0
        %895 = vmatprep.subr.bf16.mxu0 0
        %896 = vmatpush1.bf16.msra.mxu0 0
        %897 = vmatprep.subr.bf16.mxu0 0
        %898 = vmatpush1.bf16.msra.mxu0 0
        %899 = vmatprep.subr.bf16.mxu0 0
        %900 = vmatpush1.bf16.msra.mxu0 0
        %901 = vmatprep.subr.bf16.mxu0 0
        %902 = vmatpush1.bf16.msra.mxu0 0
        %903 = vmatprep.subr.bf16.mxu0 %v821
        %904 = vmatpush1.bf16.msra.mxu0 %v820
        %905 = vmatprep.subr.bf16.mxu0 %v813
        %906 = vmatpush1.bf16.msra.mxu0 %v812
        %907 = vmatprep.subr.bf16.mxu0 %v805
        %908 = vmatpush1.bf16.msra.mxu0 %v804
        %909 = vmatprep.subr.bf16.mxu0 0
        %910 = vmatpush2.bf16.msra.mxu0 0
        %911 = vmatprep.subr.bf16.mxu0 0
        %912 = vmatpush2.bf16.msra.mxu0 0
        %913 = vmatprep.subr.bf16.mxu0 0
        %914 = vmatpush2.bf16.msra.mxu0 0
        %915 = vmatprep.subr.bf16.mxu0 0
        %916 = vmatpush2.bf16.msra.mxu0 0
        %917 = vmatprep.subr.bf16.mxu0 0
        %918 = vmatpush2.bf16.msra.mxu0 0
        %919 = vmatprep.subr.bf16.mxu0 0
        %920 = vmatpush2.bf16.msra.mxu0 0
        %921 = vmatprep.subr.bf16.mxu0 0
        %922 = vmatpush2.bf16.msra.mxu0 0
        %923 = vmatprep.subr.bf16.mxu0 0
        %924 = vmatpush2.bf16.msra.mxu0 0
        %925 = vmatprep.mubr.bf16.mxu0 0
        %926 = vmatmul.mubr.bf16.gmra.mxu0 %v531
        %v927 = vpop.f32.mrf.mxu0
        %v928 = vadd.f32 0.0, %v927
        %v929 = vpop.f32.mrf.mxu0
        %v930 = vadd.f32 0.0, %v929
        %v931 = vpop.f32.mrf.mxu0
        %v932 = vadd.f32 0.0, %v931
        %v933 = vpop.f32.mrf.mxu0
        %v934 = vadd.f32 0.0, %v933
        %935 = vdwg.mxu0
        %936 = vmatprep.subr.bf16.mxu0 0
        %937 = vmatpush1.bf16.msra.mxu0 0
        %938 = vmatprep.subr.bf16.mxu0 0
        %939 = vmatpush1.bf16.msra.mxu0 0
        %940 = vmatprep.subr.bf16.mxu0 0
        %941 = vmatpush1.bf16.msra.mxu0 0
        %942 = vmatprep.subr.bf16.mxu0 0
        %943 = vmatpush1.bf16.msra.mxu0 0
        %944 = vmatprep.subr.bf16.mxu0 0
        %945 = vmatpush1.bf16.msra.mxu0 0
        %946 = vmatprep.subr.bf16.mxu0 %v823
        %947 = vmatpush1.bf16.msra.mxu0 %v822
        %948 = vmatprep.subr.bf16.mxu0 %v815
        %949 = vmatpush1.bf16.msra.mxu0 %v814
        %950 = vmatprep.subr.bf16.mxu0 %v807
        %951 = vmatpush1.bf16.msra.mxu0 %v806
        %952 = vmatprep.subr.bf16.mxu0 0
        %953 = vmatpush2.bf16.msra.mxu0 0
        %954 = vmatprep.subr.bf16.mxu0 0
        %955 = vmatpush2.bf16.msra.mxu0 0
        %956 = vmatprep.subr.bf16.mxu0 0
        %957 = vmatpush2.bf16.msra.mxu0 0
        %958 = vmatprep.subr.bf16.mxu0 0
        %959 = vmatpush2.bf16.msra.mxu0 0
        %960 = vmatprep.subr.bf16.mxu0 0
        %961 = vmatpush2.bf16.msra.mxu0 0
        %962 = vmatprep.subr.bf16.mxu0 0
        %963 = vmatpush2.bf16.msra.mxu0 0
        %964 = vmatprep.subr.bf16.mxu0 0
        %965 = vmatpush2.bf16.msra.mxu0 0
        %966 = vmatprep.subr.bf16.mxu0 0
        %967 = vmatpush2.bf16.msra.mxu0 0
        %968 = vmatprep.mubr.bf16.mxu0 0
        %969 = vmatmul.mubr.bf16.gmra.mxu0 %v531
        %v970 = vpop.f32.mrf.mxu0
        %v971 = vadd.f32 0.0, %v970
        %v972 = vpop.f32.mrf.mxu0
        %v973 = vadd.f32 0.0, %v972
        %v974 = vpop.f32.mrf.mxu0
        %v975 = vadd.f32 0.0, %v974
        %v976 = vpop.f32.mrf.mxu0
        %v977 = vadd.f32 0.0, %v976
        %978 = vdwg.mxu0
        %979 = vmatprep.subr.bf16.mxu0 0
        %980 = vmatpush1.bf16.msra.mxu0 0
        %981 = vmatprep.subr.bf16.mxu0 0
        %982 = vmatpush1.bf16.msra.mxu0 0
        %983 = vmatprep.subr.bf16.mxu0 0
        %984 = vmatpush1.bf16.msra.mxu0 0
        %985 = vmatprep.subr.bf16.mxu0 0
        %986 = vmatpush1.bf16.msra.mxu0 0
        %987 = vmatprep.subr.bf16.mxu0 0
        %988 = vmatpush1.bf16.msra.mxu0 0
        %989 = vmatprep.subr.bf16.mxu0 %v825
        %990 = vmatpush1.bf16.msra.mxu0 %v824
        %991 = vmatprep.subr.bf16.mxu0 %v817
        %992 = vmatpush1.bf16.msra.mxu0 %v816
        %993 = vmatprep.subr.bf16.mxu0 %v809
        %994 = vmatpush1.bf16.msra.mxu0 %v808
        %995 = vmatprep.subr.bf16.mxu0 0
        %996 = vmatpush2.bf16.msra.mxu0 0
        %997 = vmatprep.subr.bf16.mxu0 0
        %998 = vmatpush2.bf16.msra.mxu0 0
        %999 = vmatprep.subr.bf16.mxu0 0
        %1000 = vmatpush2.bf16.msra.mxu0 0
        %1001 = vmatprep.subr.bf16.mxu0 0
        %1002 = vmatpush2.bf16.msra.mxu0 0
        %1003 = vmatprep.subr.bf16.mxu0 0
        %1004 = vmatpush2.bf16.msra.mxu0 0
        %1005 = vmatprep.subr.bf16.mxu0 0
        %1006 = vmatpush2.bf16.msra.mxu0 0
        %1007 = vmatprep.subr.bf16.mxu0 0
        %1008 = vmatpush2.bf16.msra.mxu0 0
        %1009 = vmatprep.subr.bf16.mxu0 0
        %1010 = vmatpush2.bf16.msra.mxu0 0
        %1011 = vmatprep.mubr.bf16.mxu0 0
        %1012 = vmatmul.mubr.bf16.gmra.mxu0 %v531
        %v1013 = vpop.f32.mrf.mxu0
        %v1014 = vadd.f32 0.0, %v1013
        %v1015 = vpop.f32.mrf.mxu0
        %v1016 = vadd.f32 0.0, %v1015
        %v1017 = vpop.f32.mrf.mxu0
        %v1018 = vadd.f32 0.0, %v1017
        %v1019 = vpop.f32.mrf.mxu0
        %v1020 = vadd.f32 0.0, %v1019
        %1021 = vdwg.mxu0
        %v1022 = vmax.f32 %v568, %v885
        %v1023 = vmax.f32 %v570, %v887
        %v1024 = vmax.f32 %v611, %v928
        %v1025 = vmax.f32 %v613, %v930
        %v1026 = vmax.f32 %v654, %v971
        %v1027 = vmax.f32 %v656, %v973
        %v1028 = vmax.f32 %v697, %v1014
        %v1029 = vmax.f32 %v699, %v1016
        %v1030 = vmax.f32 %v572, %v889
        %v1031 = vmax.f32 %v574, %v891
        %v1032 = vmax.f32 %v615, %v932
        %v1033 = vmax.f32 %v617, %v934
        %v1034 = vmax.f32 %v658, %v975
        %v1035 = vmax.f32 %v660, %v977
        %v1036 = vmax.f32 %v701, %v1018
        %v1037 = vmax.f32 %v703, %v1020
        %s1038 = scalar_lea.vmem %s355, 384 [#allocation2]
        %v1039 = vld [vmem:[%s1038] sm:$0xff]
        %v1040 = vld [vmem:[%s1038 + $0x8] sm:$0xff]
        %v1041 = vld [vmem:[%s1038 + $0x10] sm:$0xff]
        %v1042 = vld [vmem:[%s1038 + $0x18] sm:$0xff]
        %v1043 = vld [vmem:[%s1038 + $0x20] sm:$0xff]
        %v1044 = vld [vmem:[%s1038 + $0x28] sm:$0xff]
        %v1045 = vld [vmem:[%s1038 + $0x30] sm:$0xff]
        %v1046 = vld [vmem:[%s1038 + $0x38] sm:$0xff]
        %v1047 = vld [vmem:[%s1038 + $0x40] sm:$0xff]
        %v1048 = vld [vmem:[%s1038 + $0x48] sm:$0xff]
        %v1049 = vld [vmem:[%s1038 + $0x50] sm:$0xff]
        %v1050 = vld [vmem:[%s1038 + $0x58] sm:$0xff]
        %v1051 = vld [vmem:[%s1038 + $0x60] sm:$0xff]
        %v1052 = vld [vmem:[%s1038 + $0x68] sm:$0xff]
        %v1053 = vld [vmem:[%s1038 + $0x70] sm:$0xff]
        %v1054 = vld [vmem:[%s1038 + $0x78] sm:$0xff]
        %v1055 = vld [vmem:[%s1038 + $0x80] sm:$0xff]
        %v1056 = vld [vmem:[%s1038 + $0x88] sm:$0xff]
        %v1057 = vld [vmem:[%s1038 + $0x90] sm:$0xff]
        %v1058 = vld [vmem:[%s1038 + $0x98] sm:$0xff]
        %v1059 = vld [vmem:[%s1038 + $0xa0] sm:$0xff]
        %v1060 = vld [vmem:[%s1038 + $0xa8] sm:$0xff]
        %v1061 = vld [vmem:[%s1038 + $0xb0] sm:$0xff]
        %v1062 = vld [vmem:[%s1038 + $0xb8] sm:$0xff]
        %v1087 = vunpack.c.l.b16 %v1039
        %v1088 = vunpack.c.h.b16 %v1039
        %v1089 = vunpack.c.l.b16 %v1040
        %v1090 = vunpack.c.h.b16 %v1040
        %v1091 = vunpack.c.l.b16 %v1041
        %v1092 = vunpack.c.h.b16 %v1041
        %v1093 = vunpack.c.l.b16 %v1042
        %v1094 = vunpack.c.h.b16 %v1042
        %v1095 = vunpack.c.l.b16 %v1043
        %v1096 = vunpack.c.h.b16 %v1043
        %v1097 = vunpack.c.l.b16 %v1044
        %v1098 = vunpack.c.h.b16 %v1044
        %v1099 = vunpack.c.l.b16 %v1045
        %v1100 = vunpack.c.h.b16 %v1045
        %v1101 = vunpack.c.l.b16 %v1046
        %v1102 = vunpack.c.h.b16 %v1046
        %v1103 = vunpack.c.l.b16 %v1047
        %v1104 = vunpack.c.h.b16 %v1047
        %v1105 = vunpack.c.l.b16 %v1048
        %v1106 = vunpack.c.h.b16 %v1048
        %v1107 = vunpack.c.l.b16 %v1049
        %v1108 = vunpack.c.h.b16 %v1049
        %v1109 = vunpack.c.l.b16 %v1050
        %v1110 = vunpack.c.h.b16 %v1050
        %v1111 = vunpack.c.l.b16 %v1051
        %v1112 = vunpack.c.h.b16 %v1051
        %v1113 = vunpack.c.l.b16 %v1052
        %v1114 = vunpack.c.h.b16 %v1052
        %v1115 = vunpack.c.l.b16 %v1053
        %v1116 = vunpack.c.h.b16 %v1053
        %v1117 = vunpack.c.l.b16 %v1054
        %v1118 = vunpack.c.h.b16 %v1054
        %v1119 = vunpack.c.l.b16 %v1055
        %v1120 = vunpack.c.h.b16 %v1055
        %v1121 = vunpack.c.l.b16 %v1056
        %v1122 = vunpack.c.h.b16 %v1056
        %v1123 = vunpack.c.l.b16 %v1057
        %v1124 = vunpack.c.h.b16 %v1057
        %v1125 = vunpack.c.l.b16 %v1058
        %v1126 = vunpack.c.h.b16 %v1058
        %v1127 = vunpack.c.l.b16 %v1059
        %v1128 = vunpack.c.h.b16 %v1059
        %v1129 = vunpack.c.l.b16 %v1060
        %v1130 = vunpack.c.h.b16 %v1060
        %v1131 = vunpack.c.l.b16 %v1061
        %v1132 = vunpack.c.h.b16 %v1061
        %v1133 = vunpack.c.l.b16 %v1062
        %v1134 = vunpack.c.h.b16 %v1062
        %v1135 = vpack.c.b16 %v1095, %v1087
        %v1136 = vpack.c.b16 %v1096, %v1088
        %v1137 = vpack.c.b16 %v1097, %v1089
        %v1138 = vpack.c.b16 %v1098, %v1090
        %v1139 = vpack.c.b16 %v1099, %v1091
        %v1140 = vpack.c.b16 %v1100, %v1092
        %v1141 = vpack.c.b16 %v1101, %v1093
        %v1142 = vpack.c.b16 %v1102, %v1094
        %v1143 = vpack.c.b16 %v1111, %v1103
        %v1144 = vpack.c.b16 %v1112, %v1104
        %v1145 = vpack.c.b16 %v1113, %v1105
        %v1146 = vpack.c.b16 %v1114, %v1106
        %v1147 = vpack.c.b16 %v1115, %v1107
        %v1148 = vpack.c.b16 %v1116, %v1108
        %v1149 = vpack.c.b16 %v1117, %v1109
        %v1150 = vpack.c.b16 %v1118, %v1110
        %v1151 = vpack.c.b16 %v1127, %v1119
        %v1152 = vpack.c.b16 %v1128, %v1120
        %v1153 = vpack.c.b16 %v1129, %v1121
        %v1154 = vpack.c.b16 %v1130, %v1122
        %v1155 = vpack.c.b16 %v1131, %v1123
        %v1156 = vpack.c.b16 %v1132, %v1124
        %v1157 = vpack.c.b16 %v1133, %v1125
        %v1158 = vpack.c.b16 %v1134, %v1126
        %1183 = vmatprep.subr.bf16.mxu0 0
        %1184 = vmatpush1.bf16.msra.mxu0 0
        %1185 = vmatprep.subr.bf16.mxu0 0
        %1186 = vmatpush1.bf16.msra.mxu0 0
        %1187 = vmatprep.subr.bf16.mxu0 0
        %1188 = vmatpush1.bf16.msra.mxu0 0
        %1189 = vmatprep.subr.bf16.mxu0 0
        %1190 = vmatpush1.bf16.msra.mxu0 0
        %1191 = vmatprep.subr.bf16.mxu0 0
        %1192 = vmatpush1.bf16.msra.mxu0 0
        %1193 = vmatprep.subr.bf16.mxu0 %v1152
        %1194 = vmatpush1.bf16.msra.mxu0 %v1151
        %1195 = vmatprep.subr.bf16.mxu0 %v1144
        %1196 = vmatpush1.bf16.msra.mxu0 %v1143
        %1197 = vmatprep.subr.bf16.mxu0 %v1136
        %1198 = vmatpush1.bf16.msra.mxu0 %v1135
        %1199 = vmatprep.subr.bf16.mxu0 0
        %1200 = vmatpush2.bf16.msra.mxu0 0
        %1201 = vmatprep.subr.bf16.mxu0 0
        %1202 = vmatpush2.bf16.msra.mxu0 0
        %1203 = vmatprep.subr.bf16.mxu0 0
        %1204 = vmatpush2.bf16.msra.mxu0 0
        %1205 = vmatprep.subr.bf16.mxu0 0
        %1206 = vmatpush2.bf16.msra.mxu0 0
        %1207 = vmatprep.subr.bf16.mxu0 0
        %1208 = vmatpush2.bf16.msra.mxu0 0
        %1209 = vmatprep.subr.bf16.mxu0 0
        %1210 = vmatpush2.bf16.msra.mxu0 0
        %1211 = vmatprep.subr.bf16.mxu0 0
        %1212 = vmatpush2.bf16.msra.mxu0 0
        %1213 = vmatprep.subr.bf16.mxu0 0
        %1214 = vmatpush2.bf16.msra.mxu0 0
        %1215 = vmatprep.mubr.bf16.mxu0 0
        %1216 = vmatmul.mubr.bf16.gmra.mxu0 %v531
        %v1217 = vpop.f32.mrf.mxu0
        %v1218 = vadd.f32 0.0, %v1217
        %v1219 = vpop.f32.mrf.mxu0
        %v1220 = vadd.f32 0.0, %v1219
        %v1221 = vpop.f32.mrf.mxu0
        %v1222 = vadd.f32 0.0, %v1221
        %v1223 = vpop.f32.mrf.mxu0
        %v1224 = vadd.f32 0.0, %v1223
        %1225 = vdwg.mxu0
        %1226 = vmatprep.subr.bf16.mxu0 0
        %1227 = vmatpush1.bf16.msra.mxu0 0
        %1228 = vmatprep.subr.bf16.mxu0 0
        %1229 = vmatpush1.bf16.msra.mxu0 0
        %1230 = vmatprep.subr.bf16.mxu0 0
        %1231 = vmatpush1.bf16.msra.mxu0 0
        %1232 = vmatprep.subr.bf16.mxu0 0
        %1233 = vmatpush1.bf16.msra.mxu0 0
        %1234 = vmatprep.subr.bf16.mxu0 0
        %1235 = vmatpush1.bf16.msra.mxu0 0
        %1236 = vmatprep.subr.bf16.mxu0 %v1154
        %1237 = vmatpush1.bf16.msra.mxu0 %v1153
        %1238 = vmatprep.subr.bf16.mxu0 %v1146
        %1239 = vmatpush1.bf16.msra.mxu0 %v1145
        %1240 = vmatprep.subr.bf16.mxu0 %v1138
        %1241 = vmatpush1.bf16.msra.mxu0 %v1137
        %1242 = vmatprep.subr.bf16.mxu0 0
        %1243 = vmatpush2.bf16.msra.mxu0 0
        %1244 = vmatprep.subr.bf16.mxu0 0
        %1245 = vmatpush2.bf16.msra.mxu0 0
        %1246 = vmatprep.subr.bf16.mxu0 0
        %1247 = vmatpush2.bf16.msra.mxu0 0
        %1248 = vmatprep.subr.bf16.mxu0 0
        %1249 = vmatpush2.bf16.msra.mxu0 0
        %1250 = vmatprep.subr.bf16.mxu0 0
        %1251 = vmatpush2.bf16.msra.mxu0 0
        %1252 = vmatprep.subr.bf16.mxu0 0
        %1253 = vmatpush2.bf16.msra.mxu0 0
        %1254 = vmatprep.subr.bf16.mxu0 0
        %1255 = vmatpush2.bf16.msra.mxu0 0
        %1256 = vmatprep.subr.bf16.mxu0 0
        %1257 = vmatpush2.bf16.msra.mxu0 0
        %1258 = vmatprep.mubr.bf16.mxu0 0
        %1259 = vmatmul.mubr.bf16.gmra.mxu0 %v531
        %v1260 = vpop.f32.mrf.mxu0
        %v1261 = vadd.f32 0.0, %v1260
        %v1262 = vpop.f32.mrf.mxu0
        %v1263 = vadd.f32 0.0, %v1262
        %v1264 = vpop.f32.mrf.mxu0
        %v1265 = vadd.f32 0.0, %v1264
        %v1266 = vpop.f32.mrf.mxu0
        %v1267 = vadd.f32 0.0, %v1266
        %1268 = vdwg.mxu0
        %1269 = vmatprep.subr.bf16.mxu0 0
        %1270 = vmatpush1.bf16.msra.mxu0 0
        %1271 = vmatprep.subr.bf16.mxu0 0
        %1272 = vmatpush1.bf16.msra.mxu0 0
        %1273 = vmatprep.subr.bf16.mxu0 0
        %1274 = vmatpush1.bf16.msra.mxu0 0
        %1275 = vmatprep.subr.bf16.mxu0 0
        %1276 = vmatpush1.bf16.msra.mxu0 0
        %1277 = vmatprep.subr.bf16.mxu0 0
        %1278 = vmatpush1.bf16.msra.mxu0 0
        %1279 = vmatprep.subr.bf16.mxu0 %v1156
        %1280 = vmatpush1.bf16.msra.mxu0 %v1155
        %1281 = vmatprep.subr.bf16.mxu0 %v1148
        %1282 = vmatpush1.bf16.msra.mxu0 %v1147
        %1283 = vmatprep.subr.bf16.mxu0 %v1140
        %1284 = vmatpush1.bf16.msra.mxu0 %v1139
        %1285 = vmatprep.subr.bf16.mxu0 0
        %1286 = vmatpush2.bf16.msra.mxu0 0
        %1287 = vmatprep.subr.bf16.mxu0 0
        %1288 = vmatpush2.bf16.msra.mxu0 0
        %1289 = vmatprep.subr.bf16.mxu0 0
        %1290 = vmatpush2.bf16.msra.mxu0 0
        %1291 = vmatprep.subr.bf16.mxu0 0
        %1292 = vmatpush2.bf16.msra.mxu0 0
        %1293 = vmatprep.subr.bf16.mxu0 0
        %1294 = vmatpush2.bf16.msra.mxu0 0
        %1295 = vmatprep.subr.bf16.mxu0 0
        %1296 = vmatpush2.bf16.msra.mxu0 0
        %1297 = vmatprep.subr.bf16.mxu0 0
        %1298 = vmatpush2.bf16.msra.mxu0 0
        %1299 = vmatprep.subr.bf16.mxu0 0
        %1300 = vmatpush2.bf16.msra.mxu0 0
        %1301 = vmatprep.mubr.bf16.mxu0 0
        %1302 = vmatmul.mubr.bf16.gmra.mxu0 %v531
        %v1303 = vpop.f32.mrf.mxu0
        %v1304 = vadd.f32 0.0, %v1303
        %v1305 = vpop.f32.mrf.mxu0
        %v1306 = vadd.f32 0.0, %v1305
        %v1307 = vpop.f32.mrf.mxu0
        %v1308 = vadd.f32 0.0, %v1307
        %v1309 = vpop.f32.mrf.mxu0
        %v1310 = vadd.f32 0.0, %v1309
        %1311 = vdwg.mxu0
        %1312 = vmatprep.subr.bf16.mxu0 0
        %1313 = vmatpush1.bf16.msra.mxu0 0
        %1314 = vmatprep.subr.bf16.mxu0 0
        %1315 = vmatpush1.bf16.msra.mxu0 0
        %1316 = vmatprep.subr.bf16.mxu0 0
        %1317 = vmatpush1.bf16.msra.mxu0 0
        %1318 = vmatprep.subr.bf16.mxu0 0
        %1319 = vmatpush1.bf16.msra.mxu0 0
        %1320 = vmatprep.subr.bf16.mxu0 0
        %1321 = vmatpush1.bf16.msra.mxu0 0
        %1322 = vmatprep.subr.bf16.mxu0 %v1158
        %1323 = vmatpush1.bf16.msra.mxu0 %v1157
        %1324 = vmatprep.subr.bf16.mxu0 %v1150
        %1325 = vmatpush1.bf16.msra.mxu0 %v1149
        %1326 = vmatprep.subr.bf16.mxu0 %v1142
        %1327 = vmatpush1.bf16.msra.mxu0 %v1141
        %1328 = vmatprep.subr.bf16.mxu0 0
        %1329 = vmatpush2.bf16.msra.mxu0 0
        %1330 = vmatprep.subr.bf16.mxu0 0
        %1331 = vmatpush2.bf16.msra.mxu0 0
        %1332 = vmatprep.subr.bf16.mxu0 0
        %1333 = vmatpush2.bf16.msra.mxu0 0
        %1334 = vmatprep.subr.bf16.mxu0 0
        %1335 = vmatpush2.bf16.msra.mxu0 0
        %1336 = vmatprep.subr.bf16.mxu0 0
        %1337 = vmatpush2.bf16.msra.mxu0 0
        %1338 = vmatprep.subr.bf16.mxu0 0
        %1339 = vmatpush2.bf16.msra.mxu0 0
        %1340 = vmatprep.subr.bf16.mxu0 0
        %1341 = vmatpush2.bf16.msra.mxu0 0
        %1342 = vmatprep.subr.bf16.mxu0 0
        %1343 = vmatpush2.bf16.msra.mxu0 0
        %1344 = vmatprep.mubr.bf16.mxu0 0
        %1345 = vmatmul.mubr.bf16.gmra.mxu0 %v531
        %v1346 = vpop.f32.mrf.mxu0
        %v1347 = vadd.f32 0.0, %v1346
        %v1348 = vpop.f32.mrf.mxu0
        %v1349 = vadd.f32 0.0, %v1348
        %v1350 = vpop.f32.mrf.mxu0
        %v1351 = vadd.f32 0.0, %v1350
        %v1352 = vpop.f32.mrf.mxu0
        %v1353 = vadd.f32 0.0, %v1352
        %1354 = vdwg.mxu0
        %v1355 = vmax.f32 %v1022, %v1218
        %v1356 = vmax.f32 %v1023, %v1220
        %v1357 = vmax.f32 %v1024, %v1261
        %v1358 = vmax.f32 %v1025, %v1263
        %v1359 = vmax.f32 %v1026, %v1304
        %v1360 = vmax.f32 %v1027, %v1306
        %v1361 = vmax.f32 %v1028, %v1347
        %v1362 = vmax.f32 %v1029, %v1349
        %v1363 = vmax.f32 %v1030, %v1222
        %v1364 = vmax.f32 %v1031, %v1224
        %v1365 = vmax.f32 %v1032, %v1265
        %v1366 = vmax.f32 %v1033, %v1267
        %v1367 = vmax.f32 %v1034, %v1308
        %v1368 = vmax.f32 %v1035, %v1310
        %v1369 = vmax.f32 %v1036, %v1351
        %v1370 = vmax.f32 %v1037, %v1353
        %s1371 = scalar_lea.vmem %s355, 576 [#allocation2]
        %v1372 = vld [vmem:[%s1371] sm:$0xff]
        %v1373 = vld [vmem:[%s1371 + $0x8] sm:$0xff]
        %v1374 = vld [vmem:[%s1371 + $0x10] sm:$0xff]
        %v1375 = vld [vmem:[%s1371 + $0x18] sm:$0xff]
        %v1376 = vld [vmem:[%s1371 + $0x20] sm:$0xff]
        %v1377 = vld [vmem:[%s1371 + $0x28] sm:$0xff]
        %v1378 = vld [vmem:[%s1371 + $0x30] sm:$0xff]
        %v1379 = vld [vmem:[%s1371 + $0x38] sm:$0xff]
        %v1380 = vld [vmem:[%s1371 + $0x40] sm:$0xff]
        %v1381 = vld [vmem:[%s1371 + $0x48] sm:$0xff]
        %v1382 = vld [vmem:[%s1371 + $0x50] sm:$0xff]
        %v1383 = vld [vmem:[%s1371 + $0x58] sm:$0xff]
        %v1384 = vld [vmem:[%s1371 + $0x60] sm:$0xff]
        %v1385 = vld [vmem:[%s1371 + $0x68] sm:$0xff]
        %v1386 = vld [vmem:[%s1371 + $0x70] sm:$0xff]
        %v1387 = vld [vmem:[%s1371 + $0x78] sm:$0xff]
        %v1388 = vld [vmem:[%s1371 + $0x80] sm:$0xff]
        %v1389 = vld [vmem:[%s1371 + $0x88] sm:$0xff]
        %v1390 = vld [vmem:[%s1371 + $0x90] sm:$0xff]
        %v1391 = vld [vmem:[%s1371 + $0x98] sm:$0xff]
        %v1392 = vld [vmem:[%s1371 + $0xa0] sm:$0xff]
        %v1393 = vld [vmem:[%s1371 + $0xa8] sm:$0xff]
        %v1394 = vld [vmem:[%s1371 + $0xb0] sm:$0xff]
        %v1395 = vld [vmem:[%s1371 + $0xb8] sm:$0xff]
        %v1420 = vunpack.c.l.b16 %v1372
        %v1421 = vunpack.c.h.b16 %v1372
        %v1422 = vunpack.c.l.b16 %v1373
        %v1423 = vunpack.c.h.b16 %v1373
        %v1424 = vunpack.c.l.b16 %v1374
        %v1425 = vunpack.c.h.b16 %v1374
        %v1426 = vunpack.c.l.b16 %v1375
        %v1427 = vunpack.c.h.b16 %v1375
        %v1428 = vunpack.c.l.b16 %v1376
        %v1429 = vunpack.c.h.b16 %v1376
        %v1430 = vunpack.c.l.b16 %v1377
        %v1431 = vunpack.c.h.b16 %v1377
        %v1432 = vunpack.c.l.b16 %v1378
        %v1433 = vunpack.c.h.b16 %v1378
        %v1434 = vunpack.c.l.b16 %v1379
        %v1435 = vunpack.c.h.b16 %v1379
        %v1436 = vunpack.c.l.b16 %v1380
        %v1437 = vunpack.c.h.b16 %v1380
        %v1438 = vunpack.c.l.b16 %v1381
        %v1439 = vunpack.c.h.b16 %v1381
        %v1440 = vunpack.c.l.b16 %v1382
        %v1441 = vunpack.c.h.b16 %v1382
        %v1442 = vunpack.c.l.b16 %v1383
        %v1443 = vunpack.c.h.b16 %v1383
        %v1444 = vunpack.c.l.b16 %v1384
        %v1445 = vunpack.c.h.b16 %v1384
        %v1446 = vunpack.c.l.b16 %v1385
        %v1447 = vunpack.c.h.b16 %v1385
        %v1448 = vunpack.c.l.b16 %v1386
        %v1449 = vunpack.c.h.b16 %v1386
        %v1450 = vunpack.c.l.b16 %v1387
        %v1451 = vunpack.c.h.b16 %v1387
        %v1452 = vunpack.c.l.b16 %v1388
        %v1453 = vunpack.c.h.b16 %v1388
        %v1454 = vunpack.c.l.b16 %v1389
        %v1455 = vunpack.c.h.b16 %v1389
        %v1456 = vunpack.c.l.b16 %v1390
        %v1457 = vunpack.c.h.b16 %v1390
        %v1458 = vunpack.c.l.b16 %v1391
        %v1459 = vunpack.c.h.b16 %v1391
        %v1460 = vunpack.c.l.b16 %v1392
        %v1461 = vunpack.c.h.b16 %v1392
        %v1462 = vunpack.c.l.b16 %v1393
        %v1463 = vunpack.c.h.b16 %v1393
        %v1464 = vunpack.c.l.b16 %v1394
        %v1465 = vunpack.c.h.b16 %v1394
        %v1466 = vunpack.c.l.b16 %v1395
        %v1467 = vunpack.c.h.b16 %v1395
        %v1468 = vpack.c.b16 %v1428, %v1420
        %v1469 = vpack.c.b16 %v1429, %v1421
        %v1470 = vpack.c.b16 %v1430, %v1422
        %v1471 = vpack.c.b16 %v1431, %v1423
        %v1472 = vpack.c.b16 %v1432, %v1424
        %v1473 = vpack.c.b16 %v1433, %v1425
        %v1474 = vpack.c.b16 %v1434, %v1426
        %v1475 = vpack.c.b16 %v1435, %v1427
        %v1476 = vpack.c.b16 %v1444, %v1436
        %v1477 = vpack.c.b16 %v1445, %v1437
        %v1478 = vpack.c.b16 %v1446, %v1438
        %v1479 = vpack.c.b16 %v1447, %v1439
        %v1480 = vpack.c.b16 %v1448, %v1440
        %v1481 = vpack.c.b16 %v1449, %v1441
        %v1482 = vpack.c.b16 %v1450, %v1442
        %v1483 = vpack.c.b16 %v1451, %v1443
        %v1484 = vpack.c.b16 %v1460, %v1452
        %v1485 = vpack.c.b16 %v1461, %v1453
        %v1486 = vpack.c.b16 %v1462, %v1454
        %v1487 = vpack.c.b16 %v1463, %v1455
        %v1488 = vpack.c.b16 %v1464, %v1456
        %v1489 = vpack.c.b16 %v1465, %v1457
        %v1490 = vpack.c.b16 %v1466, %v1458
        %v1491 = vpack.c.b16 %v1467, %v1459
        %1516 = vmatprep.subr.bf16.mxu0 0
        %1517 = vmatpush1.bf16.msra.mxu0 0
        %1518 = vmatprep.subr.bf16.mxu0 0
        %1519 = vmatpush1.bf16.msra.mxu0 0
        %1520 = vmatprep.subr.bf16.mxu0 0
        %1521 = vmatpush1.bf16.msra.mxu0 0
        %1522 = vmatprep.subr.bf16.mxu0 0
        %1523 = vmatpush1.bf16.msra.mxu0 0
        %1524 = vmatprep.subr.bf16.mxu0 0
        %1525 = vmatpush1.bf16.msra.mxu0 0
        %1526 = vmatprep.subr.bf16.mxu0 %v1485
        %1527 = vmatpush1.bf16.msra.mxu0 %v1484
        %1528 = vmatprep.subr.bf16.mxu0 %v1477
        %1529 = vmatpush1.bf16.msra.mxu0 %v1476
        %1530 = vmatprep.subr.bf16.mxu0 %v1469
        %1531 = vmatpush1.bf16.msra.mxu0 %v1468
        %1532 = vmatprep.subr.bf16.mxu0 0
        %1533 = vmatpush2.bf16.msra.mxu0 0
        %1534 = vmatprep.subr.bf16.mxu0 0
        %1535 = vmatpush2.bf16.msra.mxu0 0
        %1536 = vmatprep.subr.bf16.mxu0 0
        %1537 = vmatpush2.bf16.msra.mxu0 0
        %1538 = vmatprep.subr.bf16.mxu0 0
        %1539 = vmatpush2.bf16.msra.mxu0 0
        %1540 = vmatprep.subr.bf16.mxu0 0
        %1541 = vmatpush2.bf16.msra.mxu0 0
        %1542 = vmatprep.subr.bf16.mxu0 0
        %1543 = vmatpush2.bf16.msra.mxu0 0
        %1544 = vmatprep.subr.bf16.mxu0 0
        %1545 = vmatpush2.bf16.msra.mxu0 0
        %1546 = vmatprep.subr.bf16.mxu0 0
        %1547 = vmatpush2.bf16.msra.mxu0 0
        %1548 = vmatprep.mubr.bf16.mxu0 0
        %1549 = vmatmul.mubr.bf16.gmra.mxu0 %v531
        %v1550 = vpop.f32.mrf.mxu0
        %v1551 = vadd.f32 0.0, %v1550
        %v1552 = vpop.f32.mrf.mxu0
        %v1553 = vadd.f32 0.0, %v1552
        %v1554 = vpop.f32.mrf.mxu0
        %v1555 = vadd.f32 0.0, %v1554
        %v1556 = vpop.f32.mrf.mxu0
        %v1557 = vadd.f32 0.0, %v1556
        %1558 = vdwg.mxu0
        %1559 = vmatprep.subr.bf16.mxu0 0
        %1560 = vmatpush1.bf16.msra.mxu0 0
        %1561 = vmatprep.subr.bf16.mxu0 0
        %1562 = vmatpush1.bf16.msra.mxu0 0
        %1563 = vmatprep.subr.bf16.mxu0 0
        %1564 = vmatpush1.bf16.msra.mxu0 0
        %1565 = vmatprep.subr.bf16.mxu0 0
        %1566 = vmatpush1.bf16.msra.mxu0 0
        %1567 = vmatprep.subr.bf16.mxu0 0
        %1568 = vmatpush1.bf16.msra.mxu0 0
        %1569 = vmatprep.subr.bf16.mxu0 %v1487
        %1570 = vmatpush1.bf16.msra.mxu0 %v1486
        %1571 = vmatprep.subr.bf16.mxu0 %v1479
        %1572 = vmatpush1.bf16.msra.mxu0 %v1478
        %1573 = vmatprep.subr.bf16.mxu0 %v1471
        %1574 = vmatpush1.bf16.msra.mxu0 %v1470
        %1575 = vmatprep.subr.bf16.mxu0 0
        %1576 = vmatpush2.bf16.msra.mxu0 0
        %1577 = vmatprep.subr.bf16.mxu0 0
        %1578 = vmatpush2.bf16.msra.mxu0 0
        %1579 = vmatprep.subr.bf16.mxu0 0
        %1580 = vmatpush2.bf16.msra.mxu0 0
        %1581 = vmatprep.subr.bf16.mxu0 0
        %1582 = vmatpush2.bf16.msra.mxu0 0
        %1583 = vmatprep.subr.bf16.mxu0 0
        %1584 = vmatpush2.bf16.msra.mxu0 0
        %1585 = vmatprep.subr.bf16.mxu0 0
        %1586 = vmatpush2.bf16.msra.mxu0 0
        %1587 = vmatprep.subr.bf16.mxu0 0
        %1588 = vmatpush2.bf16.msra.mxu0 0
        %1589 = vmatprep.subr.bf16.mxu0 0
        %1590 = vmatpush2.bf16.msra.mxu0 0
        %1591 = vmatprep.mubr.bf16.mxu0 0
        %1592 = vmatmul.mubr.bf16.gmra.mxu0 %v531
        %v1593 = vpop.f32.mrf.mxu0
        %v1594 = vadd.f32 0.0, %v1593
        %v1595 = vpop.f32.mrf.mxu0
        %v1596 = vadd.f32 0.0, %v1595
        %v1597 = vpop.f32.mrf.mxu0
        %v1598 = vadd.f32 0.0, %v1597
        %v1599 = vpop.f32.mrf.mxu0
        %v1600 = vadd.f32 0.0, %v1599
        %1601 = vdwg.mxu0
        %1602 = vmatprep.subr.bf16.mxu0 0
        %1603 = vmatpush1.bf16.msra.mxu0 0
        %1604 = vmatprep.subr.bf16.mxu0 0
        %1605 = vmatpush1.bf16.msra.mxu0 0
        %1606 = vmatprep.subr.bf16.mxu0 0
        %1607 = vmatpush1.bf16.msra.mxu0 0
        %1608 = vmatprep.subr.bf16.mxu0 0
        %1609 = vmatpush1.bf16.msra.mxu0 0
        %1610 = vmatprep.subr.bf16.mxu0 0
        %1611 = vmatpush1.bf16.msra.mxu0 0
        %1612 = vmatprep.subr.bf16.mxu0 %v1489
        %1613 = vmatpush1.bf16.msra.mxu0 %v1488
        %1614 = vmatprep.subr.bf16.mxu0 %v1481
        %1615 = vmatpush1.bf16.msra.mxu0 %v1480
        %1616 = vmatprep.subr.bf16.mxu0 %v1473
        %1617 = vmatpush1.bf16.msra.mxu0 %v1472
        %1618 = vmatprep.subr.bf16.mxu0 0
        %1619 = vmatpush2.bf16.msra.mxu0 0
        %1620 = vmatprep.subr.bf16.mxu0 0
        %1621 = vmatpush2.bf16.msra.mxu0 0
        %1622 = vmatprep.subr.bf16.mxu0 0
        %1623 = vmatpush2.bf16.msra.mxu0 0
        %1624 = vmatprep.subr.bf16.mxu0 0
        %1625 = vmatpush2.bf16.msra.mxu0 0
        %1626 = vmatprep.subr.bf16.mxu0 0
        %1627 = vmatpush2.bf16.msra.mxu0 0
        %1628 = vmatprep.subr.bf16.mxu0 0
        %1629 = vmatpush2.bf16.msra.mxu0 0
        %1630 = vmatprep.subr.bf16.mxu0 0
        %1631 = vmatpush2.bf16.msra.mxu0 0
        %1632 = vmatprep.subr.bf16.mxu0 0
        %1633 = vmatpush2.bf16.msra.mxu0 0
        %1634 = vmatprep.mubr.bf16.mxu0 0
        %1635 = vmatmul.mubr.bf16.gmra.mxu0 %v531
        %v1636 = vpop.f32.mrf.mxu0
        %v1637 = vadd.f32 0.0, %v1636
        %v1638 = vpop.f32.mrf.mxu0
        %v1639 = vadd.f32 0.0, %v1638
        %v1640 = vpop.f32.mrf.mxu0
        %v1641 = vadd.f32 0.0, %v1640
        %v1642 = vpop.f32.mrf.mxu0
        %v1643 = vadd.f32 0.0, %v1642
        %1644 = vdwg.mxu0
        %1645 = vmatprep.subr.bf16.mxu0 0
        %1646 = vmatpush1.bf16.msra.mxu0 0
        %1647 = vmatprep.subr.bf16.mxu0 0
        %1648 = vmatpush1.bf16.msra.mxu0 0
        %1649 = vmatprep.subr.bf16.mxu0 0
        %1650 = vmatpush1.bf16.msra.mxu0 0
        %1651 = vmatprep.subr.bf16.mxu0 0
        %1652 = vmatpush1.bf16.msra.mxu0 0
        %1653 = vmatprep.subr.bf16.mxu0 0
        %1654 = vmatpush1.bf16.msra.mxu0 0
        %1655 = vmatprep.subr.bf16.mxu0 %v1491
        %1656 = vmatpush1.bf16.msra.mxu0 %v1490
        %1657 = vmatprep.subr.bf16.mxu0 %v1483
        %1658 = vmatpush1.bf16.msra.mxu0 %v1482
        %1659 = vmatprep.subr.bf16.mxu0 %v1475
        %1660 = vmatpush1.bf16.msra.mxu0 %v1474
        %1661 = vmatprep.subr.bf16.mxu0 0
        %1662 = vmatpush2.bf16.msra.mxu0 0
        %1663 = vmatprep.subr.bf16.mxu0 0
        %1664 = vmatpush2.bf16.msra.mxu0 0
        %1665 = vmatprep.subr.bf16.mxu0 0
        %1666 = vmatpush2.bf16.msra.mxu0 0
        %1667 = vmatprep.subr.bf16.mxu0 0
        %1668 = vmatpush2.bf16.msra.mxu0 0
        %1669 = vmatprep.subr.bf16.mxu0 0
        %1670 = vmatpush2.bf16.msra.mxu0 0
        %1671 = vmatprep.subr.bf16.mxu0 0
        %1672 = vmatpush2.bf16.msra.mxu0 0
        %1673 = vmatprep.subr.bf16.mxu0 0
        %1674 = vmatpush2.bf16.msra.mxu0 0
        %1675 = vmatprep.subr.bf16.mxu0 0
        %1676 = vmatpush2.bf16.msra.mxu0 0
        %1677 = vmatprep.mubr.bf16.mxu0 0
        %1678 = vmatmul.mubr.bf16.gmra.mxu0 %v531
        %v1679 = vpop.f32.mrf.mxu0
        %v1680 = vadd.f32 0.0, %v1679
        %v1681 = vpop.f32.mrf.mxu0
        %v1682 = vadd.f32 0.0, %v1681
        %v1683 = vpop.f32.mrf.mxu0
        %v1684 = vadd.f32 0.0, %v1683
        %v1685 = vpop.f32.mrf.mxu0
        %v1686 = vadd.f32 0.0, %v1685
        %1687 = vdwg.mxu0
        %v1688 = vmax.f32 %v1355, %v1551
        %v1689 = vmax.f32 %v1356, %v1553
        %v1690 = vmax.f32 %v1357, %v1594
        %v1691 = vmax.f32 %v1358, %v1596
        %v1692 = vmax.f32 %v1359, %v1637
        %v1693 = vmax.f32 %v1360, %v1639
        %v1694 = vmax.f32 %v1361, %v1680
        %v1695 = vmax.f32 %v1362, %v1682
        %v1696 = vmax.f32 %v1363, %v1555
        %v1697 = vmax.f32 %v1364, %v1557
        %v1698 = vmax.f32 %v1365, %v1598
        %v1699 = vmax.f32 %v1366, %v1600
        %v1700 = vmax.f32 %v1367, %v1641
        %v1701 = vmax.f32 %v1368, %v1643
        %v1702 = vmax.f32 %v1369, %v1684
        %v1703 = vmax.f32 %v1370, %v1686
        %v1704 = vld [vmem:[%s2] sm:$0xff]
        %v1705 = vld [vmem:[%s2 + $0x8] sm:$0xff]
        %1707 = vset.pattern.permute.xlu0 0
        %1708 = vperm.xlu0 %1707, %v1704
        %v1709 = vpop.permute.xlu0 %1708
        %1712 = vset.pattern.permute.xlu0 0
        %1713 = vperm.xlu0 %1712, %v1705
        %v1714 = vpop.permute.xlu0 %1713
        %v1716 = vadd.f32 %v1688, %v1709
        %v1717 = vadd.f32 %v1689, %v1709
        %v1718 = vadd.f32 %v1690, %v1709
        %v1719 = vadd.f32 %v1691, %v1709
        %v1720 = vadd.f32 %v1692, %v1709
        %v1721 = vadd.f32 %v1693, %v1709
        %v1722 = vadd.f32 %v1694, %v1709
        %v1723 = vadd.f32 %v1695, %v1709
        %v1724 = vadd.f32 %v1696, %v1714
        %v1725 = vadd.f32 %v1697, %v1714
        %v1726 = vadd.f32 %v1698, %v1714
        %v1727 = vadd.f32 %v1699, %v1714
        %v1728 = vadd.f32 %v1700, %v1714
        %v1729 = vadd.f32 %v1701, %v1714
        %v1730 = vadd.f32 %v1702, %v1714
        %v1731 = vadd.f32 %v1703, %v1714
        %v1732 = vmul.f32 %v1716, 0.2
        %v1733 = vmul.f32 %v1717, 0.2
        %v1734 = vmul.f32 %v1718, 0.2
        %v1735 = vmul.f32 %v1719, 0.2
        %v1736 = vmul.f32 %v1720, 0.2
        %v1737 = vmul.f32 %v1721, 0.2
        %v1738 = vmul.f32 %v1722, 0.2
        %v1739 = vmul.f32 %v1723, 0.2
        %v1740 = vmul.f32 %v1724, 0.2
        %v1741 = vmul.f32 %v1725, 0.2
        %v1742 = vmul.f32 %v1726, 0.2
        %v1743 = vmul.f32 %v1727, 0.2
        %v1744 = vmul.f32 %v1728, 0.2
        %v1745 = vmul.f32 %v1729, 0.2
        %v1746 = vmul.f32 %v1730, 0.2
        %v1747 = vmul.f32 %v1731, 0.2
        %v1748 = vmax.f32 %v1716, %v1732
        %v1749 = vmax.f32 %v1717, %v1733
        %v1750 = vmax.f32 %v1718, %v1734
        %v1751 = vmax.f32 %v1719, %v1735
        %v1752 = vmax.f32 %v1720, %v1736
        %v1753 = vmax.f32 %v1721, %v1737
        %v1754 = vmax.f32 %v1722, %v1738
        %v1755 = vmax.f32 %v1723, %v1739
        %v1756 = vmax.f32 %v1724, %v1740
        %v1757 = vmax.f32 %v1725, %v1741
        %v1758 = vmax.f32 %v1726, %v1742
        %v1759 = vmax.f32 %v1727, %v1743
        %v1760 = vmax.f32 %v1728, %v1744
        %v1761 = vmax.f32 %v1729, %v1745
        %v1762 = vmax.f32 %v1730, %v1746
        %v1763 = vmax.f32 %v1731, %v1747
        %v1764 = vpack.c.bf16 %v1756, %v1748
        %v1765 = vpack.c.bf16 %v1757, %v1749
        %v1766 = vpack.c.bf16 %v1758, %v1750
        %v1767 = vpack.c.bf16 %v1759, %v1751
        %v1768 = vpack.c.bf16 %v1760, %v1752
        %v1769 = vpack.c.bf16 %v1761, %v1753
        %v1770 = vpack.c.bf16 %v1762, %v1754
        %v1771 = vpack.c.bf16 %v1763, %v1755
        %v1780 = vunpack.c.l.b16 %v1764
        %v1781 = vunpack.c.l.b16 %v1765
        %v1782 = vunpack.c.l.b16 %v1766
        %v1783 = vunpack.c.l.b16 %v1767
        %v1784 = vunpack.c.l.b16 %v1768
        %v1785 = vunpack.c.l.b16 %v1769
        %v1786 = vunpack.c.l.b16 %v1770
        %v1787 = vunpack.c.l.b16 %v1771
        %v1788 = vunpack.c.h.b16 %v1764
        %v1789 = vunpack.c.h.b16 %v1765
        %v1790 = vunpack.c.h.b16 %v1766
        %v1791 = vunpack.c.h.b16 %v1767
        %v1792 = vunpack.c.h.b16 %v1768
        %v1793 = vunpack.c.h.b16 %v1769
        %v1794 = vunpack.c.h.b16 %v1770
        %v1795 = vunpack.c.h.b16 %v1771
        %v1796 = vpack.c.b16 %v1781, %v1780
        %v1797 = vpack.c.b16 %v1783, %v1782
        %v1798 = vpack.c.b16 %v1785, %v1784
        %v1799 = vpack.c.b16 %v1787, %v1786
        %v1800 = vpack.c.b16 %v1789, %v1788
        %v1801 = vpack.c.b16 %v1791, %v1790
        %v1802 = vpack.c.b16 %v1793, %v1792
        %v1803 = vpack.c.b16 %v1795, %v1794
        %1812 = vst [vmem:[%s374] sm:$0xff] %v1796
        %1813 = vst [vmem:[%s374 + $0x8] sm:$0xff] %v1797
        %1814 = vst [vmem:[%s374 + $0x10] sm:$0xff] %v1798
        %1815 = vst [vmem:[%s374 + $0x18] sm:$0xff] %v1799
        %1816 = vst [vmem:[%s374 + $0x20] sm:$0xff] %v1800
        %1817 = vst [vmem:[%s374 + $0x28] sm:$0xff] %v1801
        %1818 = vst [vmem:[%s374 + $0x30] sm:$0xff] %v1802
        %1819 = vst [vmem:[%s374 + $0x38] sm:$0xff] %v1803
        %s1820 = sand.u32 %s90, 1
        %s1821 = sand.u32 %s90, 1
        %s1822 = smul.addr %s1821, 64
        %s1823 = scalar_lea.vmem [#allocation3], %s1822
        // Predicated region
        $region56: #{net_forward.3} parent=50 // pred_check
          %p1824 = pneg %p100
        $region57: #{net_forward.3} parent=50 // pred_check_branch
          %1826 = sbr.rel (%p1824) target = $region59
        $region58: #{net_forward.3} parent=50 // pred_region
          %s1827 = smul.u32 8, %s14
          %s1828 = smul.addr %s1827, 4
          %s1829 = scalar_lea.vmem %s3, %s1828
          // Predicated region
          $region60: #{net_forward.3} parent=58 // pred_check
            _
          $region61: #{net_forward.3} parent=58 // pred_check_branch
            %1831 = sbr.rel (0) target = $region63
          $region62: #{net_forward.3} parent=58 // pred_region
            // Predicated region
            $region64: #{net_forward.3} parent=62 // pred_check
              _
            $region65: #{net_forward.3} parent=62 // pred_check_branch
              %1833 = sbr.rel (0) target = $region67
            $region66: #{net_forward.3} parent=62 // pred_region
              loop: start=0, step=1, limit=1
              $region68: #{net_forward.3} parent=66 // loop_pre_header
                _
              $region69: #{net_forward.3} parent=66 // loop_header
                %s1835 = sphi 0, %s1839
                %p1836 = scmp.ge.s32.totalorder %s1835, 1
                %s1840 = sphi %s1823, %s1823
                %s1841 = sphi %s1829, %s1829
              $region70: #{net_forward.3} parent=66 // loop_header_branch
                %1838 = sbr.rel (%p1836) target = $region74
              $region71: #{net_forward.3} parent=66 // loop_body
                %v1842 = vld [vmem:[%s1840] sm:$0xff]
                %1843 = vst [vmem:[%s1841] sm:$0xff] %v1842
                %v1844 = vld [vmem:[%s1840 + $0x8] sm:$0xff]
                %1845 = vst [vmem:[%s1841 + $0x8] sm:$0xff] %v1844
                %v1846 = vld [vmem:[%s1840 + $0x10] sm:$0xff]
                %1847 = vst [vmem:[%s1841 + $0x10] sm:$0xff] %v1846
                %v1848 = vld [vmem:[%s1840 + $0x18] sm:$0xff]
                %1849 = vst [vmem:[%s1841 + $0x18] sm:$0xff] %v1848
                %v1850 = vld [vmem:[%s1840 + $0x20] sm:$0xff]
                %1851 = vst [vmem:[%s1841 + $0x40] sm:$0xff] %v1850
                %v1852 = vld [vmem:[%s1840 + $0x28] sm:$0xff]
                %1853 = vst [vmem:[%s1841 + $0x48] sm:$0xff] %v1852
                %v1854 = vld [vmem:[%s1840 + $0x30] sm:$0xff]
                %1855 = vst [vmem:[%s1841 + $0x50] sm:$0xff] %v1854
                %v1856 = vld [vmem:[%s1840 + $0x38] sm:$0xff]
                %1857 = vst [vmem:[%s1841 + $0x58] sm:$0xff] %v1856
              $region72: #{net_forward.3} parent=66 // loop_footer
                %s1839 = sadd.s32 1, %s1835
              $region73: #{net_forward.3} parent=66 // loop_footer_branch
                %1834 = sbr.rel target = $region69
              $region74: #{net_forward.3} parent=66 // loop_exit
                _
            $region67: #{net_forward.3} parent=62 // pred_fallthru
              _
            // Predicated region
            $region75: #{net_forward.3} parent=62 // pred_check
              _
            $region76: #{net_forward.3} parent=62 // pred_check_branch
              %1859 = sbr.rel target = $region78
            $region77: #{net_forward.3} parent=62 // pred_region
              _
            $region78: #{net_forward.3} parent=62 // pred_fallthru
              _
          $region63: #{net_forward.3} parent=58 // pred_fallthru
            _
          %1860 = vnop
        $region59: #{net_forward.3} parent=50 // pred_fallthru
          _
      $region51: #{net_forward.3} parent=5 // pred_fallthru
        _
      %p1861 = scmp.le.s32.totalorder 2, %s9
      // Predicated region
      $region79: #{net_forward.3} parent=5 // pred_check
        %p1862 = pneg %p1861
      $region80: #{net_forward.3} parent=5 // pred_check_branch
        %1864 = sbr.rel (%p1862) target = $region82
      $region81: #{net_forward.3} parent=5 // pred_region
        %s1865 = ssub.s32 %s9, 2
        // Predicated region
        $region83: #{net_forward.3} parent=81 // pred_check
          %p1866 = pneg %p106
        $region84: #{net_forward.3} parent=81 // pred_check_branch
          %1868 = sbr.rel (%p1866) target = $region86
        $region85: #{net_forward.3} parent=81 // pred_region
          %s1869 = sand.u32 %s91, 1
          %s1870 = sand.u32 %s91, 1
          %s1871 = smul.addr %s1870, 64
          %s1872 = scalar_lea.vmem [#allocation3], %s1871
        $region86: #{net_forward.3} parent=81 // pred_fallthru
          _
      $region82: #{net_forward.3} parent=5 // pred_fallthru
        _
    $region6: #{net_forward.3} parent=1 // loop_footer
      %s13 = sadd.s32 1, %s9
    $region7: #{net_forward.3} parent=1 // loop_footer_branch
      %8 = sbr.rel target = $region3
    $region8: #{net_forward.3} parent=1 // loop_exit
      _

// kernel: net_forward.4
$region0: #{net_forward.4}
  #allocation0 [shape = 'u32[]', space=smem, size = 0x4, offset = 0x4, fixed_abs, tag = 'smem constant byte address 0x4 - core index']
  #allocation1 [shape = 'u32[144,128]{1,0:T(1,128)}', space=vmem, size = 0x12000, scoped, tag = 'internal scratch']
  %s0 = inlined_call_operand.vmem [shape: bf16[4,256,128], index: 0, kind: input, shape index: {}]
  %s1 = inlined_call_operand.vmem [shape: bf16[32,256], index: 1, kind: input, shape index: {}]
  %s2 = inlined_call_operand.vmem [shape: f32[32,1], index: 2, kind: input, shape index: {}]
  %s3 = inlined_call_operand.vmem [shape: bf16[32,128], index: 3, kind: output, shape index: {}]
  %s4 = sld [smem:[#allocation0]]
  $region22: #{net_forward.4} parent=0
    _
  %s6 = ssub.s32 1, %s4
  %s7 = scalar_select 0, %s6, %s4
  // Predicated region
  $region2: #{net_forward.4} parent=0 // pred_check
    _
  $region3: #{net_forward.4} parent=0 // pred_check_branch
    %9 = sbr.rel (0) target = $region5
  $region4: #{net_forward.4} parent=0 // pred_region
    _
  $region5: #{net_forward.4} parent=0 // pred_fallthru
    _
  // Predicated region
  $region6: #{net_forward.4} parent=0 // pred_check
    _
  $region7: #{net_forward.4} parent=0 // pred_check_branch
    %11 = sbr.rel (0) target = $region9
  $region8: #{net_forward.4} parent=0 // pred_region
    _
  $region9: #{net_forward.4} parent=0 // pred_fallthru
    _
  // Predicated region
  $region10: #{net_forward.4} parent=0 // pred_check
    _
  $region11: #{net_forward.4} parent=0 // pred_check_branch
    %13 = sbr.rel (0) target = $region13
  $region12: #{net_forward.4} parent=0 // pred_region
    _
  $region13: #{net_forward.4} parent=0 // pred_fallthru
    _
  %v15 = vld [vmem:[%s1] sm:$0xff]
  %v16 = vld [vmem:[%s1 + $0x8] sm:$0xff]
  %v17 = vld [vmem:[%s1 + $0x10] sm:$0xff]
  %v18 = vld [vmem:[%s1 + $0x18] sm:$0xff]
  %v19 = vld [vmem:[%s0] sm:$0xf]
  %v20 = vld [vmem:[%s0 + $0x4] sm:$0xf]
  %v21 = vld [vmem:[%s0 + $0x8] sm:$0xf]
  %v22 = vld [vmem:[%s0 + $0xc] sm:$0xf]
  %v23 = vld [vmem:[%s0 + $0x10] sm:$0xf]
  %v24 = vld [vmem:[%s0 + $0x14] sm:$0xf]
  %v25 = vld [vmem:[%s0 + $0x18] sm:$0xf]
  %v26 = vld [vmem:[%s0 + $0x1c] sm:$0xf]
  %v27 = vld [vmem:[%s0 + $0x20] sm:$0xf]
  %v28 = vld [vmem:[%s0 + $0x24] sm:$0xf]
  %v29 = vld [vmem:[%s0 + $0x28] sm:$0xf]
  %v30 = vld [vmem:[%s0 + $0x2c] sm:$0xf]
  %v31 = vld [vmem:[%s0 + $0x30] sm:$0xf]
  %v32 = vld [vmem:[%s0 + $0x34] sm:$0xf]
  %v33 = vld [vmem:[%s0 + $0x38] sm:$0xf]
  %v34 = vld [vmem:[%s0 + $0x3c] sm:$0xf]
  %v35 = vld [vmem:[%s0 + $0x40] sm:$0xf]
  %v36 = vld [vmem:[%s0 + $0x44] sm:$0xf]
  %v37 = vld [vmem:[%s0 + $0x48] sm:$0xf]
  %v38 = vld [vmem:[%s0 + $0x4c] sm:$0xf]
  %v39 = vld [vmem:[%s0 + $0x50] sm:$0xf]
  %v40 = vld [vmem:[%s0 + $0x54] sm:$0xf]
  %v41 = vld [vmem:[%s0 + $0x58] sm:$0xf]
  %v42 = vld [vmem:[%s0 + $0x5c] sm:$0xf]
  %v43 = vld [vmem:[%s0 + $0x60] sm:$0xf]
  %v44 = vld [vmem:[%s0 + $0x64] sm:$0xf]
  %v45 = vld [vmem:[%s0 + $0x68] sm:$0xf]
  %v46 = vld [vmem:[%s0 + $0x6c] sm:$0xf]
  %v47 = vld [vmem:[%s0 + $0x70] sm:$0xf]
  %v48 = vld [vmem:[%s0 + $0x74] sm:$0xf]
  %v49 = vld [vmem:[%s0 + $0x78] sm:$0xf]
  %v50 = vld [vmem:[%s0 + $0x7c] sm:$0xf]
  %v55 = vunpack.c.l.b16 %v15
  %v56 = vunpack.c.h.b16 %v15
  %v57 = vunpack.c.l.b16 %v16
  %v58 = vunpack.c.h.b16 %v16
  %v59 = vunpack.c.l.b16 %v17
  %v60 = vunpack.c.h.b16 %v17
  %v61 = vunpack.c.l.b16 %v18
  %v62 = vunpack.c.h.b16 %v18
  %v63 = vpack.c.b16 %v57, %v55
  %v64 = vpack.c.b16 %v58, %v56
  %v65 = vpack.c.b16 %v61, %v59
  %v66 = vpack.c.b16 %v62, %v60
  %v103 = vunpack.c.l.b16 %v19
  %v104 = vunpack.c.l.b16 %v20
  %v105 = vunpack.c.l.b16 %v21
  %v106 = vunpack.c.l.b16 %v22
  %v107 = vunpack.c.l.b16 %v23
  %v108 = vunpack.c.l.b16 %v24
  %v109 = vunpack.c.l.b16 %v25
  %v110 = vunpack.c.l.b16 %v26
  %v111 = vunpack.c.l.b16 %v27
  %v112 = vunpack.c.l.b16 %v28
  %v113 = vunpack.c.l.b16 %v29
  %v114 = vunpack.c.l.b16 %v30
  %v115 = vunpack.c.l.b16 %v31
  %v116 = vunpack.c.l.b16 %v32
  %v117 = vunpack.c.l.b16 %v33
  %v118 = vunpack.c.l.b16 %v34
  %v119 = vunpack.c.l.b16 %v35
  %v120 = vunpack.c.l.b16 %v36
  %v121 = vunpack.c.l.b16 %v37
  %v122 = vunpack.c.l.b16 %v38
  %v123 = vunpack.c.l.b16 %v39
  %v124 = vunpack.c.l.b16 %v40
  %v125 = vunpack.c.l.b16 %v41
  %v126 = vunpack.c.l.b16 %v42
  %v127 = vunpack.c.l.b16 %v43
  %v128 = vunpack.c.l.b16 %v44
  %v129 = vunpack.c.l.b16 %v45
  %v130 = vunpack.c.l.b16 %v46
  %v131 = vunpack.c.l.b16 %v47
  %v132 = vunpack.c.l.b16 %v48
  %v133 = vunpack.c.l.b16 %v49
  %v134 = vunpack.c.l.b16 %v50
  %v135 = vpack.c.b16 %v104, %v103
  %v136 = vpack.c.b16 %v106, %v105
  %v137 = vpack.c.b16 %v108, %v107
  %v138 = vpack.c.b16 %v110, %v109
  %v139 = vpack.c.b16 %v112, %v111
  %v140 = vpack.c.b16 %v114, %v113
  %v141 = vpack.c.b16 %v116, %v115
  %v142 = vpack.c.b16 %v118, %v117
  %v143 = vpack.c.b16 %v120, %v119
  %v144 = vpack.c.b16 %v122, %v121
  %v145 = vpack.c.b16 %v124, %v123
  %v146 = vpack.c.b16 %v126, %v125
  %v147 = vpack.c.b16 %v128, %v127
  %v148 = vpack.c.b16 %v130, %v129
  %v149 = vpack.c.b16 %v132, %v131
  %v150 = vpack.c.b16 %v134, %v133
  %167 = vmatprep.subr.bf16.mxu0 0
  %168 = vmatpush1.bf16.msra.mxu0 %v142
  %169 = vmatprep.subr.bf16.mxu0 0
  %170 = vmatpush1.bf16.msra.mxu0 %v141
  %171 = vmatprep.subr.bf16.mxu0 0
  %172 = vmatpush1.bf16.msra.mxu0 %v140
  %173 = vmatprep.subr.bf16.mxu0 0
  %174 = vmatpush1.bf16.msra.mxu0 %v139
  %175 = vmatprep.subr.bf16.mxu0 0
  %176 = vmatpush1.bf16.msra.mxu0 %v138
  %177 = vmatprep.subr.bf16.mxu0 0
  %178 = vmatpush1.bf16.msra.mxu0 %v137
  %179 = vmatprep.subr.bf16.mxu0 0
  %180 = vmatpush1.bf16.msra.mxu0 %v136
  %181 = vmatprep.subr.bf16.mxu0 0
  %182 = vmatpush1.bf16.msra.mxu0 %v135
  %183 = vmatprep.subr.bf16.mxu0 0
  %184 = vmatpush2.bf16.msra.mxu0 %v150
  %185 = vmatprep.subr.bf16.mxu0 0
  %186 = vmatpush2.bf16.msra.mxu0 %v149
  %187 = vmatprep.subr.bf16.mxu0 0
  %188 = vmatpush2.bf16.msra.mxu0 %v148
  %189 = vmatprep.subr.bf16.mxu0 0
  %190 = vmatpush2.bf16.msra.mxu0 %v147
  %191 = vmatprep.subr.bf16.mxu0 0
  %192 = vmatpush2.bf16.msra.mxu0 %v146
  %193 = vmatprep.subr.bf16.mxu0 0
  %194 = vmatpush2.bf16.msra.mxu0 %v145
  %195 = vmatprep.subr.bf16.mxu0 0
  %196 = vmatpush2.bf16.msra.mxu0 %v144
  %197 = vmatprep.subr.bf16.mxu0 0
  %198 = vmatpush2.bf16.msra.mxu0 %v143
  %199 = vmatprep.mubr.bf16.mxu0 %v64
  %200 = vmatmul.mubr.bf16.gmra.mxu0 %v63
  %v201 = vpop.f32.mrf.mxu0
  %v202 = vadd.f32 0.0, %v201
  %v203 = vpop.f32.mrf.mxu0
  %v204 = vpop.f32.mrf.mxu0
  %v205 = vadd.f32 0.0, %v204
  %v206 = vpop.f32.mrf.mxu0
  %207 = vmatprep.mubr.bf16.mxu0 %v66
  %208 = vmatmul.mubr.bf16.gmra.mxu0 %v65
  %v209 = vpop.f32.mrf.mxu0
  %v210 = vadd.f32 0.0, %v209
  %v211 = vpop.f32.mrf.mxu0
  %v212 = vpop.f32.mrf.mxu0
  %v213 = vadd.f32 0.0, %v212
  %v214 = vpop.f32.mrf.mxu0
  %215 = vdwg.mxu0
  %s216 = scalar_lea.vmem %s0, 128
  %v217 = vld [vmem:[%s216] sm:$0xf]
  %v218 = vld [vmem:[%s216 + $0x4] sm:$0xf]
  %v219 = vld [vmem:[%s216 + $0x8] sm:$0xf]
  %v220 = vld [vmem:[%s216 + $0xc] sm:$0xf]
  %v221 = vld [vmem:[%s216 + $0x10] sm:$0xf]
  %v222 = vld [vmem:[%s216 + $0x14] sm:$0xf]
  %v223 = vld [vmem:[%s216 + $0x18] sm:$0xf]
  %v224 = vld [vmem:[%s216 + $0x1c] sm:$0xf]
  %v225 = vld [vmem:[%s216 + $0x20] sm:$0xf]
  %v226 = vld [vmem:[%s216 + $0x24] sm:$0xf]
  %v227 = vld [vmem:[%s216 + $0x28] sm:$0xf]
  %v228 = vld [vmem:[%s216 + $0x2c] sm:$0xf]
  %v229 = vld [vmem:[%s216 + $0x30] sm:$0xf]
  %v230 = vld [vmem:[%s216 + $0x34] sm:$0xf]
  %v231 = vld [vmem:[%s216 + $0x38] sm:$0xf]
  %v232 = vld [vmem:[%s216 + $0x3c] sm:$0xf]
  %v233 = vld [vmem:[%s216 + $0x40] sm:$0xf]
  %v234 = vld [vmem:[%s216 + $0x44] sm:$0xf]
  %v235 = vld [vmem:[%s216 + $0x48] sm:$0xf]
  %v236 = vld [vmem:[%s216 + $0x4c] sm:$0xf]
  %v237 = vld [vmem:[%s216 + $0x50] sm:$0xf]
  %v238 = vld [vmem:[%s216 + $0x54] sm:$0xf]
  %v239 = vld [vmem:[%s216 + $0x58] sm:$0xf]
  %v240 = vld [vmem:[%s216 + $0x5c] sm:$0xf]
  %v241 = vld [vmem:[%s216 + $0x60] sm:$0xf]
  %v242 = vld [vmem:[%s216 + $0x64] sm:$0xf]
  %v243 = vld [vmem:[%s216 + $0x68] sm:$0xf]
  %v244 = vld [vmem:[%s216 + $0x6c] sm:$0xf]
  %v245 = vld [vmem:[%s216 + $0x70] sm:$0xf]
  %v246 = vld [vmem:[%s216 + $0x74] sm:$0xf]
  %v247 = vld [vmem:[%s216 + $0x78] sm:$0xf]
  %v248 = vld [vmem:[%s216 + $0x7c] sm:$0xf]
  %v281 = vunpack.c.l.b16 %v217
  %v282 = vunpack.c.l.b16 %v218
  %v283 = vunpack.c.l.b16 %v219
  %v284 = vunpack.c.l.b16 %v220
  %v285 = vunpack.c.l.b16 %v221
  %v286 = vunpack.c.l.b16 %v222
  %v287 = vunpack.c.l.b16 %v223
  %v288 = vunpack.c.l.b16 %v224
  %v289 = vunpack.c.l.b16 %v225
  %v290 = vunpack.c.l.b16 %v226
  %v291 = vunpack.c.l.b16 %v227
  %v292 = vunpack.c.l.b16 %v228
  %v293 = vunpack.c.l.b16 %v229
  %v294 = vunpack.c.l.b16 %v230
  %v295 = vunpack.c.l.b16 %v231
  %v296 = vunpack.c.l.b16 %v232
  %v297 = vunpack.c.l.b16 %v233
  %v298 = vunpack.c.l.b16 %v234
  %v299 = vunpack.c.l.b16 %v235
  %v300 = vunpack.c.l.b16 %v236
  %v301 = vunpack.c.l.b16 %v237
  %v302 = vunpack.c.l.b16 %v238
  %v303 = vunpack.c.l.b16 %v239
  %v304 = vunpack.c.l.b16 %v240
  %v305 = vunpack.c.l.b16 %v241
  %v306 = vunpack.c.l.b16 %v242
  %v307 = vunpack.c.l.b16 %v243
  %v308 = vunpack.c.l.b16 %v244
  %v309 = vunpack.c.l.b16 %v245
  %v310 = vunpack.c.l.b16 %v246
  %v311 = vunpack.c.l.b16 %v247
  %v312 = vunpack.c.l.b16 %v248
  %v313 = vpack.c.b16 %v282, %v281
  %v314 = vpack.c.b16 %v284, %v283
  %v315 = vpack.c.b16 %v286, %v285
  %v316 = vpack.c.b16 %v288, %v287
  %v317 = vpack.c.b16 %v290, %v289
  %v318 = vpack.c.b16 %v292, %v291
  %v319 = vpack.c.b16 %v294, %v293
  %v320 = vpack.c.b16 %v296, %v295
  %v321 = vpack.c.b16 %v298, %v297
  %v322 = vpack.c.b16 %v300, %v299
  %v323 = vpack.c.b16 %v302, %v301
  %v324 = vpack.c.b16 %v304, %v303
  %v325 = vpack.c.b16 %v306, %v305
  %v326 = vpack.c.b16 %v308, %v307
  %v327 = vpack.c.b16 %v310, %v309
  %v328 = vpack.c.b16 %v312, %v311
  %345 = vmatprep.subr.bf16.mxu0 0
  %346 = vmatpush1.bf16.msra.mxu0 %v320
  %347 = vmatprep.subr.bf16.mxu0 0
  %348 = vmatpush1.bf16.msra.mxu0 %v319
  %349 = vmatprep.subr.bf16.mxu0 0
  %350 = vmatpush1.bf16.msra.mxu0 %v318
  %351 = vmatprep.subr.bf16.mxu0 0
  %352 = vmatpush1.bf16.msra.mxu0 %v317
  %353 = vmatprep.subr.bf16.mxu0 0
  %354 = vmatpush1.bf16.msra.mxu0 %v316
  %355 = vmatprep.subr.bf16.mxu0 0
  %356 = vmatpush1.bf16.msra.mxu0 %v315
  %357 = vmatprep.subr.bf16.mxu0 0
  %358 = vmatpush1.bf16.msra.mxu0 %v314
  %359 = vmatprep.subr.bf16.mxu0 0
  %360 = vmatpush1.bf16.msra.mxu0 %v313
  %361 = vmatprep.subr.bf16.mxu0 0
  %362 = vmatpush2.bf16.msra.mxu0 %v328
  %363 = vmatprep.subr.bf16.mxu0 0
  %364 = vmatpush2.bf16.msra.mxu0 %v327
  %365 = vmatprep.subr.bf16.mxu0 0
  %366 = vmatpush2.bf16.msra.mxu0 %v326
  %367 = vmatprep.subr.bf16.mxu0 0
  %368 = vmatpush2.bf16.msra.mxu0 %v325
  %369 = vmatprep.subr.bf16.mxu0 0
  %370 = vmatpush2.bf16.msra.mxu0 %v324
  %371 = vmatprep.subr.bf16.mxu0 0
  %372 = vmatpush2.bf16.msra.mxu0 %v323
  %373 = vmatprep.subr.bf16.mxu0 0
  %374 = vmatpush2.bf16.msra.mxu0 %v322
  %375 = vmatprep.subr.bf16.mxu0 0
  %376 = vmatpush2.bf16.msra.mxu0 %v321
  %377 = vmatprep.mubr.bf16.mxu0 %v64
  %378 = vmatmul.mubr.bf16.gmra.mxu0 %v63
  %v379 = vpop.f32.mrf.mxu0
  %v380 = vadd.f32 0.0, %v379
  %v381 = vpop.f32.mrf.mxu0
  %v382 = vpop.f32.mrf.mxu0
  %v383 = vadd.f32 0.0, %v382
  %v384 = vpop.f32.mrf.mxu0
  %385 = vmatprep.mubr.bf16.mxu0 %v66
  %386 = vmatmul.mubr.bf16.gmra.mxu0 %v65
  %v387 = vpop.f32.mrf.mxu0
  %v388 = vadd.f32 0.0, %v387
  %v389 = vpop.f32.mrf.mxu0
  %v390 = vpop.f32.mrf.mxu0
  %v391 = vadd.f32 0.0, %v390
  %v392 = vpop.f32.mrf.mxu0
  %393 = vdwg.mxu0
  %v394 = vmax.f32 %v202, %v380
  %v395 = vmax.f32 %v205, %v383
  %v396 = vmax.f32 %v210, %v388
  %v397 = vmax.f32 %v213, %v391
  %s398 = scalar_lea.vmem %s0, 256
  %v399 = vld [vmem:[%s398] sm:$0xf]
  %v400 = vld [vmem:[%s398 + $0x4] sm:$0xf]
  %v401 = vld [vmem:[%s398 + $0x8] sm:$0xf]
  %v402 = vld [vmem:[%s398 + $0xc] sm:$0xf]
  %v403 = vld [vmem:[%s398 + $0x10] sm:$0xf]
  %v404 = vld [vmem:[%s398 + $0x14] sm:$0xf]
  %v405 = vld [vmem:[%s398 + $0x18] sm:$0xf]
  %v406 = vld [vmem:[%s398 + $0x1c] sm:$0xf]
  %v407 = vld [vmem:[%s398 + $0x20] sm:$0xf]
  %v408 = vld [vmem:[%s398 + $0x24] sm:$0xf]
  %v409 = vld [vmem:[%s398 + $0x28] sm:$0xf]
  %v410 = vld [vmem:[%s398 + $0x2c] sm:$0xf]
  %v411 = vld [vmem:[%s398 + $0x30] sm:$0xf]
  %v412 = vld [vmem:[%s398 + $0x34] sm:$0xf]
  %v413 = vld [vmem:[%s398 + $0x38] sm:$0xf]
  %v414 = vld [vmem:[%s398 + $0x3c] sm:$0xf]
  %v415 = vld [vmem:[%s398 + $0x40] sm:$0xf]
  %v416 = vld [vmem:[%s398 + $0x44] sm:$0xf]
  %v417 = vld [vmem:[%s398 + $0x48] sm:$0xf]
  %v418 = vld [vmem:[%s398 + $0x4c] sm:$0xf]
  %v419 = vld [vmem:[%s398 + $0x50] sm:$0xf]
  %v420 = vld [vmem:[%s398 + $0x54] sm:$0xf]
  %v421 = vld [vmem:[%s398 + $0x58] sm:$0xf]
  %v422 = vld [vmem:[%s398 + $0x5c] sm:$0xf]
  %v423 = vld [vmem:[%s398 + $0x60] sm:$0xf]
  %v424 = vld [vmem:[%s398 + $0x64] sm:$0xf]
  %v425 = vld [vmem:[%s398 + $0x68] sm:$0xf]
  %v426 = vld [vmem:[%s398 + $0x6c] sm:$0xf]
  %v427 = vld [vmem:[%s398 + $0x70] sm:$0xf]
  %v428 = vld [vmem:[%s398 + $0x74] sm:$0xf]
  %v429 = vld [vmem:[%s398 + $0x78] sm:$0xf]
  %v430 = vld [vmem:[%s398 + $0x7c] sm:$0xf]
  %v463 = vunpack.c.l.b16 %v399
  %v464 = vunpack.c.l.b16 %v400
  %v465 = vunpack.c.l.b16 %v401
  %v466 = vunpack.c.l.b16 %v402
  %v467 = vunpack.c.l.b16 %v403
  %v468 = vunpack.c.l.b16 %v404
  %v469 = vunpack.c.l.b16 %v405
  %v470 = vunpack.c.l.b16 %v406
  %v471 = vunpack.c.l.b16 %v407
  %v472 = vunpack.c.l.b16 %v408
  %v473 = vunpack.c.l.b16 %v409
  %v474 = vunpack.c.l.b16 %v410
  %v475 = vunpack.c.l.b16 %v411
  %v476 = vunpack.c.l.b16 %v412
  %v477 = vunpack.c.l.b16 %v413
  %v478 = vunpack.c.l.b16 %v414
  %v479 = vunpack.c.l.b16 %v415
  %v480 = vunpack.c.l.b16 %v416
  %v481 = vunpack.c.l.b16 %v417
  %v482 = vunpack.c.l.b16 %v418
  %v483 = vunpack.c.l.b16 %v419
  %v484 = vunpack.c.l.b16 %v420
  %v485 = vunpack.c.l.b16 %v421
  %v486 = vunpack.c.l.b16 %v422
  %v487 = vunpack.c.l.b16 %v423
  %v488 = vunpack.c.l.b16 %v424
  %v489 = vunpack.c.l.b16 %v425
  %v490 = vunpack.c.l.b16 %v426
  %v491 = vunpack.c.l.b16 %v427
  %v492 = vunpack.c.l.b16 %v428
  %v493 = vunpack.c.l.b16 %v429
  %v494 = vunpack.c.l.b16 %v430
  %v495 = vpack.c.b16 %v464, %v463
  %v496 = vpack.c.b16 %v466, %v465
  %v497 = vpack.c.b16 %v468, %v467
  %v498 = vpack.c.b16 %v470, %v469
  %v499 = vpack.c.b16 %v472, %v471
  %v500 = vpack.c.b16 %v474, %v473
  %v501 = vpack.c.b16 %v476, %v475
  %v502 = vpack.c.b16 %v478, %v477
  %v503 = vpack.c.b16 %v480, %v479
  %v504 = vpack.c.b16 %v482, %v481
  %v505 = vpack.c.b16 %v484, %v483
  %v506 = vpack.c.b16 %v486, %v485
  %v507 = vpack.c.b16 %v488, %v487
  %v508 = vpack.c.b16 %v490, %v489
  %v509 = vpack.c.b16 %v492, %v491
  %v510 = vpack.c.b16 %v494, %v493
  %527 = vmatprep.subr.bf16.mxu0 0
  %528 = vmatpush1.bf16.msra.mxu0 %v502
  %529 = vmatprep.subr.bf16.mxu0 0
  %530 = vmatpush1.bf16.msra.mxu0 %v501
  %531 = vmatprep.subr.bf16.mxu0 0
  %532 = vmatpush1.bf16.msra.mxu0 %v500
  %533 = vmatprep.subr.bf16.mxu0 0
  %534 = vmatpush1.bf16.msra.mxu0 %v499
  %535 = vmatprep.subr.bf16.mxu0 0
  %536 = vmatpush1.bf16.msra.mxu0 %v498
  %537 = vmatprep.subr.bf16.mxu0 0
  %538 = vmatpush1.bf16.msra.mxu0 %v497
  %539 = vmatprep.subr.bf16.mxu0 0
  %540 = vmatpush1.bf16.msra.mxu0 %v496
  %541 = vmatprep.subr.bf16.mxu0 0
  %542 = vmatpush1.bf16.msra.mxu0 %v495
  %543 = vmatprep.subr.bf16.mxu0 0
  %544 = vmatpush2.bf16.msra.mxu0 %v510
  %545 = vmatprep.subr.bf16.mxu0 0
  %546 = vmatpush2.bf16.msra.mxu0 %v509
  %547 = vmatprep.subr.bf16.mxu0 0
  %548 = vmatpush2.bf16.msra.mxu0 %v508
  %549 = vmatprep.subr.bf16.mxu0 0
  %550 = vmatpush2.bf16.msra.mxu0 %v507
  %551 = vmatprep.subr.bf16.mxu0 0
  %552 = vmatpush2.bf16.msra.mxu0 %v506
  %553 = vmatprep.subr.bf16.mxu0 0
  %554 = vmatpush2.bf16.msra.mxu0 %v505
  %555 = vmatprep.subr.bf16.mxu0 0
  %556 = vmatpush2.bf16.msra.mxu0 %v504
  %557 = vmatprep.subr.bf16.mxu0 0
  %558 = vmatpush2.bf16.msra.mxu0 %v503
  %559 = vmatprep.mubr.bf16.mxu0 %v64
  %560 = vmatmul.mubr.bf16.gmra.mxu0 %v63
  %v561 = vpop.f32.mrf.mxu0
  %v562 = vadd.f32 0.0, %v561
  %v563 = vpop.f32.mrf.mxu0
  %v564 = vpop.f32.mrf.mxu0
  %v565 = vadd.f32 0.0, %v564
  %v566 = vpop.f32.mrf.mxu0
  %567 = vmatprep.mubr.bf16.mxu0 %v66
  %568 = vmatmul.mubr.bf16.gmra.mxu0 %v65
  %v569 = vpop.f32.mrf.mxu0
  %v570 = vadd.f32 0.0, %v569
  %v571 = vpop.f32.mrf.mxu0
  %v572 = vpop.f32.mrf.mxu0
  %v573 = vadd.f32 0.0, %v572
  %v574 = vpop.f32.mrf.mxu0
  %575 = vdwg.mxu0
  %v576 = vmax.f32 %v394, %v562
  %v577 = vmax.f32 %v395, %v565
  %v578 = vmax.f32 %v396, %v570
  %v579 = vmax.f32 %v397, %v573
  %s580 = scalar_lea.vmem %s0, 384
  %v581 = vld [vmem:[%s580] sm:$0xf]
  %v582 = vld [vmem:[%s580 + $0x4] sm:$0xf]
  %v583 = vld [vmem:[%s580 + $0x8] sm:$0xf]
  %v584 = vld [vmem:[%s580 + $0xc] sm:$0xf]
  %v585 = vld [vmem:[%s580 + $0x10] sm:$0xf]
  %v586 = vld [vmem:[%s580 + $0x14] sm:$0xf]
  %v587 = vld [vmem:[%s580 + $0x18] sm:$0xf]
  %v588 = vld [vmem:[%s580 + $0x1c] sm:$0xf]
  %v589 = vld [vmem:[%s580 + $0x20] sm:$0xf]
  %v590 = vld [vmem:[%s580 + $0x24] sm:$0xf]
  %v591 = vld [vmem:[%s580 + $0x28] sm:$0xf]
  %v592 = vld [vmem:[%s580 + $0x2c] sm:$0xf]
  %v593 = vld [vmem:[%s580 + $0x30] sm:$0xf]
  %v594 = vld [vmem:[%s580 + $0x34] sm:$0xf]
  %v595 = vld [vmem:[%s580 + $0x38] sm:$0xf]
  %v596 = vld [vmem:[%s580 + $0x3c] sm:$0xf]
  %v597 = vld [vmem:[%s580 + $0x40] sm:$0xf]
  %v598 = vld [vmem:[%s580 + $0x44] sm:$0xf]
  %v599 = vld [vmem:[%s580 + $0x48] sm:$0xf]
  %v600 = vld [vmem:[%s580 + $0x4c] sm:$0xf]
  %v601 = vld [vmem:[%s580 + $0x50] sm:$0xf]
  %v602 = vld [vmem:[%s580 + $0x54] sm:$0xf]
  %v603 = vld [vmem:[%s580 + $0x58] sm:$0xf]
  %v604 = vld [vmem:[%s580 + $0x5c] sm:$0xf]
  %v605 = vld [vmem:[%s580 + $0x60] sm:$0xf]
  %v606 = vld [vmem:[%s580 + $0x64] sm:$0xf]
  %v607 = vld [vmem:[%s580 + $0x68] sm:$0xf]
  %v608 = vld [vmem:[%s580 + $0x6c] sm:$0xf]
  %v609 = vld [vmem:[%s580 + $0x70] sm:$0xf]
  %v610 = vld [vmem:[%s580 + $0x74] sm:$0xf]
  %v611 = vld [vmem:[%s580 + $0x78] sm:$0xf]
  %v612 = vld [vmem:[%s580 + $0x7c] sm:$0xf]
  %v645 = vunpack.c.l.b16 %v581
  %v646 = vunpack.c.l.b16 %v582
  %v647 = vunpack.c.l.b16 %v583
  %v648 = vunpack.c.l.b16 %v584
  %v649 = vunpack.c.l.b16 %v585
  %v650 = vunpack.c.l.b16 %v586
  %v651 = vunpack.c.l.b16 %v587
  %v652 = vunpack.c.l.b16 %v588
  %v653 = vunpack.c.l.b16 %v589
  %v654 = vunpack.c.l.b16 %v590
  %v655 = vunpack.c.l.b16 %v591
  %v656 = vunpack.c.l.b16 %v592
  %v657 = vunpack.c.l.b16 %v593
  %v658 = vunpack.c.l.b16 %v594
  %v659 = vunpack.c.l.b16 %v595
  %v660 = vunpack.c.l.b16 %v596
  %v661 = vunpack.c.l.b16 %v597
  %v662 = vunpack.c.l.b16 %v598
  %v663 = vunpack.c.l.b16 %v599
  %v664 = vunpack.c.l.b16 %v600
  %v665 = vunpack.c.l.b16 %v601
  %v666 = vunpack.c.l.b16 %v602
  %v667 = vunpack.c.l.b16 %v603
  %v668 = vunpack.c.l.b16 %v604
  %v669 = vunpack.c.l.b16 %v605
  %v670 = vunpack.c.l.b16 %v606
  %v671 = vunpack.c.l.b16 %v607
  %v672 = vunpack.c.l.b16 %v608
  %v673 = vunpack.c.l.b16 %v609
  %v674 = vunpack.c.l.b16 %v610
  %v675 = vunpack.c.l.b16 %v611
  %v676 = vunpack.c.l.b16 %v612
  %v677 = vpack.c.b16 %v646, %v645
  %v678 = vpack.c.b16 %v648, %v647
  %v679 = vpack.c.b16 %v650, %v649
  %v680 = vpack.c.b16 %v652, %v651
  %v681 = vpack.c.b16 %v654, %v653
  %v682 = vpack.c.b16 %v656, %v655
  %v683 = vpack.c.b16 %v658, %v657
  %v684 = vpack.c.b16 %v660, %v659
  %v685 = vpack.c.b16 %v662, %v661
  %v686 = vpack.c.b16 %v664, %v663
  %v687 = vpack.c.b16 %v666, %v665
  %v688 = vpack.c.b16 %v668, %v667
  %v689 = vpack.c.b16 %v670, %v669
  %v690 = vpack.c.b16 %v672, %v671
  %v691 = vpack.c.b16 %v674, %v673
  %v692 = vpack.c.b16 %v676, %v675
  %709 = vmatprep.subr.bf16.mxu0 0
  %710 = vmatpush1.bf16.msra.mxu0 %v684
  %711 = vmatprep.subr.bf16.mxu0 0
  %712 = vmatpush1.bf16.msra.mxu0 %v683
  %713 = vmatprep.subr.bf16.mxu0 0
  %714 = vmatpush1.bf16.msra.mxu0 %v682
  %715 = vmatprep.subr.bf16.mxu0 0
  %716 = vmatpush1.bf16.msra.mxu0 %v681
  %717 = vmatprep.subr.bf16.mxu0 0
  %718 = vmatpush1.bf16.msra.mxu0 %v680
  %719 = vmatprep.subr.bf16.mxu0 0
  %720 = vmatpush1.bf16.msra.mxu0 %v679
  %721 = vmatprep.subr.bf16.mxu0 0
  %722 = vmatpush1.bf16.msra.mxu0 %v678
  %723 = vmatprep.subr.bf16.mxu0 0
  %724 = vmatpush1.bf16.msra.mxu0 %v677
  %725 = vmatprep.subr.bf16.mxu0 0
  %726 = vmatpush2.bf16.msra.mxu0 %v692
  %727 = vmatprep.subr.bf16.mxu0 0
  %728 = vmatpush2.bf16.msra.mxu0 %v691
  %729 = vmatprep.subr.bf16.mxu0 0
  %730 = vmatpush2.bf16.msra.mxu0 %v690
  %731 = vmatprep.subr.bf16.mxu0 0
  %732 = vmatpush2.bf16.msra.mxu0 %v689
  %733 = vmatprep.subr.bf16.mxu0 0
  %734 = vmatpush2.bf16.msra.mxu0 %v688
  %735 = vmatprep.subr.bf16.mxu0 0
  %736 = vmatpush2.bf16.msra.mxu0 %v687
  %737 = vmatprep.subr.bf16.mxu0 0
  %738 = vmatpush2.bf16.msra.mxu0 %v686
  %739 = vmatprep.subr.bf16.mxu0 0
  %740 = vmatpush2.bf16.msra.mxu0 %v685
  %741 = vmatprep.mubr.bf16.mxu0 %v64
  %742 = vmatmul.mubr.bf16.gmra.mxu0 %v63
  %v743 = vpop.f32.mrf.mxu0
  %v744 = vadd.f32 0.0, %v743
  %v745 = vpop.f32.mrf.mxu0
  %v746 = vpop.f32.mrf.mxu0
  %v747 = vadd.f32 0.0, %v746
  %v748 = vpop.f32.mrf.mxu0
  %749 = vmatprep.mubr.bf16.mxu0 %v66
  %750 = vmatmul.mubr.bf16.gmra.mxu0 %v65
  %v751 = vpop.f32.mrf.mxu0
  %v752 = vadd.f32 0.0, %v751
  %v753 = vpop.f32.mrf.mxu0
  %v754 = vpop.f32.mrf.mxu0
  %v755 = vadd.f32 0.0, %v754
  %v756 = vpop.f32.mrf.mxu0
  %757 = vdwg.mxu0
  %v758 = vmax.f32 %v576, %v744
  %v759 = vmax.f32 %v577, %v747
  %v760 = vmax.f32 %v578, %v752
  %v761 = vmax.f32 %v579, %v755
  %v762 = vld [vmem:[%s2] sm:$0xff]
  %v763 = vld [vmem:[%s2 + $0x8] sm:$0xff]
  %v764 = vld [vmem:[%s2 + $0x10] sm:$0xff]
  %v765 = vld [vmem:[%s2 + $0x18] sm:$0xff]
  %767 = vset.pattern.permute.xlu0 0
  %768 = vperm.xlu0 %767, %v762
  %v769 = vpop.permute.xlu0 %768
  %772 = vset.pattern.permute.xlu0 0
  %773 = vperm.xlu0 %772, %v763
  %v774 = vpop.permute.xlu0 %773
  %777 = vset.pattern.permute.xlu0 0
  %778 = vperm.xlu0 %777, %v764
  %v779 = vpop.permute.xlu0 %778
  %782 = vset.pattern.permute.xlu0 0
  %783 = vperm.xlu0 %782, %v765
  %v784 = vpop.permute.xlu0 %783
  %v786 = vadd.f32 %v758, %v769
  %v787 = vadd.f32 %v759, %v774
  %v788 = vadd.f32 %v760, %v779
  %v789 = vadd.f32 %v761, %v784
  %v790 = vmul.f32 %v786, 0.2
  %v791 = vmul.f32 %v787, 0.2
  %v792 = vmul.f32 %v788, 0.2
  %v793 = vmul.f32 %v789, 0.2
  %v794 = vmax.f32 %v786, %v790
  %v795 = vmax.f32 %v787, %v791
  %v796 = vmax.f32 %v788, %v792
  %v797 = vmax.f32 %v789, %v793
  %v798 = vpack.c.bf16 %v795, %v794
  %v799 = vpack.c.bf16 %v797, %v796
  %v802 = vunpack.c.l.b16 %v798
  %v803 = vunpack.c.h.b16 %v798
  %v804 = vunpack.c.l.b16 %v799
  %v805 = vunpack.c.h.b16 %v799
  %v806 = vpack.c.b16 %v802, %v802
  %v807 = vpack.c.b16 %v803, %v803
  %v808 = vpack.c.b16 %v804, %v804
  %v809 = vpack.c.b16 %v805, %v805
  %814 = vst [vmem:[%s3] sm:$0xf] %v806
  %815 = vst [vmem:[%s3 + $0x4] sm:$0xf] %v807
  %816 = vst [vmem:[%s3 + $0x8] sm:$0xf] %v808
  %817 = vst [vmem:[%s3 + $0xc] sm:$0xf] %v809
  // Predicated region
  $region14: #{net_forward.4} parent=0 // pred_check
    _
  $region15: #{net_forward.4} parent=0 // pred_check_branch
    %819 = sbr.rel (0) target = $region17
  $region16: #{net_forward.4} parent=0 // pred_region
    _
  $region17: #{net_forward.4} parent=0 // pred_fallthru
    _
  // Predicated region
  $region18: #{net_forward.4} parent=0 // pred_check
    _
  $region19: #{net_forward.4} parent=0 // pred_check_branch
    %821 = sbr.rel (0) target = $region21
  $region20: #{net_forward.4} parent=0 // pred_region
    _
  $region21: #{net_forward.4} parent=0 // pred_fallthru
    _

// kernel: net_forward.5
$region0: #{net_forward.5}
  #allocation0 [shape = 'u32[]', space=smem, size = 0x4, offset = 0x4, fixed_abs, tag = 'smem constant byte address 0x4 - core index']
  #allocation1 [shape = 'u32[144,128]{1,0:T(1,128)}', space=vmem, size = 0x12000, scoped, tag = 'internal scratch']
  %s0 = inlined_call_operand.vmem [shape: bf16[2,2048], index: 0, kind: input, shape index: {}]
  %s1 = inlined_call_operand.vmem [shape: bf16[2048,128], index: 1, kind: input, shape index: {}]
  %s2 = inlined_call_operand.vmem [shape: f32[1,128], index: 2, kind: input, shape index: {}]
  %s3 = inlined_call_operand.vmem [shape: bf16[128,128], index: 3, kind: input, shape index: {}]
  %s4 = inlined_call_operand.vmem [shape: f32[1,128], index: 4, kind: input, shape index: {}]
  %s5 = inlined_call_operand.hbm [shape: f32[2,128], index: 5, kind: output, shape index: {}]
  %s6 = sld [smem:[#allocation0]]
  $region30: #{net_forward.5} parent=0
    _
  %s8 = ssub.s32 1, %s6
  %s9 = scalar_select 0, %s8, %s6
  $region1: #{net_forward.5} parent=0
    #allocation2 [shape = 'u8[1024]{0}', space=vmem, size = 0x400, scoped, tag = 'output window, operand 0, single buffered']
    #allocation3 [shape = 's32[1]{0}', space=sflag, size = 0x4, scoped, tag = 'scoped memory for net_forward.5']
    %10 = vsyncpa [#allocation3], 0
    // Predicated region
    $region2: #{net_forward.5} parent=1 // pred_check
      _
    $region3: #{net_forward.5} parent=1 // pred_check_branch
      %12 = sbr.rel (0) target = $region5
    $region4: #{net_forward.5} parent=1 // pred_region
      _
    $region5: #{net_forward.5} parent=1 // pred_fallthru
      _
    // Predicated region
    $region6: #{net_forward.5} parent=1 // pred_check
      _
    $region7: #{net_forward.5} parent=1 // pred_check_branch
      %14 = sbr.rel (0) target = $region9
    $region8: #{net_forward.5} parent=1 // pred_region
      _
    $region9: #{net_forward.5} parent=1 // pred_fallthru
      _
    // Predicated region
    $region10: #{net_forward.5} parent=1 // pred_check
      _
    $region11: #{net_forward.5} parent=1 // pred_check_branch
      %16 = sbr.rel (0) target = $region13
    $region12: #{net_forward.5} parent=1 // pred_region
      _
    $region13: #{net_forward.5} parent=1 // pred_fallthru
      _
    // Predicated region
    $region14: #{net_forward.5} parent=1 // pred_check
      _
    $region15: #{net_forward.5} parent=1 // pred_check_branch
      %18 = sbr.rel (0) target = $region17
    $region16: #{net_forward.5} parent=1 // pred_region
      _
    $region17: #{net_forward.5} parent=1 // pred_fallthru
      _
    // Predicated region
    $region18: #{net_forward.5} parent=1 // pred_check
      _
    $region19: #{net_forward.5} parent=1 // pred_check_branch
      %20 = sbr.rel (0) target = $region21
    $region20: #{net_forward.5} parent=1 // pred_region
      _
    $region21: #{net_forward.5} parent=1 // pred_fallthru
      _
    %v22 = vld [vmem:[%s0] sm:$0xff]
    %v23 = vld [vmem:[%s0 + $0x8] sm:$0xff]
    %v24 = vld [vmem:[%s1] sm:$0xf]
    %v25 = vld [vmem:[%s1 + $0x4] sm:$0xf]
    %v26 = vld [vmem:[%s1 + $0x8] sm:$0xf]
    %v27 = vld [vmem:[%s1 + $0xc] sm:$0xf]
    %v28 = vld [vmem:[%s1 + $0x10] sm:$0xf]
    %v29 = vld [vmem:[%s1 + $0x14] sm:$0xf]
    %v30 = vld [vmem:[%s1 + $0x18] sm:$0xf]
    %v31 = vld [vmem:[%s1 + $0x1c] sm:$0xf]
    %v32 = vld [vmem:[%s1 + $0x20] sm:$0xf]
    %v33 = vld [vmem:[%s1 + $0x24] sm:$0xf]
    %v34 = vld [vmem:[%s1 + $0x28] sm:$0xf]
    %v35 = vld [vmem:[%s1 + $0x2c] sm:$0xf]
    %v36 = vld [vmem:[%s1 + $0x30] sm:$0xf]
    %v37 = vld [vmem:[%s1 + $0x34] sm:$0xf]
    %v38 = vld [vmem:[%s1 + $0x38] sm:$0xf]
    %v39 = vld [vmem:[%s1 + $0x3c] sm:$0xf]
    %v40 = vld [vmem:[%s1 + $0x40] sm:$0xf]
    %v41 = vld [vmem:[%s1 + $0x44] sm:$0xf]
    %v42 = vld [vmem:[%s1 + $0x48] sm:$0xf]
    %v43 = vld [vmem:[%s1 + $0x4c] sm:$0xf]
    %v44 = vld [vmem:[%s1 + $0x50] sm:$0xf]
    %v45 = vld [vmem:[%s1 + $0x54] sm:$0xf]
    %v46 = vld [vmem:[%s1 + $0x58] sm:$0xf]
    %v47 = vld [vmem:[%s1 + $0x5c] sm:$0xf]
    %v48 = vld [vmem:[%s1 + $0x60] sm:$0xf]
    %v49 = vld [vmem:[%s1 + $0x64] sm:$0xf]
    %v50 = vld [vmem:[%s1 + $0x68] sm:$0xf]
    %v51 = vld [vmem:[%s1 + $0x6c] sm:$0xf]
    %v52 = vld [vmem:[%s1 + $0x70] sm:$0xf]
    %v53 = vld [vmem:[%s1 + $0x74] sm:$0xf]
    %v54 = vld [vmem:[%s1 + $0x78] sm:$0xf]
    %v55 = vld [vmem:[%s1 + $0x7c] sm:$0xf]
    %v56 = vld [vmem:[%s1 + $0x80] sm:$0xf]
    %v57 = vld [vmem:[%s1 + $0x84] sm:$0xf]
    %v58 = vld [vmem:[%s1 + $0x88] sm:$0xf]
    %v59 = vld [vmem:[%s1 + $0x8c] sm:$0xf]
    %v60 = vld [vmem:[%s1 + $0x90] sm:$0xf]
    %v61 = vld [vmem:[%s1 + $0x94] sm:$0xf]
    %v62 = vld [vmem:[%s1 + $0x98] sm:$0xf]
    %v63 = vld [vmem:[%s1 + $0x9c] sm:$0xf]
    %v64 = vld [vmem:[%s1 + $0xa0] sm:$0xf]
    %v65 = vld [vmem:[%s1 + $0xa4] sm:$0xf]
    %v66 = vld [vmem:[%s1 + $0xa8] sm:$0xf]
    %v67 = vld [vmem:[%s1 + $0xac] sm:$0xf]
    %v68 = vld [vmem:[%s1 + $0xb0] sm:$0xf]
    %v69 = vld [vmem:[%s1 + $0xb4] sm:$0xf]
    %v70 = vld [vmem:[%s1 + $0xb8] sm:$0xf]
    %v71 = vld [vmem:[%s1 + $0xbc] sm:$0xf]
    %v72 = vld [vmem:[%s1 + $0xc0] sm:$0xf]
    %v73 = vld [vmem:[%s1 + $0xc4] sm:$0xf]
    %v74 = vld [vmem:[%s1 + $0xc8] sm:$0xf]
    %v75 = vld [vmem:[%s1 + $0xcc] sm:$0xf]
    %v76 = vld [vmem:[%s1 + $0xd0] sm:$0xf]
    %v77 = vld [vmem:[%s1 + $0xd4] sm:$0xf]
    %v78 = vld [vmem:[%s1 + $0xd8] sm:$0xf]
    %v79 = vld [vmem:[%s1 + $0xdc] sm:$0xf]
    %v80 = vld [vmem:[%s1 + $0xe0] sm:$0xf]
    %v81 = vld [vmem:[%s1 + $0xe4] sm:$0xf]
    %v82 = vld [vmem:[%s1 + $0xe8] sm:$0xf]
    %v83 = vld [vmem:[%s1 + $0xec] sm:$0xf]
    %v84 = vld [vmem:[%s1 + $0xf0] sm:$0xf]
    %v85 = vld [vmem:[%s1 + $0xf4] sm:$0xf]
    %v86 = vld [vmem:[%s1 + $0xf8] sm:$0xf]
    %v87 = vld [vmem:[%s1 + $0xfc] sm:$0xf]
    %v88 = vld [vmem:[%s1 + $0x100] sm:$0xf]
    %v89 = vld [vmem:[%s1 + $0x104] sm:$0xf]
    %v90 = vld [vmem:[%s1 + $0x108] sm:$0xf]
    %v91 = vld [vmem:[%s1 + $0x10c] sm:$0xf]
    %v92 = vld [vmem:[%s1 + $0x110] sm:$0xf]
    %v93 = vld [vmem:[%s1 + $0x114] sm:$0xf]
    %v94 = vld [vmem:[%s1 + $0x118] sm:$0xf]
    %v95 = vld [vmem:[%s1 + $0x11c] sm:$0xf]
    %v96 = vld [vmem:[%s1 + $0x120] sm:$0xf]
    %v97 = vld [vmem:[%s1 + $0x124] sm:$0xf]
    %v98 = vld [vmem:[%s1 + $0x128] sm:$0xf]
    %v99 = vld [vmem:[%s1 + $0x12c] sm:$0xf]
    %v100 = vld [vmem:[%s1 + $0x130] sm:$0xf]
    %v101 = vld [vmem:[%s1 + $0x134] sm:$0xf]
    %v102 = vld [vmem:[%s1 + $0x138] sm:$0xf]
    %v103 = vld [vmem:[%s1 + $0x13c] sm:$0xf]
    %v104 = vld [vmem:[%s1 + $0x140] sm:$0xf]
    %v105 = vld [vmem:[%s1 + $0x144] sm:$0xf]
    %v106 = vld [vmem:[%s1 + $0x148] sm:$0xf]
    %v107 = vld [vmem:[%s1 + $0x14c] sm:$0xf]
    %v108 = vld [vmem:[%s1 + $0x150] sm:$0xf]
    %v109 = vld [vmem:[%s1 + $0x154] sm:$0xf]
    %v110 = vld [vmem:[%s1 + $0x158] sm:$0xf]
    %v111 = vld [vmem:[%s1 + $0x15c] sm:$0xf]
    %v112 = vld [vmem:[%s1 + $0x160] sm:$0xf]
    %v113 = vld [vmem:[%s1 + $0x164] sm:$0xf]
    %v114 = vld [vmem:[%s1 + $0x168] sm:$0xf]
    %v115 = vld [vmem:[%s1 + $0x16c] sm:$0xf]
    %v116 = vld [vmem:[%s1 + $0x170] sm:$0xf]
    %v117 = vld [vmem:[%s1 + $0x174] sm:$0xf]
    %v118 = vld [vmem:[%s1 + $0x178] sm:$0xf]
    %v119 = vld [vmem:[%s1 + $0x17c] sm:$0xf]
    %v120 = vld [vmem:[%s1 + $0x180] sm:$0xf]
    %v121 = vld [vmem:[%s1 + $0x184] sm:$0xf]
    %v122 = vld [vmem:[%s1 + $0x188] sm:$0xf]
    %v123 = vld [vmem:[%s1 + $0x18c] sm:$0xf]
    %v124 = vld [vmem:[%s1 + $0x190] sm:$0xf]
    %v125 = vld [vmem:[%s1 + $0x194] sm:$0xf]
    %v126 = vld [vmem:[%s1 + $0x198] sm:$0xf]
    %v127 = vld [vmem:[%s1 + $0x19c] sm:$0xf]
    %v128 = vld [vmem:[%s1 + $0x1a0] sm:$0xf]
    %v129 = vld [vmem:[%s1 + $0x1a4] sm:$0xf]
    %v130 = vld [vmem:[%s1 + $0x1a8] sm:$0xf]
    %v131 = vld [vmem:[%s1 + $0x1ac] sm:$0xf]
    %v132 = vld [vmem:[%s1 + $0x1b0] sm:$0xf]
    %v133 = vld [vmem:[%s1 + $0x1b4] sm:$0xf]
    %v134 = vld [vmem:[%s1 + $0x1b8] sm:$0xf]
    %v135 = vld [vmem:[%s1 + $0x1bc] sm:$0xf]
    %v136 = vld [vmem:[%s1 + $0x1c0] sm:$0xf]
    %v137 = vld [vmem:[%s1 + $0x1c4] sm:$0xf]
    %v138 = vld [vmem:[%s1 + $0x1c8] sm:$0xf]
    %v139 = vld [vmem:[%s1 + $0x1cc] sm:$0xf]
    %v140 = vld [vmem:[%s1 + $0x1d0] sm:$0xf]
    %v141 = vld [vmem:[%s1 + $0x1d4] sm:$0xf]
    %v142 = vld [vmem:[%s1 + $0x1d8] sm:$0xf]
    %v143 = vld [vmem:[%s1 + $0x1dc] sm:$0xf]
    %v144 = vld [vmem:[%s1 + $0x1e0] sm:$0xf]
    %v145 = vld [vmem:[%s1 + $0x1e4] sm:$0xf]
    %v146 = vld [vmem:[%s1 + $0x1e8] sm:$0xf]
    %v147 = vld [vmem:[%s1 + $0x1ec] sm:$0xf]
    %v148 = vld [vmem:[%s1 + $0x1f0] sm:$0xf]
    %v149 = vld [vmem:[%s1 + $0x1f4] sm:$0xf]
    %v150 = vld [vmem:[%s1 + $0x1f8] sm:$0xf]
    %v151 = vld [vmem:[%s1 + $0x1fc] sm:$0xf]
    %v152 = vld [vmem:[%s1 + $0x200] sm:$0xf]
    %v153 = vld [vmem:[%s1 + $0x204] sm:$0xf]
    %v154 = vld [vmem:[%s1 + $0x208] sm:$0xf]
    %v155 = vld [vmem:[%s1 + $0x20c] sm:$0xf]
    %v156 = vld [vmem:[%s1 + $0x210] sm:$0xf]
    %v157 = vld [vmem:[%s1 + $0x214] sm:$0xf]
    %v158 = vld [vmem:[%s1 + $0x218] sm:$0xf]
    %v159 = vld [vmem:[%s1 + $0x21c] sm:$0xf]
    %v160 = vld [vmem:[%s1 + $0x220] sm:$0xf]
    %v161 = vld [vmem:[%s1 + $0x224] sm:$0xf]
    %v162 = vld [vmem:[%s1 + $0x228] sm:$0xf]
    %v163 = vld [vmem:[%s1 + $0x22c] sm:$0xf]
    %v164 = vld [vmem:[%s1 + $0x230] sm:$0xf]
    %v165 = vld [vmem:[%s1 + $0x234] sm:$0xf]
    %v166 = vld [vmem:[%s1 + $0x238] sm:$0xf]
    %v167 = vld [vmem:[%s1 + $0x23c] sm:$0xf]
    %v168 = vld [vmem:[%s1 + $0x240] sm:$0xf]
    %v169 = vld [vmem:[%s1 + $0x244] sm:$0xf]
    %v170 = vld [vmem:[%s1 + $0x248] sm:$0xf]
    %v171 = vld [vmem:[%s1 + $0x24c] sm:$0xf]
    %v172 = vld [vmem:[%s1 + $0x250] sm:$0xf]
    %v173 = vld [vmem:[%s1 + $0x254] sm:$0xf]
    %v174 = vld [vmem:[%s1 + $0x258] sm:$0xf]
    %v175 = vld [vmem:[%s1 + $0x25c] sm:$0xf]
    %v176 = vld [vmem:[%s1 + $0x260] sm:$0xf]
    %v177 = vld [vmem:[%s1 + $0x264] sm:$0xf]
    %v178 = vld [vmem:[%s1 + $0x268] sm:$0xf]
    %v179 = vld [vmem:[%s1 + $0x26c] sm:$0xf]
    %v180 = vld [vmem:[%s1 + $0x270] sm:$0xf]
    %v181 = vld [vmem:[%s1 + $0x274] sm:$0xf]
    %v182 = vld [vmem:[%s1 + $0x278] sm:$0xf]
    %v183 = vld [vmem:[%s1 + $0x27c] sm:$0xf]
    %v184 = vld [vmem:[%s1 + $0x280] sm:$0xf]
    %v185 = vld [vmem:[%s1 + $0x284] sm:$0xf]
    %v186 = vld [vmem:[%s1 + $0x288] sm:$0xf]
    %v187 = vld [vmem:[%s1 + $0x28c] sm:$0xf]
    %v188 = vld [vmem:[%s1 + $0x290] sm:$0xf]
    %v189 = vld [vmem:[%s1 + $0x294] sm:$0xf]
    %v190 = vld [vmem:[%s1 + $0x298] sm:$0xf]
    %v191 = vld [vmem:[%s1 + $0x29c] sm:$0xf]
    %v192 = vld [vmem:[%s1 + $0x2a0] sm:$0xf]
    %v193 = vld [vmem:[%s1 + $0x2a4] sm:$0xf]
    %v194 = vld [vmem:[%s1 + $0x2a8] sm:$0xf]
    %v195 = vld [vmem:[%s1 + $0x2ac] sm:$0xf]
    %v196 = vld [vmem:[%s1 + $0x2b0] sm:$0xf]
    %v197 = vld [vmem:[%s1 + $0x2b4] sm:$0xf]
    %v198 = vld [vmem:[%s1 + $0x2b8] sm:$0xf]
    %v199 = vld [vmem:[%s1 + $0x2bc] sm:$0xf]
    %v200 = vld [vmem:[%s1 + $0x2c0] sm:$0xf]
    %v201 = vld [vmem:[%s1 + $0x2c4] sm:$0xf]
    %v202 = vld [vmem:[%s1 + $0x2c8] sm:$0xf]
    %v203 = vld [vmem:[%s1 + $0x2cc] sm:$0xf]
    %v204 = vld [vmem:[%s1 + $0x2d0] sm:$0xf]
    %v205 = vld [vmem:[%s1 + $0x2d4] sm:$0xf]
    %v206 = vld [vmem:[%s1 + $0x2d8] sm:$0xf]
    %v207 = vld [vmem:[%s1 + $0x2dc] sm:$0xf]
    %v208 = vld [vmem:[%s1 + $0x2e0] sm:$0xf]
    %v209 = vld [vmem:[%s1 + $0x2e4] sm:$0xf]
    %v210 = vld [vmem:[%s1 + $0x2e8] sm:$0xf]
    %v211 = vld [vmem:[%s1 + $0x2ec] sm:$0xf]
    %v212 = vld [vmem:[%s1 + $0x2f0] sm:$0xf]
    %v213 = vld [vmem:[%s1 + $0x2f4] sm:$0xf]
    %v214 = vld [vmem:[%s1 + $0x2f8] sm:$0xf]
    %v215 = vld [vmem:[%s1 + $0x2fc] sm:$0xf]
    %v216 = vld [vmem:[%s1 + $0x300] sm:$0xf]
    %v217 = vld [vmem:[%s1 + $0x304] sm:$0xf]
    %v218 = vld [vmem:[%s1 + $0x308] sm:$0xf]
    %v219 = vld [vmem:[%s1 + $0x30c] sm:$0xf]
    %v220 = vld [vmem:[%s1 + $0x310] sm:$0xf]
    %v221 = vld [vmem:[%s1 + $0x314] sm:$0xf]
    %v222 = vld [vmem:[%s1 + $0x318] sm:$0xf]
    %v223 = vld [vmem:[%s1 + $0x31c] sm:$0xf]
    %v224 = vld [vmem:[%s1 + $0x320] sm:$0xf]
    %v225 = vld [vmem:[%s1 + $0x324] sm:$0xf]
    %v226 = vld [vmem:[%s1 + $0x328] sm:$0xf]
    %v227 = vld [vmem:[%s1 + $0x32c] sm:$0xf]
    %v228 = vld [vmem:[%s1 + $0x330] sm:$0xf]
    %v229 = vld [vmem:[%s1 + $0x334] sm:$0xf]
    %v230 = vld [vmem:[%s1 + $0x338] sm:$0xf]
    %v231 = vld [vmem:[%s1 + $0x33c] sm:$0xf]
    %v232 = vld [vmem:[%s1 + $0x340] sm:$0xf]
    %v233 = vld [vmem:[%s1 + $0x344] sm:$0xf]
    %v234 = vld [vmem:[%s1 + $0x348] sm:$0xf]
    %v235 = vld [vmem:[%s1 + $0x34c] sm:$0xf]
    %v236 = vld [vmem:[%s1 + $0x350] sm:$0xf]
    %v237 = vld [vmem:[%s1 + $0x354] sm:$0xf]
    %v238 = vld [vmem:[%s1 + $0x358] sm:$0xf]
    %v239 = vld [vmem:[%s1 + $0x35c] sm:$0xf]
    %v240 = vld [vmem:[%s1 + $0x360] sm:$0xf]
    %v241 = vld [vmem:[%s1 + $0x364] sm:$0xf]
    %v242 = vld [vmem:[%s1 + $0x368] sm:$0xf]
    %v243 = vld [vmem:[%s1 + $0x36c] sm:$0xf]
    %v244 = vld [vmem:[%s1 + $0x370] sm:$0xf]
    %v245 = vld [vmem:[%s1 + $0x374] sm:$0xf]
    %v246 = vld [vmem:[%s1 + $0x378] sm:$0xf]
    %v247 = vld [vmem:[%s1 + $0x37c] sm:$0xf]
    %v248 = vld [vmem:[%s1 + $0x380] sm:$0xf]
    %v249 = vld [vmem:[%s1 + $0x384] sm:$0xf]
    %v250 = vld [vmem:[%s1 + $0x388] sm:$0xf]
    %v251 = vld [vmem:[%s1 + $0x38c] sm:$0xf]
    %v252 = vld [vmem:[%s1 + $0x390] sm:$0xf]
    %v253 = vld [vmem:[%s1 + $0x394] sm:$0xf]
    %v254 = vld [vmem:[%s1 + $0x398] sm:$0xf]
    %v255 = vld [vmem:[%s1 + $0x39c] sm:$0xf]
    %v256 = vld [vmem:[%s1 + $0x3a0] sm:$0xf]
    %v257 = vld [vmem:[%s1 + $0x3a4] sm:$0xf]
    %v258 = vld [vmem:[%s1 + $0x3a8] sm:$0xf]
    %v259 = vld [vmem:[%s1 + $0x3ac] sm:$0xf]
    %v260 = vld [vmem:[%s1 + $0x3b0] sm:$0xf]
    %v261 = vld [vmem:[%s1 + $0x3b4] sm:$0xf]
    %v262 = vld [vmem:[%s1 + $0x3b8] sm:$0xf]
    %v263 = vld [vmem:[%s1 + $0x3bc] sm:$0xf]
    %v264 = vld [vmem:[%s1 + $0x3c0] sm:$0xf]
    %v265 = vld [vmem:[%s1 + $0x3c4] sm:$0xf]
    %v266 = vld [vmem:[%s1 + $0x3c8] sm:$0xf]
    %v267 = vld [vmem:[%s1 + $0x3cc] sm:$0xf]
    %v268 = vld [vmem:[%s1 + $0x3d0] sm:$0xf]
    %v269 = vld [vmem:[%s1 + $0x3d4] sm:$0xf]
    %v270 = vld [vmem:[%s1 + $0x3d8] sm:$0xf]
    %v271 = vld [vmem:[%s1 + $0x3dc] sm:$0xf]
    %v272 = vld [vmem:[%s1 + $0x3e0] sm:$0xf]
    %v273 = vld [vmem:[%s1 + $0x3e4] sm:$0xf]
    %v274 = vld [vmem:[%s1 + $0x3e8] sm:$0xf]
    %v275 = vld [vmem:[%s1 + $0x3ec] sm:$0xf]
    %v276 = vld [vmem:[%s1 + $0x3f0] sm:$0xf]
    %v277 = vld [vmem:[%s1 + $0x3f4] sm:$0xf]
    %v278 = vld [vmem:[%s1 + $0x3f8] sm:$0xf]
    %v279 = vld [vmem:[%s1 + $0x3fc] sm:$0xf]
    %v280 = vld [vmem:[%s2] sm:$0x1]
    %v282 = vlaneseq
    %v283 = vshrl.u32 %v282, 7
    %v284 = vsub.s32 0, %v283
    %v285 = vrot.slane %v280, %v284
    %v289 = vcombine.high %v22, %v22
    %v291 = vunpack.c.l.s4 1966171168
    %v292 = vunpack.c.0.s8 %v291
    %v293 = vlaneseq
    %v294 = vshrl.u32 %v293, 7
    %v295 = vsub.s32 %v292, %v294
    %v296 = vrot.slane %v22, %v295
    %v298 = vunpack.c.l.s4 1966171168
    %v299 = vunpack.c.0.s8 %v298
    %v300 = vlaneseq
    %v301 = vshrl.u32 %v300, 7
    %v302 = vsub.s32 %v299, %v301
    %v303 = vrot.slane %v289, %v302
    %v304 = vcombine.high %v296, %v296
    %v305 = vcombine.high %v303, %v303
    %v307 = vunpack.c.l.s4 1966171168
    %v308 = vunpack.c.0.s8 %v307
    %v309 = vlaneseq
    %v310 = vshrl.u32 %v309, 7
    %v311 = vsub.s32 %v308, %v310
    %v312 = vrot.slane %v296, %v311
    %v314 = vunpack.c.l.s4 1966171168
    %v315 = vunpack.c.0.s8 %v314
    %v316 = vlaneseq
    %v317 = vshrl.u32 %v316, 7
    %v318 = vsub.s32 %v315, %v317
    %v319 = vrot.slane %v303, %v318
    %v321 = vunpack.c.l.s4 1966171168
    %v322 = vunpack.c.0.s8 %v321
    %v323 = vlaneseq
    %v324 = vshrl.u32 %v323, 7
    %v325 = vsub.s32 %v322, %v324
    %v326 = vrot.slane %v304, %v325
    %v328 = vunpack.c.l.s4 1966171168
    %v329 = vunpack.c.0.s8 %v328
    %v330 = vlaneseq
    %v331 = vshrl.u32 %v330, 7
    %v332 = vsub.s32 %v329, %v331
    %v333 = vrot.slane %v305, %v332
    %v334 = vcombine.high %v312, %v312
    %v335 = vcombine.high %v319, %v319
    %v336 = vcombine.high %v326, %v326
    %v337 = vcombine.high %v333, %v333
    %v338 = vcombine.high %v23, %v23
    %v340 = vunpack.c.l.s4 1966171168
    %v341 = vunpack.c.0.s8 %v340
    %v342 = vlaneseq
    %v343 = vshrl.u32 %v342, 7
    %v344 = vsub.s32 %v341, %v343
    %v345 = vrot.slane %v23, %v344
    %v347 = vunpack.c.l.s4 1966171168
    %v348 = vunpack.c.0.s8 %v347
    %v349 = vlaneseq
    %v350 = vshrl.u32 %v349, 7
    %v351 = vsub.s32 %v348, %v350
    %v352 = vrot.slane %v338, %v351
    %v353 = vcombine.high %v345, %v345
    %v354 = vcombine.high %v352, %v352
    %v356 = vunpack.c.l.s4 1966171168
    %v357 = vunpack.c.0.s8 %v356
    %v358 = vlaneseq
    %v359 = vshrl.u32 %v358, 7
    %v360 = vsub.s32 %v357, %v359
    %v361 = vrot.slane %v345, %v360
    %v363 = vunpack.c.l.s4 1966171168
    %v364 = vunpack.c.0.s8 %v363
    %v365 = vlaneseq
    %v366 = vshrl.u32 %v365, 7
    %v367 = vsub.s32 %v364, %v366
    %v368 = vrot.slane %v352, %v367
    %v370 = vunpack.c.l.s4 1966171168
    %v371 = vunpack.c.0.s8 %v370
    %v372 = vlaneseq
    %v373 = vshrl.u32 %v372, 7
    %v374 = vsub.s32 %v371, %v373
    %v375 = vrot.slane %v353, %v374
    %v377 = vunpack.c.l.s4 1966171168
    %v378 = vunpack.c.0.s8 %v377
    %v379 = vlaneseq
    %v380 = vshrl.u32 %v379, 7
    %v381 = vsub.s32 %v378, %v380
    %v382 = vrot.slane %v354, %v381
    %v383 = vcombine.high %v361, %v361
    %v384 = vcombine.high %v368, %v368
    %v385 = vcombine.high %v375, %v375
    %v386 = vcombine.high %v382, %v382
    %v659 = vunpack.c.l.b16 %v24
    %v660 = vunpack.c.l.b16 %v25
    %v661 = vunpack.c.l.b16 %v26
    %v662 = vunpack.c.l.b16 %v27
    %v663 = vunpack.c.l.b16 %v28
    %v664 = vunpack.c.l.b16 %v29
    %v665 = vunpack.c.l.b16 %v30
    %v666 = vunpack.c.l.b16 %v31
    %v667 = vunpack.c.l.b16 %v32
    %v668 = vunpack.c.l.b16 %v33
    %v669 = vunpack.c.l.b16 %v34
    %v670 = vunpack.c.l.b16 %v35
    %v671 = vunpack.c.l.b16 %v36
    %v672 = vunpack.c.l.b16 %v37
    %v673 = vunpack.c.l.b16 %v38
    %v674 = vunpack.c.l.b16 %v39
    %v675 = vunpack.c.l.b16 %v40
    %v676 = vunpack.c.l.b16 %v41
    %v677 = vunpack.c.l.b16 %v42
    %v678 = vunpack.c.l.b16 %v43
    %v679 = vunpack.c.l.b16 %v44
    %v680 = vunpack.c.l.b16 %v45
    %v681 = vunpack.c.l.b16 %v46
    %v682 = vunpack.c.l.b16 %v47
    %v683 = vunpack.c.l.b16 %v48
    %v684 = vunpack.c.l.b16 %v49
    %v685 = vunpack.c.l.b16 %v50
    %v686 = vunpack.c.l.b16 %v51
    %v687 = vunpack.c.l.b16 %v52
    %v688 = vunpack.c.l.b16 %v53
    %v689 = vunpack.c.l.b16 %v54
    %v690 = vunpack.c.l.b16 %v55
    %v691 = vunpack.c.l.b16 %v56
    %v692 = vunpack.c.l.b16 %v57
    %v693 = vunpack.c.l.b16 %v58
    %v694 = vunpack.c.l.b16 %v59
    %v695 = vunpack.c.l.b16 %v60
    %v696 = vunpack.c.l.b16 %v61
    %v697 = vunpack.c.l.b16 %v62
    %v698 = vunpack.c.l.b16 %v63
    %v699 = vunpack.c.l.b16 %v64
    %v700 = vunpack.c.l.b16 %v65
    %v701 = vunpack.c.l.b16 %v66
    %v702 = vunpack.c.l.b16 %v67
    %v703 = vunpack.c.l.b16 %v68
    %v704 = vunpack.c.l.b16 %v69
    %v705 = vunpack.c.l.b16 %v70
    %v706 = vunpack.c.l.b16 %v71
    %v707 = vunpack.c.l.b16 %v72
    %v708 = vunpack.c.l.b16 %v73
    %v709 = vunpack.c.l.b16 %v74
    %v710 = vunpack.c.l.b16 %v75
    %v711 = vunpack.c.l.b16 %v76
    %v712 = vunpack.c.l.b16 %v77
    %v713 = vunpack.c.l.b16 %v78
    %v714 = vunpack.c.l.b16 %v79
    %v715 = vunpack.c.l.b16 %v80
    %v716 = vunpack.c.l.b16 %v81
    %v717 = vunpack.c.l.b16 %v82
    %v718 = vunpack.c.l.b16 %v83
    %v719 = vunpack.c.l.b16 %v84
    %v720 = vunpack.c.l.b16 %v85
    %v721 = vunpack.c.l.b16 %v86
    %v722 = vunpack.c.l.b16 %v87
    %v723 = vunpack.c.l.b16 %v88
    %v724 = vunpack.c.l.b16 %v89
    %v725 = vunpack.c.l.b16 %v90
    %v726 = vunpack.c.l.b16 %v91
    %v727 = vunpack.c.l.b16 %v92
    %v728 = vunpack.c.l.b16 %v93
    %v729 = vunpack.c.l.b16 %v94
    %v730 = vunpack.c.l.b16 %v95
    %v731 = vunpack.c.l.b16 %v96
    %v732 = vunpack.c.l.b16 %v97
    %v733 = vunpack.c.l.b16 %v98
    %v734 = vunpack.c.l.b16 %v99
    %v735 = vunpack.c.l.b16 %v100
    %v736 = vunpack.c.l.b16 %v101
    %v737 = vunpack.c.l.b16 %v102
    %v738 = vunpack.c.l.b16 %v103
    %v739 = vunpack.c.l.b16 %v104
    %v740 = vunpack.c.l.b16 %v105
    %v741 = vunpack.c.l.b16 %v106
    %v742 = vunpack.c.l.b16 %v107
    %v743 = vunpack.c.l.b16 %v108
    %v744 = vunpack.c.l.b16 %v109
    %v745 = vunpack.c.l.b16 %v110
    %v746 = vunpack.c.l.b16 %v111
    %v747 = vunpack.c.l.b16 %v112
    %v748 = vunpack.c.l.b16 %v113
    %v749 = vunpack.c.l.b16 %v114
    %v750 = vunpack.c.l.b16 %v115
    %v751 = vunpack.c.l.b16 %v116
    %v752 = vunpack.c.l.b16 %v117
    %v753 = vunpack.c.l.b16 %v118
    %v754 = vunpack.c.l.b16 %v119
    %v755 = vunpack.c.l.b16 %v120
    %v756 = vunpack.c.l.b16 %v121
    %v757 = vunpack.c.l.b16 %v122
    %v758 = vunpack.c.l.b16 %v123
    %v759 = vunpack.c.l.b16 %v124
    %v760 = vunpack.c.l.b16 %v125
    %v761 = vunpack.c.l.b16 %v126
    %v762 = vunpack.c.l.b16 %v127
    %v763 = vunpack.c.l.b16 %v128
    %v764 = vunpack.c.l.b16 %v129
    %v765 = vunpack.c.l.b16 %v130
    %v766 = vunpack.c.l.b16 %v131
    %v767 = vunpack.c.l.b16 %v132
    %v768 = vunpack.c.l.b16 %v133
    %v769 = vunpack.c.l.b16 %v134
    %v770 = vunpack.c.l.b16 %v135
    %v771 = vunpack.c.l.b16 %v136
    %v772 = vunpack.c.l.b16 %v137
    %v773 = vunpack.c.l.b16 %v138
    %v774 = vunpack.c.l.b16 %v139
    %v775 = vunpack.c.l.b16 %v140
    %v776 = vunpack.c.l.b16 %v141
    %v777 = vunpack.c.l.b16 %v142
    %v778 = vunpack.c.l.b16 %v143
    %v779 = vunpack.c.l.b16 %v144
    %v780 = vunpack.c.l.b16 %v145
    %v781 = vunpack.c.l.b16 %v146
    %v782 = vunpack.c.l.b16 %v147
    %v783 = vunpack.c.l.b16 %v148
    %v784 = vunpack.c.l.b16 %v149
    %v785 = vunpack.c.l.b16 %v150
    %v786 = vunpack.c.l.b16 %v151
    %v787 = vunpack.c.l.b16 %v152
    %v788 = vunpack.c.l.b16 %v153
    %v789 = vunpack.c.l.b16 %v154
    %v790 = vunpack.c.l.b16 %v155
    %v791 = vunpack.c.l.b16 %v156
    %v792 = vunpack.c.l.b16 %v157
    %v793 = vunpack.c.l.b16 %v158
    %v794 = vunpack.c.l.b16 %v159
    %v795 = vunpack.c.l.b16 %v160
    %v796 = vunpack.c.l.b16 %v161
    %v797 = vunpack.c.l.b16 %v162
    %v798 = vunpack.c.l.b16 %v163
    %v799 = vunpack.c.l.b16 %v164
    %v800 = vunpack.c.l.b16 %v165
    %v801 = vunpack.c.l.b16 %v166
    %v802 = vunpack.c.l.b16 %v167
    %v803 = vunpack.c.l.b16 %v168
    %v804 = vunpack.c.l.b16 %v169
    %v805 = vunpack.c.l.b16 %v170
    %v806 = vunpack.c.l.b16 %v171
    %v807 = vunpack.c.l.b16 %v172
    %v808 = vunpack.c.l.b16 %v173
    %v809 = vunpack.c.l.b16 %v174
    %v810 = vunpack.c.l.b16 %v175
    %v811 = vunpack.c.l.b16 %v176
    %v812 = vunpack.c.l.b16 %v177
    %v813 = vunpack.c.l.b16 %v178
    %v814 = vunpack.c.l.b16 %v179
    %v815 = vunpack.c.l.b16 %v180
    %v816 = vunpack.c.l.b16 %v181
    %v817 = vunpack.c.l.b16 %v182
    %v818 = vunpack.c.l.b16 %v183
    %v819 = vunpack.c.l.b16 %v184
    %v820 = vunpack.c.l.b16 %v185
    %v821 = vunpack.c.l.b16 %v186
    %v822 = vunpack.c.l.b16 %v187
    %v823 = vunpack.c.l.b16 %v188
    %v824 = vunpack.c.l.b16 %v189
    %v825 = vunpack.c.l.b16 %v190
    %v826 = vunpack.c.l.b16 %v191
    %v827 = vunpack.c.l.b16 %v192
    %v828 = vunpack.c.l.b16 %v193
    %v829 = vunpack.c.l.b16 %v194
    %v830 = vunpack.c.l.b16 %v195
    %v831 = vunpack.c.l.b16 %v196
    %v832 = vunpack.c.l.b16 %v197
    %v833 = vunpack.c.l.b16 %v198
    %v834 = vunpack.c.l.b16 %v199
    %v835 = vunpack.c.l.b16 %v200
    %v836 = vunpack.c.l.b16 %v201
    %v837 = vunpack.c.l.b16 %v202
    %v838 = vunpack.c.l.b16 %v203
    %v839 = vunpack.c.l.b16 %v204
    %v840 = vunpack.c.l.b16 %v205
    %v841 = vunpack.c.l.b16 %v206
    %v842 = vunpack.c.l.b16 %v207
    %v843 = vunpack.c.l.b16 %v208
    %v844 = vunpack.c.l.b16 %v209
    %v845 = vunpack.c.l.b16 %v210
    %v846 = vunpack.c.l.b16 %v211
    %v847 = vunpack.c.l.b16 %v212
    %v848 = vunpack.c.l.b16 %v213
    %v849 = vunpack.c.l.b16 %v214
    %v850 = vunpack.c.l.b16 %v215
    %v851 = vunpack.c.l.b16 %v216
    %v852 = vunpack.c.l.b16 %v217
    %v853 = vunpack.c.l.b16 %v218
    %v854 = vunpack.c.l.b16 %v219
    %v855 = vunpack.c.l.b16 %v220
    %v856 = vunpack.c.l.b16 %v221
    %v857 = vunpack.c.l.b16 %v222
    %v858 = vunpack.c.l.b16 %v223
    %v859 = vunpack.c.l.b16 %v224
    %v860 = vunpack.c.l.b16 %v225
    %v861 = vunpack.c.l.b16 %v226
    %v862 = vunpack.c.l.b16 %v227
    %v863 = vunpack.c.l.b16 %v228
    %v864 = vunpack.c.l.b16 %v229
    %v865 = vunpack.c.l.b16 %v230
    %v866 = vunpack.c.l.b16 %v231
    %v867 = vunpack.c.l.b16 %v232
    %v868 = vunpack.c.l.b16 %v233
    %v869 = vunpack.c.l.b16 %v234
    %v870 = vunpack.c.l.b16 %v235
    %v871 = vunpack.c.l.b16 %v236
    %v872 = vunpack.c.l.b16 %v237
    %v873 = vunpack.c.l.b16 %v238
    %v874 = vunpack.c.l.b16 %v239
    %v875 = vunpack.c.l.b16 %v240
    %v876 = vunpack.c.l.b16 %v241
    %v877 = vunpack.c.l.b16 %v242
    %v878 = vunpack.c.l.b16 %v243
    %v879 = vunpack.c.l.b16 %v244
    %v880 = vunpack.c.l.b16 %v245
    %v881 = vunpack.c.l.b16 %v246
    %v882 = vunpack.c.l.b16 %v247
    %v883 = vunpack.c.l.b16 %v248
    %v884 = vunpack.c.l.b16 %v249
    %v885 = vunpack.c.l.b16 %v250
    %v886 = vunpack.c.l.b16 %v251
    %v887 = vunpack.c.l.b16 %v252
    %v888 = vunpack.c.l.b16 %v253
    %v889 = vunpack.c.l.b16 %v254
    %v890 = vunpack.c.l.b16 %v255
    %v891 = vunpack.c.l.b16 %v256
    %v892 = vunpack.c.l.b16 %v257
    %v893 = vunpack.c.l.b16 %v258
    %v894 = vunpack.c.l.b16 %v259
    %v895 = vunpack.c.l.b16 %v260
    %v896 = vunpack.c.l.b16 %v261
    %v897 = vunpack.c.l.b16 %v262
    %v898 = vunpack.c.l.b16 %v263
    %v899 = vunpack.c.l.b16 %v264
    %v900 = vunpack.c.l.b16 %v265
    %v901 = vunpack.c.l.b16 %v266
    %v902 = vunpack.c.l.b16 %v267
    %v903 = vunpack.c.l.b16 %v268
    %v904 = vunpack.c.l.b16 %v269
    %v905 = vunpack.c.l.b16 %v270
    %v906 = vunpack.c.l.b16 %v271
    %v907 = vunpack.c.l.b16 %v272
    %v908 = vunpack.c.l.b16 %v273
    %v909 = vunpack.c.l.b16 %v274
    %v910 = vunpack.c.l.b16 %v275
    %v911 = vunpack.c.l.b16 %v276
    %v912 = vunpack.c.l.b16 %v277
    %v913 = vunpack.c.l.b16 %v278
    %v914 = vunpack.c.l.b16 %v279
    %v915 = vpack.c.b16 %v660, %v659
    %v916 = vpack.c.b16 %v662, %v661
    %v917 = vpack.c.b16 %v664, %v663
    %v918 = vpack.c.b16 %v666, %v665
    %v919 = vpack.c.b16 %v668, %v667
    %v920 = vpack.c.b16 %v670, %v669
    %v921 = vpack.c.b16 %v672, %v671
    %v922 = vpack.c.b16 %v674, %v673
    %v923 = vpack.c.b16 %v676, %v675
    %v924 = vpack.c.b16 %v678, %v677
    %v925 = vpack.c.b16 %v680, %v679
    %v926 = vpack.c.b16 %v682, %v681
    %v927 = vpack.c.b16 %v684, %v683
    %v928 = vpack.c.b16 %v686, %v685
    %v929 = vpack.c.b16 %v688, %v687
    %v930 = vpack.c.b16 %v690, %v689
    %v931 = vpack.c.b16 %v692, %v691
    %v932 = vpack.c.b16 %v694, %v693
    %v933 = vpack.c.b16 %v696, %v695
    %v934 = vpack.c.b16 %v698, %v697
    %v935 = vpack.c.b16 %v700, %v699
    %v936 = vpack.c.b16 %v702, %v701
    %v937 = vpack.c.b16 %v704, %v703
    %v938 = vpack.c.b16 %v706, %v705
    %v939 = vpack.c.b16 %v708, %v707
    %v940 = vpack.c.b16 %v710, %v709
    %v941 = vpack.c.b16 %v712, %v711
    %v942 = vpack.c.b16 %v714, %v713
    %v943 = vpack.c.b16 %v716, %v715
    %v944 = vpack.c.b16 %v718, %v717
    %v945 = vpack.c.b16 %v720, %v719
    %v946 = vpack.c.b16 %v722, %v721
    %v947 = vpack.c.b16 %v724, %v723
    %v948 = vpack.c.b16 %v726, %v725
    %v949 = vpack.c.b16 %v728, %v727
    %v950 = vpack.c.b16 %v730, %v729
    %v951 = vpack.c.b16 %v732, %v731
    %v952 = vpack.c.b16 %v734, %v733
    %v953 = vpack.c.b16 %v736, %v735
    %v954 = vpack.c.b16 %v738, %v737
    %v955 = vpack.c.b16 %v740, %v739
    %v956 = vpack.c.b16 %v742, %v741
    %v957 = vpack.c.b16 %v744, %v743
    %v958 = vpack.c.b16 %v746, %v745
    %v959 = vpack.c.b16 %v748, %v747
    %v960 = vpack.c.b16 %v750, %v749
    %v961 = vpack.c.b16 %v752, %v751
    %v962 = vpack.c.b16 %v754, %v753
    %v963 = vpack.c.b16 %v756, %v755
    %v964 = vpack.c.b16 %v758, %v757
    %v965 = vpack.c.b16 %v760, %v759
    %v966 = vpack.c.b16 %v762, %v761
    %v967 = vpack.c.b16 %v764, %v763
    %v968 = vpack.c.b16 %v766, %v765
    %v969 = vpack.c.b16 %v768, %v767
    %v970 = vpack.c.b16 %v770, %v769
    %v971 = vpack.c.b16 %v772, %v771
    %v972 = vpack.c.b16 %v774, %v773
    %v973 = vpack.c.b16 %v776, %v775
    %v974 = vpack.c.b16 %v778, %v777
    %v975 = vpack.c.b16 %v780, %v779
    %v976 = vpack.c.b16 %v782, %v781
    %v977 = vpack.c.b16 %v784, %v783
    %v978 = vpack.c.b16 %v786, %v785
    %v979 = vpack.c.b16 %v788, %v787
    %v980 = vpack.c.b16 %v790, %v789
    %v981 = vpack.c.b16 %v792, %v791
    %v982 = vpack.c.b16 %v794, %v793
    %v983 = vpack.c.b16 %v796, %v795
    %v984 = vpack.c.b16 %v798, %v797
    %v985 = vpack.c.b16 %v800, %v799
    %v986 = vpack.c.b16 %v802, %v801
    %v987 = vpack.c.b16 %v804, %v803
    %v988 = vpack.c.b16 %v806, %v805
    %v989 = vpack.c.b16 %v808, %v807
    %v990 = vpack.c.b16 %v810, %v809
    %v991 = vpack.c.b16 %v812, %v811
    %v992 = vpack.c.b16 %v814, %v813
    %v993 = vpack.c.b16 %v816, %v815
    %v994 = vpack.c.b16 %v818, %v817
    %v995 = vpack.c.b16 %v820, %v819
    %v996 = vpack.c.b16 %v822, %v821
    %v997 = vpack.c.b16 %v824, %v823
    %v998 = vpack.c.b16 %v826, %v825
    %v999 = vpack.c.b16 %v828, %v827
    %v1000 = vpack.c.b16 %v830, %v829
    %v1001 = vpack.c.b16 %v832, %v831
    %v1002 = vpack.c.b16 %v834, %v833
    %v1003 = vpack.c.b16 %v836, %v835
    %v1004 = vpack.c.b16 %v838, %v837
    %v1005 = vpack.c.b16 %v840, %v839
    %v1006 = vpack.c.b16 %v842, %v841
    %v1007 = vpack.c.b16 %v844, %v843
    %v1008 = vpack.c.b16 %v846, %v845
    %v1009 = vpack.c.b16 %v848, %v847
    %v1010 = vpack.c.b16 %v850, %v849
    %v1011 = vpack.c.b16 %v852, %v851
    %v1012 = vpack.c.b16 %v854, %v853
    %v1013 = vpack.c.b16 %v856, %v855
    %v1014 = vpack.c.b16 %v858, %v857
    %v1015 = vpack.c.b16 %v860, %v859
    %v1016 = vpack.c.b16 %v862, %v861
    %v1017 = vpack.c.b16 %v864, %v863
    %v1018 = vpack.c.b16 %v866, %v865
    %v1019 = vpack.c.b16 %v868, %v867
    %v1020 = vpack.c.b16 %v870, %v869
    %v1021 = vpack.c.b16 %v872, %v871
    %v1022 = vpack.c.b16 %v874, %v873
    %v1023 = vpack.c.b16 %v876, %v875
    %v1024 = vpack.c.b16 %v878, %v877
    %v1025 = vpack.c.b16 %v880, %v879
    %v1026 = vpack.c.b16 %v882, %v881
    %v1027 = vpack.c.b16 %v884, %v883
    %v1028 = vpack.c.b16 %v886, %v885
    %v1029 = vpack.c.b16 %v888, %v887
    %v1030 = vpack.c.b16 %v890, %v889
    %v1031 = vpack.c.b16 %v892, %v891
    %v1032 = vpack.c.b16 %v894, %v893
    %v1033 = vpack.c.b16 %v896, %v895
    %v1034 = vpack.c.b16 %v898, %v897
    %v1035 = vpack.c.b16 %v900, %v899
    %v1036 = vpack.c.b16 %v902, %v901
    %v1037 = vpack.c.b16 %v904, %v903
    %v1038 = vpack.c.b16 %v906, %v905
    %v1039 = vpack.c.b16 %v908, %v907
    %v1040 = vpack.c.b16 %v910, %v909
    %v1041 = vpack.c.b16 %v912, %v911
    %v1042 = vpack.c.b16 %v914, %v913
    %1171 = vmatprep.subr.bf16.mxu0 0
    %1172 = vmatpush1.bf16.msra.mxu0 %v922
    %1173 = vmatprep.subr.bf16.mxu0 0
    %1174 = vmatpush1.bf16.msra.mxu0 %v921
    %1175 = vmatprep.subr.bf16.mxu0 0
    %1176 = vmatpush1.bf16.msra.mxu0 %v920
    %1177 = vmatprep.subr.bf16.mxu0 0
    %1178 = vmatpush1.bf16.msra.mxu0 %v919
    %1179 = vmatprep.subr.bf16.mxu0 0
    %1180 = vmatpush1.bf16.msra.mxu0 %v918
    %1181 = vmatprep.subr.bf16.mxu0 0
    %1182 = vmatpush1.bf16.msra.mxu0 %v917
    %1183 = vmatprep.subr.bf16.mxu0 0
    %1184 = vmatpush1.bf16.msra.mxu0 %v916
    %1185 = vmatprep.subr.bf16.mxu0 0
    %1186 = vmatpush1.bf16.msra.mxu0 %v915
    %1187 = vmatprep.subr.bf16.mxu0 0
    %1188 = vmatpush2.bf16.msra.mxu0 %v930
    %1189 = vmatprep.subr.bf16.mxu0 0
    %1190 = vmatpush2.bf16.msra.mxu0 %v929
    %1191 = vmatprep.subr.bf16.mxu0 0
    %1192 = vmatpush2.bf16.msra.mxu0 %v928
    %1193 = vmatprep.subr.bf16.mxu0 0
    %1194 = vmatpush2.bf16.msra.mxu0 %v927
    %1195 = vmatprep.subr.bf16.mxu0 0
    %1196 = vmatpush2.bf16.msra.mxu0 %v926
    %1197 = vmatprep.subr.bf16.mxu0 0
    %1198 = vmatpush2.bf16.msra.mxu0 %v925
    %1199 = vmatprep.subr.bf16.mxu0 0
    %1200 = vmatpush2.bf16.msra.mxu0 %v924
    %1201 = vmatprep.subr.bf16.mxu0 0
    %1202 = vmatpush2.bf16.msra.mxu0 %v923
    %1203 = vmatprep.mubr.bf16.mxu0 %v326
    %1204 = vmatmul.mubr.bf16.gmra.mxu0 %v312
    %v1205 = vpop.f32.mrf.mxu0
    %v1206 = vadd.f32 %v285, %v1205
    %v1207 = vpop.f32.mrf.mxu0
    %v1208 = vpop.f32.mrf.mxu0
    %v1209 = vpop.f32.mrf.mxu0
    %1210 = vdwg.mxu0
    %1211 = vmatprep.subr.bf16.mxu0 0
    %1212 = vmatpush1.bf16.msra.mxu0 %v938
    %1213 = vmatprep.subr.bf16.mxu0 0
    %1214 = vmatpush1.bf16.msra.mxu0 %v937
    %1215 = vmatprep.subr.bf16.mxu0 0
    %1216 = vmatpush1.bf16.msra.mxu0 %v936
    %1217 = vmatprep.subr.bf16.mxu0 0
    %1218 = vmatpush1.bf16.msra.mxu0 %v935
    %1219 = vmatprep.subr.bf16.mxu0 0
    %1220 = vmatpush1.bf16.msra.mxu0 %v934
    %1221 = vmatprep.subr.bf16.mxu0 0
    %1222 = vmatpush1.bf16.msra.mxu0 %v933
    %1223 = vmatprep.subr.bf16.mxu0 0
    %1224 = vmatpush1.bf16.msra.mxu0 %v932
    %1225 = vmatprep.subr.bf16.mxu0 0
    %1226 = vmatpush1.bf16.msra.mxu0 %v931
    %1227 = vmatprep.subr.bf16.mxu0 0
    %1228 = vmatpush2.bf16.msra.mxu0 %v946
    %1229 = vmatprep.subr.bf16.mxu0 0
    %1230 = vmatpush2.bf16.msra.mxu0 %v945
    %1231 = vmatprep.subr.bf16.mxu0 0
    %1232 = vmatpush2.bf16.msra.mxu0 %v944
    %1233 = vmatprep.subr.bf16.mxu0 0
    %1234 = vmatpush2.bf16.msra.mxu0 %v943
    %1235 = vmatprep.subr.bf16.mxu0 0
    %1236 = vmatpush2.bf16.msra.mxu0 %v942
    %1237 = vmatprep.subr.bf16.mxu0 0
    %1238 = vmatpush2.bf16.msra.mxu0 %v941
    %1239 = vmatprep.subr.bf16.mxu0 0
    %1240 = vmatpush2.bf16.msra.mxu0 %v940
    %1241 = vmatprep.subr.bf16.mxu0 0
    %1242 = vmatpush2.bf16.msra.mxu0 %v939
    %1243 = vmatprep.mubr.bf16.mxu0 %v336
    %1244 = vmatmul.mubr.bf16.gmra.mxu0 %v334
    %v1245 = vpop.f32.mrf.mxu0
    %v1246 = vadd.f32 %v1206, %v1245
    %v1247 = vpop.f32.mrf.mxu0
    %v1248 = vpop.f32.mrf.mxu0
    %v1249 = vpop.f32.mrf.mxu0
    %1250 = vdwg.mxu0
    %1251 = vmatprep.subr.bf16.mxu0 0
    %1252 = vmatpush1.bf16.msra.mxu0 %v954
    %1253 = vmatprep.subr.bf16.mxu0 0
    %1254 = vmatpush1.bf16.msra.mxu0 %v953
    %1255 = vmatprep.subr.bf16.mxu0 0
    %1256 = vmatpush1.bf16.msra.mxu0 %v952
    %1257 = vmatprep.subr.bf16.mxu0 0
    %1258 = vmatpush1.bf16.msra.mxu0 %v951
    %1259 = vmatprep.subr.bf16.mxu0 0
    %1260 = vmatpush1.bf16.msra.mxu0 %v950
    %1261 = vmatprep.subr.bf16.mxu0 0
    %1262 = vmatpush1.bf16.msra.mxu0 %v949
    %1263 = vmatprep.subr.bf16.mxu0 0
    %1264 = vmatpush1.bf16.msra.mxu0 %v948
    %1265 = vmatprep.subr.bf16.mxu0 0
    %1266 = vmatpush1.bf16.msra.mxu0 %v947
    %1267 = vmatprep.subr.bf16.mxu0 0
    %1268 = vmatpush2.bf16.msra.mxu0 %v962
    %1269 = vmatprep.subr.bf16.mxu0 0
    %1270 = vmatpush2.bf16.msra.mxu0 %v961
    %1271 = vmatprep.subr.bf16.mxu0 0
    %1272 = vmatpush2.bf16.msra.mxu0 %v960
    %1273 = vmatprep.subr.bf16.mxu0 0
    %1274 = vmatpush2.bf16.msra.mxu0 %v959
    %1275 = vmatprep.subr.bf16.mxu0 0
    %1276 = vmatpush2.bf16.msra.mxu0 %v958
    %1277 = vmatprep.subr.bf16.mxu0 0
    %1278 = vmatpush2.bf16.msra.mxu0 %v957
    %1279 = vmatprep.subr.bf16.mxu0 0
    %1280 = vmatpush2.bf16.msra.mxu0 %v956
    %1281 = vmatprep.subr.bf16.mxu0 0
    %1282 = vmatpush2.bf16.msra.mxu0 %v955
    %1283 = vmatprep.mubr.bf16.mxu0 %v333
    %1284 = vmatmul.mubr.bf16.gmra.mxu0 %v319
    %v1285 = vpop.f32.mrf.mxu0
    %v1286 = vadd.f32 %v1246, %v1285
    %v1287 = vpop.f32.mrf.mxu0
    %v1288 = vpop.f32.mrf.mxu0
    %v1289 = vpop.f32.mrf.mxu0
    %1290 = vdwg.mxu0
    %1291 = vmatprep.subr.bf16.mxu0 0
    %1292 = vmatpush1.bf16.msra.mxu0 %v970
    %1293 = vmatprep.subr.bf16.mxu0 0
    %1294 = vmatpush1.bf16.msra.mxu0 %v969
    %1295 = vmatprep.subr.bf16.mxu0 0
    %1296 = vmatpush1.bf16.msra.mxu0 %v968
    %1297 = vmatprep.subr.bf16.mxu0 0
    %1298 = vmatpush1.bf16.msra.mxu0 %v967
    %1299 = vmatprep.subr.bf16.mxu0 0
    %1300 = vmatpush1.bf16.msra.mxu0 %v966
    %1301 = vmatprep.subr.bf16.mxu0 0
    %1302 = vmatpush1.bf16.msra.mxu0 %v965
    %1303 = vmatprep.subr.bf16.mxu0 0
    %1304 = vmatpush1.bf16.msra.mxu0 %v964
    %1305 = vmatprep.subr.bf16.mxu0 0
    %1306 = vmatpush1.bf16.msra.mxu0 %v963
    %1307 = vmatprep.subr.bf16.mxu0 0
    %1308 = vmatpush2.bf16.msra.mxu0 %v978
    %1309 = vmatprep.subr.bf16.mxu0 0
    %1310 = vmatpush2.bf16.msra.mxu0 %v977
    %1311 = vmatprep.subr.bf16.mxu0 0
    %1312 = vmatpush2.bf16.msra.mxu0 %v976
    %1313 = vmatprep.subr.bf16.mxu0 0
    %1314 = vmatpush2.bf16.msra.mxu0 %v975
    %1315 = vmatprep.subr.bf16.mxu0 0
    %1316 = vmatpush2.bf16.msra.mxu0 %v974
    %1317 = vmatprep.subr.bf16.mxu0 0
    %1318 = vmatpush2.bf16.msra.mxu0 %v973
    %1319 = vmatprep.subr.bf16.mxu0 0
    %1320 = vmatpush2.bf16.msra.mxu0 %v972
    %1321 = vmatprep.subr.bf16.mxu0 0
    %1322 = vmatpush2.bf16.msra.mxu0 %v971
    %1323 = vmatprep.mubr.bf16.mxu0 %v337
    %1324 = vmatmul.mubr.bf16.gmra.mxu0 %v335
    %v1325 = vpop.f32.mrf.mxu0
    %v1326 = vadd.f32 %v1286, %v1325
    %v1327 = vpop.f32.mrf.mxu0
    %v1328 = vpop.f32.mrf.mxu0
    %v1329 = vpop.f32.mrf.mxu0
    %1330 = vdwg.mxu0
    %1331 = vmatprep.subr.bf16.mxu0 0
    %1332 = vmatpush1.bf16.msra.mxu0 %v986
    %1333 = vmatprep.subr.bf16.mxu0 0
    %1334 = vmatpush1.bf16.msra.mxu0 %v985
    %1335 = vmatprep.subr.bf16.mxu0 0
    %1336 = vmatpush1.bf16.msra.mxu0 %v984
    %1337 = vmatprep.subr.bf16.mxu0 0
    %1338 = vmatpush1.bf16.msra.mxu0 %v983
    %1339 = vmatprep.subr.bf16.mxu0 0
    %1340 = vmatpush1.bf16.msra.mxu0 %v982
    %1341 = vmatprep.subr.bf16.mxu0 0
    %1342 = vmatpush1.bf16.msra.mxu0 %v981
    %1343 = vmatprep.subr.bf16.mxu0 0
    %1344 = vmatpush1.bf16.msra.mxu0 %v980
    %1345 = vmatprep.subr.bf16.mxu0 0
    %1346 = vmatpush1.bf16.msra.mxu0 %v979
    %1347 = vmatprep.subr.bf16.mxu0 0
    %1348 = vmatpush2.bf16.msra.mxu0 %v994
    %1349 = vmatprep.subr.bf16.mxu0 0
    %1350 = vmatpush2.bf16.msra.mxu0 %v993
    %1351 = vmatprep.subr.bf16.mxu0 0
    %1352 = vmatpush2.bf16.msra.mxu0 %v992
    %1353 = vmatprep.subr.bf16.mxu0 0
    %1354 = vmatpush2.bf16.msra.mxu0 %v991
    %1355 = vmatprep.subr.bf16.mxu0 0
    %1356 = vmatpush2.bf16.msra.mxu0 %v990
    %1357 = vmatprep.subr.bf16.mxu0 0
    %1358 = vmatpush2.bf16.msra.mxu0 %v989
    %1359 = vmatprep.subr.bf16.mxu0 0
    %1360 = vmatpush2.bf16.msra.mxu0 %v988
    %1361 = vmatprep.subr.bf16.mxu0 0
    %1362 = vmatpush2.bf16.msra.mxu0 %v987
    %1363 = vmatprep.mubr.bf16.mxu0 %v375
    %1364 = vmatmul.mubr.bf16.gmra.mxu0 %v361
    %v1365 = vpop.f32.mrf.mxu0
    %v1366 = vadd.f32 %v1326, %v1365
    %v1367 = vpop.f32.mrf.mxu0
    %v1368 = vpop.f32.mrf.mxu0
    %v1369 = vpop.f32.mrf.mxu0
    %1370 = vdwg.mxu0
    %1371 = vmatprep.subr.bf16.mxu0 0
    %1372 = vmatpush1.bf16.msra.mxu0 %v1002
    %1373 = vmatprep.subr.bf16.mxu0 0
    %1374 = vmatpush1.bf16.msra.mxu0 %v1001
    %1375 = vmatprep.subr.bf16.mxu0 0
    %1376 = vmatpush1.bf16.msra.mxu0 %v1000
    %1377 = vmatprep.subr.bf16.mxu0 0
    %1378 = vmatpush1.bf16.msra.mxu0 %v999
    %1379 = vmatprep.subr.bf16.mxu0 0
    %1380 = vmatpush1.bf16.msra.mxu0 %v998
    %1381 = vmatprep.subr.bf16.mxu0 0
    %1382 = vmatpush1.bf16.msra.mxu0 %v997
    %1383 = vmatprep.subr.bf16.mxu0 0
    %1384 = vmatpush1.bf16.msra.mxu0 %v996
    %1385 = vmatprep.subr.bf16.mxu0 0
    %1386 = vmatpush1.bf16.msra.mxu0 %v995
    %1387 = vmatprep.subr.bf16.mxu0 0
    %1388 = vmatpush2.bf16.msra.mxu0 %v1010
    %1389 = vmatprep.subr.bf16.mxu0 0
    %1390 = vmatpush2.bf16.msra.mxu0 %v1009
    %1391 = vmatprep.subr.bf16.mxu0 0
    %1392 = vmatpush2.bf16.msra.mxu0 %v1008
    %1393 = vmatprep.subr.bf16.mxu0 0
    %1394 = vmatpush2.bf16.msra.mxu0 %v1007
    %1395 = vmatprep.subr.bf16.mxu0 0
    %1396 = vmatpush2.bf16.msra.mxu0 %v1006
    %1397 = vmatprep.subr.bf16.mxu0 0
    %1398 = vmatpush2.bf16.msra.mxu0 %v1005
    %1399 = vmatprep.subr.bf16.mxu0 0
    %1400 = vmatpush2.bf16.msra.mxu0 %v1004
    %1401 = vmatprep.subr.bf16.mxu0 0
    %1402 = vmatpush2.bf16.msra.mxu0 %v1003
    %1403 = vmatprep.mubr.bf16.mxu0 %v385
    %1404 = vmatmul.mubr.bf16.gmra.mxu0 %v383
    %v1405 = vpop.f32.mrf.mxu0
    %v1406 = vadd.f32 %v1366, %v1405
    %v1407 = vpop.f32.mrf.mxu0
    %v1408 = vpop.f32.mrf.mxu0
    %v1409 = vpop.f32.mrf.mxu0
    %1410 = vdwg.mxu0
    %1411 = vmatprep.subr.bf16.mxu0 0
    %1412 = vmatpush1.bf16.msra.mxu0 %v1018
    %1413 = vmatprep.subr.bf16.mxu0 0
    %1414 = vmatpush1.bf16.msra.mxu0 %v1017
    %1415 = vmatprep.subr.bf16.mxu0 0
    %1416 = vmatpush1.bf16.msra.mxu0 %v1016
    %1417 = vmatprep.subr.bf16.mxu0 0
    %1418 = vmatpush1.bf16.msra.mxu0 %v1015
    %1419 = vmatprep.subr.bf16.mxu0 0
    %1420 = vmatpush1.bf16.msra.mxu0 %v1014
    %1421 = vmatprep.subr.bf16.mxu0 0
    %1422 = vmatpush1.bf16.msra.mxu0 %v1013
    %1423 = vmatprep.subr.bf16.mxu0 0
    %1424 = vmatpush1.bf16.msra.mxu0 %v1012
    %1425 = vmatprep.subr.bf16.mxu0 0
    %1426 = vmatpush1.bf16.msra.mxu0 %v1011
    %1427 = vmatprep.subr.bf16.mxu0 0
    %1428 = vmatpush2.bf16.msra.mxu0 %v1026
    %1429 = vmatprep.subr.bf16.mxu0 0
    %1430 = vmatpush2.bf16.msra.mxu0 %v1025
    %1431 = vmatprep.subr.bf16.mxu0 0
    %1432 = vmatpush2.bf16.msra.mxu0 %v1024
    %1433 = vmatprep.subr.bf16.mxu0 0
    %1434 = vmatpush2.bf16.msra.mxu0 %v1023
    %1435 = vmatprep.subr.bf16.mxu0 0
    %1436 = vmatpush2.bf16.msra.mxu0 %v1022
    %1437 = vmatprep.subr.bf16.mxu0 0
    %1438 = vmatpush2.bf16.msra.mxu0 %v1021
    %1439 = vmatprep.subr.bf16.mxu0 0
    %1440 = vmatpush2.bf16.msra.mxu0 %v1020
    %1441 = vmatprep.subr.bf16.mxu0 0
    %1442 = vmatpush2.bf16.msra.mxu0 %v1019
    %1443 = vmatprep.mubr.bf16.mxu0 %v382
    %1444 = vmatmul.mubr.bf16.gmra.mxu0 %v368
    %v1445 = vpop.f32.mrf.mxu0
    %v1446 = vadd.f32 %v1406, %v1445
    %v1447 = vpop.f32.mrf.mxu0
    %v1448 = vpop.f32.mrf.mxu0
    %v1449 = vpop.f32.mrf.mxu0
    %1450 = vdwg.mxu0
    %1451 = vmatprep.subr.bf16.mxu0 0
    %1452 = vmatpush1.bf16.msra.mxu0 %v1034
    %1453 = vmatprep.subr.bf16.mxu0 0
    %1454 = vmatpush1.bf16.msra.mxu0 %v1033
    %1455 = vmatprep.subr.bf16.mxu0 0
    %1456 = vmatpush1.bf16.msra.mxu0 %v1032
    %1457 = vmatprep.subr.bf16.mxu0 0
    %1458 = vmatpush1.bf16.msra.mxu0 %v1031
    %1459 = vmatprep.subr.bf16.mxu0 0
    %1460 = vmatpush1.bf16.msra.mxu0 %v1030
    %1461 = vmatprep.subr.bf16.mxu0 0
    %1462 = vmatpush1.bf16.msra.mxu0 %v1029
    %1463 = vmatprep.subr.bf16.mxu0 0
    %1464 = vmatpush1.bf16.msra.mxu0 %v1028
    %1465 = vmatprep.subr.bf16.mxu0 0
    %1466 = vmatpush1.bf16.msra.mxu0 %v1027
    %1467 = vmatprep.subr.bf16.mxu0 0
    %1468 = vmatpush2.bf16.msra.mxu0 %v1042
    %1469 = vmatprep.subr.bf16.mxu0 0
    %1470 = vmatpush2.bf16.msra.mxu0 %v1041
    %1471 = vmatprep.subr.bf16.mxu0 0
    %1472 = vmatpush2.bf16.msra.mxu0 %v1040
    %1473 = vmatprep.subr.bf16.mxu0 0
    %1474 = vmatpush2.bf16.msra.mxu0 %v1039
    %1475 = vmatprep.subr.bf16.mxu0 0
    %1476 = vmatpush2.bf16.msra.mxu0 %v1038
    %1477 = vmatprep.subr.bf16.mxu0 0
    %1478 = vmatpush2.bf16.msra.mxu0 %v1037
    %1479 = vmatprep.subr.bf16.mxu0 0
    %1480 = vmatpush2.bf16.msra.mxu0 %v1036
    %1481 = vmatprep.subr.bf16.mxu0 0
    %1482 = vmatpush2.bf16.msra.mxu0 %v1035
    %1483 = vmatprep.mubr.bf16.mxu0 %v386
    %1484 = vmatmul.mubr.bf16.gmra.mxu0 %v384
    %v1485 = vpop.f32.mrf.mxu0
    %v1486 = vadd.f32 %v1446, %v1485
    %v1487 = vpop.f32.mrf.mxu0
    %v1488 = vpop.f32.mrf.mxu0
    %v1489 = vpop.f32.mrf.mxu0
    %1490 = vdwg.mxu0
    %v1491 = vmul.f32 %v1486, 0.2
    %v1492 = vmax.f32 %v1486, %v1491
    %v1493 = vpack.c.bf16 %v1492, %v1492
    %v1494 = vld [vmem:[%s3] sm:$0xf]
    %v1495 = vld [vmem:[%s3 + $0x4] sm:$0xf]
    %v1496 = vld [vmem:[%s3 + $0x8] sm:$0xf]
    %v1497 = vld [vmem:[%s3 + $0xc] sm:$0xf]
    %v1498 = vld [vmem:[%s3 + $0x10] sm:$0xf]
    %v1499 = vld [vmem:[%s3 + $0x14] sm:$0xf]
    %v1500 = vld [vmem:[%s3 + $0x18] sm:$0xf]
    %v1501 = vld [vmem:[%s3 + $0x1c] sm:$0xf]
    %v1502 = vld [vmem:[%s3 + $0x20] sm:$0xf]
    %v1503 = vld [vmem:[%s3 + $0x24] sm:$0xf]
    %v1504 = vld [vmem:[%s3 + $0x28] sm:$0xf]
    %v1505 = vld [vmem:[%s3 + $0x2c] sm:$0xf]
    %v1506 = vld [vmem:[%s3 + $0x30] sm:$0xf]
    %v1507 = vld [vmem:[%s3 + $0x34] sm:$0xf]
    %v1508 = vld [vmem:[%s3 + $0x38] sm:$0xf]
    %v1509 = vld [vmem:[%s3 + $0x3c] sm:$0xf]
    %v1510 = vld [vmem:[%s4] sm:$0x1]
    %v1512 = vlaneseq
    %v1513 = vshrl.u32 %v1512, 7
    %v1514 = vsub.s32 0, %v1513
    %v1515 = vrot.slane %v1510, %v1514
    %v1533 = vunpack.c.l.b16 %v1494
    %v1534 = vunpack.c.l.b16 %v1495
    %v1535 = vunpack.c.l.b16 %v1496
    %v1536 = vunpack.c.l.b16 %v1497
    %v1537 = vunpack.c.l.b16 %v1498
    %v1538 = vunpack.c.l.b16 %v1499
    %v1539 = vunpack.c.l.b16 %v1500
    %v1540 = vunpack.c.l.b16 %v1501
    %v1541 = vunpack.c.l.b16 %v1502
    %v1542 = vunpack.c.l.b16 %v1503
    %v1543 = vunpack.c.l.b16 %v1504
    %v1544 = vunpack.c.l.b16 %v1505
    %v1545 = vunpack.c.l.b16 %v1506
    %v1546 = vunpack.c.l.b16 %v1507
    %v1547 = vunpack.c.l.b16 %v1508
    %v1548 = vunpack.c.l.b16 %v1509
    %v1549 = vpack.c.b16 %v1534, %v1533
    %v1550 = vpack.c.b16 %v1536, %v1535
    %v1551 = vpack.c.b16 %v1538, %v1537
    %v1552 = vpack.c.b16 %v1540, %v1539
    %v1553 = vpack.c.b16 %v1542, %v1541
    %v1554 = vpack.c.b16 %v1544, %v1543
    %v1555 = vpack.c.b16 %v1546, %v1545
    %v1556 = vpack.c.b16 %v1548, %v1547
    %1565 = vmatprep.subr.bf16.mxu0 0
    %1566 = vmatpush1.bf16.msra.mxu0 %v1556
    %1567 = vmatprep.subr.bf16.mxu0 0
    %1568 = vmatpush1.bf16.msra.mxu0 %v1555
    %1569 = vmatprep.subr.bf16.mxu0 0
    %1570 = vmatpush1.bf16.msra.mxu0 %v1554
    %1571 = vmatprep.subr.bf16.mxu0 0
    %1572 = vmatpush1.bf16.msra.mxu0 %v1553
    %1573 = vmatprep.subr.bf16.mxu0 0
    %1574 = vmatpush1.bf16.msra.mxu0 %v1552
    %1575 = vmatprep.subr.bf16.mxu0 0
    %1576 = vmatpush1.bf16.msra.mxu0 %v1551
    %1577 = vmatprep.subr.bf16.mxu0 0
    %1578 = vmatpush1.bf16.msra.mxu0 %v1550
    %1579 = vmatprep.subr.bf16.mxu0 0
    %1580 = vmatpush1.bf16.msra.mxu0 %v1549
    %1581 = vmatprep.subr.bf16.mxu0 0
    %1582 = vmatpush2.bf16.msra.mxu0 0
    %1583 = vmatprep.subr.bf16.mxu0 0
    %1584 = vmatpush2.bf16.msra.mxu0 0
    %1585 = vmatprep.subr.bf16.mxu0 0
    %1586 = vmatpush2.bf16.msra.mxu0 0
    %1587 = vmatprep.subr.bf16.mxu0 0
    %1588 = vmatpush2.bf16.msra.mxu0 0
    %1589 = vmatprep.subr.bf16.mxu0 0
    %1590 = vmatpush2.bf16.msra.mxu0 0
    %1591 = vmatprep.subr.bf16.mxu0 0
    %1592 = vmatpush2.bf16.msra.mxu0 0
    %1593 = vmatprep.subr.bf16.mxu0 0
    %1594 = vmatpush2.bf16.msra.mxu0 0
    %1595 = vmatprep.subr.bf16.mxu0 0
    %1596 = vmatpush2.bf16.msra.mxu0 0
    %1597 = vmatprep.mubr.bf16.mxu0 0
    %1598 = vmatmul.mubr.bf16.gmra.mxu0 %v1493
    %v1599 = vpop.f32.mrf.mxu0
    %v1600 = vadd.f32 %v1515, %v1599
    %v1601 = vpop.f32.mrf.mxu0
    %v1602 = vpop.f32.mrf.mxu0
    %v1603 = vpop.f32.mrf.mxu0
    %1604 = vdwg.mxu0
    %1605 = vst [vmem:[#allocation2] sm:$0x3] %v1600
    // Predicated region
    $region22: #{net_forward.5} parent=1 // pred_check
      _
    $region23: #{net_forward.5} parent=1 // pred_check_branch
      %1607 = sbr.rel (0) target = $region25
    $region24: #{net_forward.5} parent=1 // pred_region
      %s1609 = ssub.s32 32, 32
      %1610 = vsyncadd [#allocation3], %s1609
      %s1612 = sshll.u32 [#allocation2], 4
      %s1613 = int_to_ptr.vmem [resolvable:$true] %s1612
      %1615 = dma.vmem_to_hbm [thread:$0]  %s1613, 32, %s5, [#allocation3]
    $region25: #{net_forward.5} parent=1 // pred_fallthru
      _
    // Predicated region
    $region26: #{net_forward.5} parent=1 // pred_check
      _
    $region27: #{net_forward.5} parent=1 // pred_check_branch
      %1617 = sbr.rel (0) target = $region29
    $region28: #{net_forward.5} parent=1 // pred_region
      %1618 = dma.done [#allocation3], 32
    $region29: #{net_forward.5} parent=1 // pred_fallthru
      _
    %1619 = vsyncpa [#allocation3], 1

</llo_original>
